<compile_context>
chip_gen: v6e
topology: v6e:2x2x1
jax: 0.10.0
libtpu: 0.0.40
codegen_flags: <defaults>
</compile_context>

<pallas_src>
import numpy as np
import jax
import jax.numpy as jnp
from jax.experimental import pallas as pl
from jax.experimental.pallas import tpu as pltpu

_WINDOW = 11
_SIGMA = 1.5 * _WINDOW / 11.0
_C1 = (0.01 * 255.0) ** 2
_C2 = (0.03 * 255.0) ** 2
_MAX_CHANNELS_PER_STEP = 8


def _gaussian_taps(window_size=_WINDOW, sigma=_SIGMA):
    xs = np.arange(window_size, dtype=np.float64)
    g = np.exp(-((xs - window_size // 2) ** 2) / (2.0 * sigma ** 2))
    return tuple(float(v) for v in (g / g.sum()))


_GAUSS = _gaussian_taps()


def _blur1d(z, axis):
    """Zero-padded 'same' 1-D Gaussian blur along `axis` of an (M, H, W) value.

    Implemented as 11 shifted multiply-adds over a zero-extended buffer:
    VPU MACs plus cheap shifts; no MXU, no band matrices.
    """
    half = _WINDOW // 2
    size = z.shape[axis]
    pad_shape = list(z.shape)
    pad_shape[axis] = half
    zpad = jnp.zeros(tuple(pad_shape), z.dtype)
    zp = jnp.concatenate([zpad, z, zpad], axis=axis)   # zero-extended
    acc = None
    for k in range(_WINDOW):
        idx = [slice(None)] * z.ndim
        idx[axis] = slice(k, k + size)
        term = _GAUSS[k] * zp[tuple(idx)]
        acc = term if acc is None else acc + term
    return acc


def _ssim_kernel(x_ref, y_ref, o_ref):
    n, H, W = x_ref.shape
    x = x_ref[...].astype(jnp.float32)   # cast on-chip; HBM traffic stays in native dtype
    y = y_ref[...].astype(jnp.float32)

    # Fused blur of all five maps: stack along the (untiled) leading axis.
    maps = jnp.concatenate([x, y, x * x, y * y, x * y], axis=0)   # (5n, H, W)
    blurred = _blur1d(_blur1d(maps, axis=2), axis=1)

    mu1 = blurred[0 * n:1 * n]
    mu2 = blurred[1 * n:2 * n]
    e_xx = blurred[2 * n:3 * n]
    e_yy = blurred[3 * n:4 * n]
    e_xy = blurred[4 * n:5 * n]

    mu1_sq = mu1 * mu1
    mu2_sq = mu2 * mu2
    mu1_mu2 = mu1 * mu2
    sigma1_sq = e_xx - mu1_sq
    sigma2_sq = e_yy - mu2_sq
    sigma12 = e_xy - mu1_mu2

    v1 = 2.0 * sigma12 + _C2
    v2 = sigma1_sq + sigma2_sq + _C2
    num = (2.0 * mu1_mu2 + _C1) * v1
    den = (mu1_sq + mu2_sq + _C1) * v2

    # EUP reciprocal + one Newton step: divide moves off the VALU while
    # staying well inside f32 accuracy (needed for the 1e-4 check).
    r = pl.reciprocal(den, approx=True)
    r = r * (2.0 - den * r)
    ssim_map = num * r

    s = jnp.sum(ssim_map, axis=2, keepdims=True)   # (n, H, 1) lane reduce
    s = jnp.sum(s, axis=1, keepdims=True)          # (n, 1, 1) sublane reduce
    o_ref[...] = s * (1.0 / (H * W))               # per-channel mean SSIM


def ssim_loss(img, img2):
    """img, img2: (B, C, H, W) arrays with range [0, 255]. Returns shape (1,)."""
    assert img.shape == img2.shape
    B, C, H, W = img.shape
    BC = B * C

    x = img.reshape(BC, H, W)
    y = img2.reshape(BC, H, W)

    # Channels per grid step: amortize per-step pipeline overhead on small
    # images while staying inside the smallest scoped-VMEM budget (v5e 16MiB
    # scoped default, v7x 64MiB physical).
    itemsize = np.dtype(img.dtype).itemsize
    per_chan = 4 * H * W * itemsize + 120 * H * W          # dbl-buffered inputs + f32 temps
    n = int(max(1, min(_MAX_CHANNELS_PER_STEP, BC, (24 << 20) // max(per_chan, 1))))
    # TODO(synk): images so large that a single (1, H, W) channel overflows VMEM
    # would need spatial tiling with an 11-pixel halo; not implemented here.

    bc_pad = -(-BC // n) * n
    if bc_pad != BC:
        pad = bc_pad - BC
        x = jnp.pad(x, ((0, pad), (0, 0), (0, 0)))
        y = jnp.pad(y, ((0, pad), (0, 0), (0, 0)))

    vmem_est = 2 * 2 * n * H * W * itemsize + 8 * 5 * n * H * W * 4 + (1 << 20)
    vmem_limit = int(min(max(vmem_est, 32 << 20), 48 << 20))

    per_channel = pl.pallas_call(
        _ssim_kernel,
        out_shape=jax.ShapeDtypeStruct((bc_pad, 1, 1), jnp.float32),
        grid_spec=pltpu.PrefetchScalarGridSpec(
            num_scalar_prefetch=0,
            grid=(bc_pad // n,),
            in_specs=[
                pl.BlockSpec((n, H, W), lambda i: (i, 0, 0)),
                pl.BlockSpec((n, H, W), lambda i: (i, 0, 0)),
            ],
            out_specs=pl.BlockSpec((n, 1, 1), lambda i: (i, 0, 0)),
        ),
        compiler_params=pltpu.CompilerParams(
            dimension_semantics=("parallel",),   # per-channel outputs -> no accumulator race
            vmem_limit_bytes=vmem_limit),
    )(x, y)

    per_channel = per_channel.reshape(bc_pad)[:BC]
    # mean over channels then over batch == mean over all (b, c) per-channel SSIMs
    return jnp.mean(per_channel).reshape(1)


def _ssim_loss_ref(img, img2):
    """Independent pure-JAX reference using lax.conv (zero-padded 'same')."""
    B, C, H, W = img.shape
    g = np.asarray(_GAUSS, dtype=np.float64)
    w2d = jnp.asarray(np.outer(g, g)[None, None], jnp.float32)  # (1, 1, 11, 11)

    def conv(z):  # z: (N, 1, H, W)
        return jax.lax.conv_general_dilated(
            z, w2d, window_strides=(1, 1),
            padding=[(_WINDOW // 2, _WINDOW // 2)] * 2,
            dimension_numbers=("NCHW", "OIHW", "NCHW"),
            precision=jax.lax.Precision.HIGHEST)

    x = img.reshape(B * C, 1, H, W).astype(jnp.float32)
    y = img2.reshape(B * C, 1, H, W).astype(jnp.float32)
    mu1, mu2 = conv(x), conv(y)
    mu1_sq, mu2_sq, mu1_mu2 = mu1 * mu1, mu2 * mu2, mu1 * mu2
    s1 = conv(x * x) - mu1_sq
    s2 = conv(y * y) - mu2_sq
    s12 = conv(x * y) - mu1_mu2
    v1 = 2.0 * s12 + _C2
    v2 = s1 + s2 + _C2
    ssim_map = (2.0 * mu1_mu2 + _C1) * v1 / ((mu1_sq + mu2_sq + _C1) * v2)
    per_channel = jnp.mean(ssim_map, axis=(1, 2, 3))  # (B*C,)
    return jnp.mean(per_channel).reshape(1)


if __name__ == "__main__":
    key = jax.random.PRNGKey(0)
    k1, k2 = jax.random.split(key)
    B, C, H, W = 2, 3, 16, 16  # module assumes 3-channel images
    img = jax.random.uniform(k1, (B, C, H, W), jnp.float32) * 255.0
    img2 = jnp.clip(img + 20.0 * jax.random.normal(k2, (B, C, H, W), jnp.float32),
                    0.0, 255.0)

    out = jax.block_until_ready(ssim_loss(img, img2))
    ref = jax.block_until_ready(_ssim_loss_ref(img, img2))

    assert out.shape == (1,)
    assert np.allclose(np.asarray(out), np.asarray(ref), rtol=1e-4, atol=1e-4), (out, ref)
    print("KERNEL_OK")
</pallas_src>

<mosaic_0001>
module attributes {stable_mosaic.version = 11 : i64} {
  func.func @_ssim_kernel(%arg0: i32, %arg1: memref<6x16x16xf32, #tpu.memory_space<vmem>>, %arg2: memref<6x16x16xf32, #tpu.memory_space<vmem>>, %arg3: memref<6x1x1xf32, #tpu.memory_space<vmem>>) attributes {dimension_semantics = [#tpu.dimension_semantics<parallel>], iteration_bounds = array<i64: 1>, scalar_prefetch = 0 : i64, scratch_operands = 0 : i64, tpu.core_type = #tpu.core_type<tc>, window_params = [{transform_indices = @transform_0, window_bounds = array<i64: 6, 16, 16>}, {transform_indices = @transform_1, window_bounds = array<i64: 6, 16, 16>}, {transform_indices = @transform_2, window_bounds = array<i64: 6, 1, 1>}]} {
    %c0 = arith.constant 0 : index
    %c0_0 = arith.constant 0 : index
    %c0_1 = arith.constant 0 : index
    %0 = vector.load %arg1[%c0, %c0_0, %c0_1] : memref<6x16x16xf32, #tpu.memory_space<vmem>>, vector<6x16x16xf32>
    %c0_2 = arith.constant 0 : index
    %c0_3 = arith.constant 0 : index
    %c0_4 = arith.constant 0 : index
    %1 = vector.load %arg2[%c0_2, %c0_3, %c0_4] : memref<6x16x16xf32, #tpu.memory_space<vmem>>, vector<6x16x16xf32>
    %2 = arith.mulf %0, %0 : vector<6x16x16xf32>
    %3 = arith.mulf %1, %1 : vector<6x16x16xf32>
    %4 = arith.mulf %0, %1 : vector<6x16x16xf32>
    %5 = tpu.concatenate %0, %1, %2, %3, %4 in 0 : vector<6x16x16xf32>, vector<6x16x16xf32>, vector<6x16x16xf32>, vector<6x16x16xf32>, vector<6x16x16xf32> -> vector<30x16x16xf32>
    %cst = arith.constant 0.000000e+00 : f32
    %6 = vector.broadcast %cst : f32 to vector<30x16x5xf32>
    %7 = tpu.concatenate %6, %5, %6 in 2 : vector<30x16x5xf32>, vector<30x16x16xf32>, vector<30x16x5xf32> -> vector<30x16x26xf32>
    %8 = vector.extract_strided_slice %7 {offsets = [0, 0, 0], sizes = [30, 16, 16], strides = [1, 1, 1]} : vector<30x16x26xf32> to vector<30x16x16xf32>
    %cst_5 = arith.constant 0.00102838012 : f32
    %9 = vector.broadcast %cst_5 : f32 to vector<30x16x16xf32>
    %10 = arith.mulf %9, %8 : vector<30x16x16xf32>
    %11 = vector.extract_strided_slice %7 {offsets = [0, 0, 1], sizes = [30, 16, 16], strides = [1, 1, 1]} : vector<30x16x26xf32> to vector<30x16x16xf32>
    %cst_6 = arith.constant 0.00759875821 : f32
    %12 = vector.broadcast %cst_6 : f32 to vector<30x16x16xf32>
    %13 = arith.mulf %12, %11 : vector<30x16x16xf32>
    %14 = arith.addf %10, %13 : vector<30x16x16xf32>
    %15 = vector.extract_strided_slice %7 {offsets = [0, 0, 2], sizes = [30, 16, 16], strides = [1, 1, 1]} : vector<30x16x26xf32> to vector<30x16x16xf32>
    %cst_7 = arith.constant 0.0360007733 : f32
    %16 = vector.broadcast %cst_7 : f32 to vector<30x16x16xf32>
    %17 = arith.mulf %16, %15 : vector<30x16x16xf32>
    %18 = arith.addf %14, %17 : vector<30x16x16xf32>
    %19 = vector.extract_strided_slice %7 {offsets = [0, 0, 3], sizes = [30, 16, 16], strides = [1, 1, 1]} : vector<30x16x26xf32> to vector<30x16x16xf32>
    %cst_8 = arith.constant 0.109360687 : f32
    %20 = vector.broadcast %cst_8 : f32 to vector<30x16x16xf32>
    %21 = arith.mulf %20, %19 : vector<30x16x16xf32>
    %22 = arith.addf %18, %21 : vector<30x16x16xf32>
    %23 = vector.extract_strided_slice %7 {offsets = [0, 0, 4], sizes = [30, 16, 16], strides = [1, 1, 1]} : vector<30x16x26xf32> to vector<30x16x16xf32>
    %cst_9 = arith.constant 0.213005543 : f32
    %24 = vector.broadcast %cst_9 : f32 to vector<30x16x16xf32>
    %25 = arith.mulf %24, %23 : vector<30x16x16xf32>
    %26 = arith.addf %22, %25 : vector<30x16x16xf32>
    %27 = vector.extract_strided_slice %7 {offsets = [0, 0, 5], sizes = [30, 16, 16], strides = [1, 1, 1]} : vector<30x16x26xf32> to vector<30x16x16xf32>
    %cst_10 = arith.constant 0.266011715 : f32
    %28 = vector.broadcast %cst_10 : f32 to vector<30x16x16xf32>
    %29 = arith.mulf %28, %27 : vector<30x16x16xf32>
    %30 = arith.addf %26, %29 : vector<30x16x16xf32>
    %31 = vector.extract_strided_slice %7 {offsets = [0, 0, 6], sizes = [30, 16, 16], strides = [1, 1, 1]} : vector<30x16x26xf32> to vector<30x16x16xf32>
    %cst_11 = arith.constant 0.213005543 : f32
    %32 = vector.broadcast %cst_11 : f32 to vector<30x16x16xf32>
    %33 = arith.mulf %32, %31 : vector<30x16x16xf32>
    %34 = arith.addf %30, %33 : vector<30x16x16xf32>
    %35 = vector.extract_strided_slice %7 {offsets = [0, 0, 7], sizes = [30, 16, 16], strides = [1, 1, 1]} : vector<30x16x26xf32> to vector<30x16x16xf32>
    %cst_12 = arith.constant 0.109360687 : f32
    %36 = vector.broadcast %cst_12 : f32 to vector<30x16x16xf32>
    %37 = arith.mulf %36, %35 : vector<30x16x16xf32>
    %38 = arith.addf %34, %37 : vector<30x16x16xf32>
    %39 = vector.extract_strided_slice %7 {offsets = [0, 0, 8], sizes = [30, 16, 16], strides = [1, 1, 1]} : vector<30x16x26xf32> to vector<30x16x16xf32>
    %cst_13 = arith.constant 0.0360007733 : f32
    %40 = vector.broadcast %cst_13 : f32 to vector<30x16x16xf32>
    %41 = arith.mulf %40, %39 : vector<30x16x16xf32>
    %42 = arith.addf %38, %41 : vector<30x16x16xf32>
    %43 = vector.extract_strided_slice %7 {offsets = [0, 0, 9], sizes = [30, 16, 16], strides = [1, 1, 1]} : vector<30x16x26xf32> to vector<30x16x16xf32>
    %cst_14 = arith.constant 0.00759875821 : f32
    %44 = vector.broadcast %cst_14 : f32 to vector<30x16x16xf32>
    %45 = arith.mulf %44, %43 : vector<30x16x16xf32>
    %46 = arith.addf %42, %45 : vector<30x16x16xf32>
    %47 = vector.extract_strided_slice %7 {offsets = [0, 0, 10], sizes = [30, 16, 16], strides = [1, 1, 1]} : vector<30x16x26xf32> to vector<30x16x16xf32>
    %cst_15 = arith.constant 0.00102838012 : f32
    %48 = vector.broadcast %cst_15 : f32 to vector<30x16x16xf32>
    %49 = arith.mulf %48, %47 : vector<30x16x16xf32>
    %50 = arith.addf %46, %49 : vector<30x16x16xf32>
    %cst_16 = arith.constant 0.000000e+00 : f32
    %51 = vector.broadcast %cst_16 : f32 to vector<30x5x16xf32>
    %52 = tpu.concatenate %51, %50, %51 in 1 : vector<30x5x16xf32>, vector<30x16x16xf32>, vector<30x5x16xf32> -> vector<30x26x16xf32>
    %53 = vector.extract_strided_slice %52 {offsets = [0, 0, 0], sizes = [30, 16, 16], strides = [1, 1, 1]} : vector<30x26x16xf32> to vector<30x16x16xf32>
    %cst_17 = arith.constant 0.00102838012 : f32
    %54 = vector.broadcast %cst_17 : f32 to vector<30x16x16xf32>
    %55 = arith.mulf %54, %53 : vector<30x16x16xf32>
    %56 = vector.extract_strided_slice %52 {offsets = [0, 1, 0], sizes = [30, 16, 16], strides = [1, 1, 1]} : vector<30x26x16xf32> to vector<30x16x16xf32>
    %cst_18 = arith.constant 0.00759875821 : f32
    %57 = vector.broadcast %cst_18 : f32 to vector<30x16x16xf32>
    %58 = arith.mulf %57, %56 : vector<30x16x16xf32>
    %59 = arith.addf %55, %58 : vector<30x16x16xf32>
    %60 = vector.extract_strided_slice %52 {offsets = [0, 2, 0], sizes = [30, 16, 16], strides = [1, 1, 1]} : vector<30x26x16xf32> to vector<30x16x16xf32>
    %cst_19 = arith.constant 0.0360007733 : f32
    %61 = vector.broadcast %cst_19 : f32 to vector<30x16x16xf32>
    %62 = arith.mulf %61, %60 : vector<30x16x16xf32>
    %63 = arith.addf %59, %62 : vector<30x16x16xf32>
    %64 = vector.extract_strided_slice %52 {offsets = [0, 3, 0], sizes = [30, 16, 16], strides = [1, 1, 1]} : vector<30x26x16xf32> to vector<30x16x16xf32>
    %cst_20 = arith.constant 0.109360687 : f32
    %65 = vector.broadcast %cst_20 : f32 to vector<30x16x16xf32>
    %66 = arith.mulf %65, %64 : vector<30x16x16xf32>
    %67 = arith.addf %63, %66 : vector<30x16x16xf32>
    %68 = vector.extract_strided_slice %52 {offsets = [0, 4, 0], sizes = [30, 16, 16], strides = [1, 1, 1]} : vector<30x26x16xf32> to vector<30x16x16xf32>
    %cst_21 = arith.constant 0.213005543 : f32
    %69 = vector.broadcast %cst_21 : f32 to vector<30x16x16xf32>
    %70 = arith.mulf %69, %68 : vector<30x16x16xf32>
    %71 = arith.addf %67, %70 : vector<30x16x16xf32>
    %72 = vector.extract_strided_slice %52 {offsets = [0, 5, 0], sizes = [30, 16, 16], strides = [1, 1, 1]} : vector<30x26x16xf32> to vector<30x16x16xf32>
    %cst_22 = arith.constant 0.266011715 : f32
    %73 = vector.broadcast %cst_22 : f32 to vector<30x16x16xf32>
    %74 = arith.mulf %73, %72 : vector<30x16x16xf32>
    %75 = arith.addf %71, %74 : vector<30x16x16xf32>
    %76 = vector.extract_strided_slice %52 {offsets = [0, 6, 0], sizes = [30, 16, 16], strides = [1, 1, 1]} : vector<30x26x16xf32> to vector<30x16x16xf32>
    %cst_23 = arith.constant 0.213005543 : f32
    %77 = vector.broadcast %cst_23 : f32 to vector<30x16x16xf32>
    %78 = arith.mulf %77, %76 : vector<30x16x16xf32>
    %79 = arith.addf %75, %78 : vector<30x16x16xf32>
    %80 = vector.extract_strided_slice %52 {offsets = [0, 7, 0], sizes = [30, 16, 16], strides = [1, 1, 1]} : vector<30x26x16xf32> to vector<30x16x16xf32>
    %cst_24 = arith.constant 0.109360687 : f32
    %81 = vector.broadcast %cst_24 : f32 to vector<30x16x16xf32>
    %82 = arith.mulf %81, %80 : vector<30x16x16xf32>
    %83 = arith.addf %79, %82 : vector<30x16x16xf32>
    %84 = vector.extract_strided_slice %52 {offsets = [0, 8, 0], sizes = [30, 16, 16], strides = [1, 1, 1]} : vector<30x26x16xf32> to vector<30x16x16xf32>
    %cst_25 = arith.constant 0.0360007733 : f32
    %85 = vector.broadcast %cst_25 : f32 to vector<30x16x16xf32>
    %86 = arith.mulf %85, %84 : vector<30x16x16xf32>
    %87 = arith.addf %83, %86 : vector<30x16x16xf32>
    %88 = vector.extract_strided_slice %52 {offsets = [0, 9, 0], sizes = [30, 16, 16], strides = [1, 1, 1]} : vector<30x26x16xf32> to vector<30x16x16xf32>
    %cst_26 = arith.constant 0.00759875821 : f32
    %89 = vector.broadcast %cst_26 : f32 to vector<30x16x16xf32>
    %90 = arith.mulf %89, %88 : vector<30x16x16xf32>
    %91 = arith.addf %87, %90 : vector<30x16x16xf32>
    %92 = vector.extract_strided_slice %52 {offsets = [0, 10, 0], sizes = [30, 16, 16], strides = [1, 1, 1]} : vector<30x26x16xf32> to vector<30x16x16xf32>
    %cst_27 = arith.constant 0.00102838012 : f32
    %93 = vector.broadcast %cst_27 : f32 to vector<30x16x16xf32>
    %94 = arith.mulf %93, %92 : vector<30x16x16xf32>
    %95 = arith.addf %91, %94 : vector<30x16x16xf32>
    %96 = vector.extract_strided_slice %95 {offsets = [0, 0, 0], sizes = [6, 16, 16], strides = [1, 1, 1]} : vector<30x16x16xf32> to vector<6x16x16xf32>
    %97 = vector.extract_strided_slice %95 {offsets = [6, 0, 0], sizes = [6, 16, 16], strides = [1, 1, 1]} : vector<30x16x16xf32> to vector<6x16x16xf32>
    %98 = vector.extract_strided_slice %95 {offsets = [12, 0, 0], sizes = [6, 16, 16], strides = [1, 1, 1]} : vector<30x16x16xf32> to vector<6x16x16xf32>
    %99 = vector.extract_strided_slice %95 {offsets = [18, 0, 0], sizes = [6, 16, 16], strides = [1, 1, 1]} : vector<30x16x16xf32> to vector<6x16x16xf32>
    %100 = vector.extract_strided_slice %95 {offsets = [24, 0, 0], sizes = [6, 16, 16], strides = [1, 1, 1]} : vector<30x16x16xf32> to vector<6x16x16xf32>
    %101 = arith.mulf %96, %96 : vector<6x16x16xf32>
    %102 = arith.mulf %97, %97 : vector<6x16x16xf32>
    %103 = arith.mulf %96, %97 : vector<6x16x16xf32>
    %104 = arith.subf %98, %101 : vector<6x16x16xf32>
    %105 = arith.subf %99, %102 : vector<6x16x16xf32>
    %106 = arith.subf %100, %103 : vector<6x16x16xf32>
    %cst_28 = arith.constant 2.000000e+00 : f32
    %107 = vector.broadcast %cst_28 : f32 to vector<6x16x16xf32>
    %108 = arith.mulf %107, %106 : vector<6x16x16xf32>
    %cst_29 = arith.constant 5.852250e+01 : f32
    %109 = vector.broadcast %cst_29 : f32 to vector<6x16x16xf32>
    %110 = arith.addf %108, %109 : vector<6x16x16xf32>
    %111 = arith.addf %104, %105 : vector<6x16x16xf32>
    %cst_30 = arith.constant 5.852250e+01 : f32
    %112 = vector.broadcast %cst_30 : f32 to vector<6x16x16xf32>
    %113 = arith.addf %111, %112 : vector<6x16x16xf32>
    %cst_31 = arith.constant 2.000000e+00 : f32
    %114 = vector.broadcast %cst_31 : f32 to vector<6x16x16xf32>
    %115 = arith.mulf %114, %103 : vector<6x16x16xf32>
    %cst_32 = arith.constant 6.502500e+00 : f32
    %116 = vector.broadcast %cst_32 : f32 to vector<6x16x16xf32>
    %117 = arith.addf %115, %116 : vector<6x16x16xf32>
    %118 = arith.mulf %117, %110 : vector<6x16x16xf32>
    %119 = arith.addf %101, %102 : vector<6x16x16xf32>
    %cst_33 = arith.constant 6.502500e+00 : f32
    %120 = vector.broadcast %cst_33 : f32 to vector<6x16x16xf32>
    %121 = arith.addf %119, %120 : vector<6x16x16xf32>
    %122 = arith.mulf %121, %113 : vector<6x16x16xf32>
    %123 = tpu.reciprocal %122 {approx = true} : vector<6x16x16xf32> -> vector<6x16x16xf32>
    %124 = arith.mulf %122, %123 : vector<6x16x16xf32>
    %cst_34 = arith.constant 2.000000e+00 : f32
    %125 = vector.broadcast %cst_34 : f32 to vector<6x16x16xf32>
    %126 = arith.subf %125, %124 : vector<6x16x16xf32>
    %127 = arith.mulf %123, %126 : vector<6x16x16xf32>
    %128 = arith.mulf %118, %127 : vector<6x16x16xf32>
    %cst_35 = arith.constant dense<0.000000e+00> : vector<6x16xf32>
    %129 = vector.multi_reduction <add>, %128, %cst_35 [2] : vector<6x16x16xf32> to vector<6x16xf32>
    %130 = vector.shape_cast %129 : vector<6x16xf32> to vector<6x16x1xf32>
    %cst_36 = arith.constant dense<0.000000e+00> : vector<6x1xf32>
    %131 = vector.multi_reduction <add>, %130, %cst_36 [1] : vector<6x16x1xf32> to vector<6x1xf32>
    %132 = vector.shape_cast %131 : vector<6x1xf32> to vector<6x1x1xf32>
    %cst_37 = arith.constant 3.906250e-03 : f32
    %133 = vector.broadcast %cst_37 : f32 to vector<6x1x1xf32>
    %134 = arith.mulf %132, %133 : vector<6x1x1xf32>
    %c0_38 = arith.constant 0 : index
    %c0_39 = arith.constant 0 : index
    %c0_40 = arith.constant 0 : index
    %135 = vector.load %arg3[%c0_38, %c0_39, %c0_40] : memref<6x1x1xf32, #tpu.memory_space<vmem>>, vector<6x1x1xf32>
    tpu.vector_store %arg3[%c0_38, %c0_39, %c0_40], %134 {strides = array<i32>} : memref<6x1x1xf32, #tpu.memory_space<vmem>>, vector<6x1x1xf32>,
    return
  }
  func.func @transform_0(%arg0: i32) -> (i32, i32, i32) {
    %c0_i32 = arith.constant 0 : i32
    %c0_i32_0 = arith.constant 0 : i32
    %c0_i32_1 = arith.constant 0 : i32
    return %arg0, %c0_i32, %c0_i32_0 : i32, i32, i32
  }
  func.func @transform_1(%arg0: i32) -> (i32, i32, i32) {
    %c0_i32 = arith.constant 0 : i32
    %c0_i32_0 = arith.constant 0 : i32
    %c0_i32_1 = arith.constant 0 : i32
    return %arg0, %c0_i32, %c0_i32_0 : i32, i32, i32
  }
  func.func @transform_2(%arg0: i32) -> (i32, i32, i32) {
    %c0_i32 = arith.constant 0 : i32
    %c0_i32_0 = arith.constant 0 : i32
    %c0_i32_1 = arith.constant 0 : i32
    return %arg0, %c0_i32, %c0_i32_0 : i32, i32, i32
  }
}

</mosaic_0001>

<llo_original>
// kernel: tpu_custom_call.1
$region0: #{tpu_custom_call.1}
  #allocation0 [shape = 'u32[]', space=smem, size = 0x4, offset = 0x4, fixed_abs, tag = 'smem constant byte address 0x4 - core index']
  #allocation1 [shape = 'u32[144,128]{1,0:T(1,128)}', space=vmem, size = 0x12000, scoped, tag = 'internal scratch']
  %s0 = inlined_call_operand.hbm [shape: f32[6,16,16], index: 0, kind: input, shape index: {}]
  %s1 = inlined_call_operand.hbm [shape: f32[6,16,16], index: 1, kind: input, shape index: {}]
  %s2 = inlined_call_operand.vmem [shape: f32[6,1,1], index: 2, kind: output, shape index: {}]
  %s3 = sld [smem:[#allocation0]]
  $region26: #{tpu_custom_call.1} parent=0
    _
  %s5 = ssub.s32 1, %s3
  %s6 = scalar_select 0, %s5, %s3
  $region1: #{tpu_custom_call.1} parent=0
    #allocation2 [shape = 'u8[49152]{0}', space=vmem, size = 0xc000, scoped, tag = 'input window, operand 0, single buffered']
    #allocation3 [shape = 's32[1]{0}', space=sflag, size = 0x4, scoped, tag = 'scoped memory for tpu_custom_call.1']
    #allocation4 [shape = 'u8[49152]{0}', space=vmem, size = 0xc000, scoped, tag = 'input window, operand 1, single buffered']
    #allocation5 [shape = 's32[1]{0}', space=sflag, size = 0x4, scoped, tag = 'scoped memory for tpu_custom_call.1']
    %7 = vsyncpa [#allocation3], 0
    %8 = vsyncpa [#allocation5], 0
    // Predicated region
    $region2: #{tpu_custom_call.1} parent=1 // pred_check
      _
    $region3: #{tpu_custom_call.1} parent=1 // pred_check_branch
      %10 = sbr.rel (0) target = $region5
    $region4: #{tpu_custom_call.1} parent=1 // pred_region
      %s12 = ssub.s32 1536, 1536
      %13 = vsyncadd [#allocation3], %s12
      %s14 = sshll.u32 [#allocation2], 4
      %s15 = int_to_ptr.vmem [resolvable:$true] %s14
      %20 = dma.hbm_to_vmem [thread:$0]  %s0, 1536, %s15, [#allocation3], 128, 128, 8
    $region5: #{tpu_custom_call.1} parent=1 // pred_fallthru
      _
    // Predicated region
    $region6: #{tpu_custom_call.1} parent=1 // pred_check
      _
    $region7: #{tpu_custom_call.1} parent=1 // pred_check_branch
      %22 = sbr.rel (0) target = $region9
    $region8: #{tpu_custom_call.1} parent=1 // pred_region
      %s24 = ssub.s32 1536, 1536
      %25 = vsyncadd [#allocation5], %s24
      %s26 = sshll.u32 [#allocation4], 4
      %s27 = int_to_ptr.vmem [resolvable:$true] %s26
      %32 = dma.hbm_to_vmem [thread:$0]  %s1, 1536, %s27, [#allocation5], 128, 128, 8
    $region9: #{tpu_custom_call.1} parent=1 // pred_fallthru
      _
    // Predicated region
    $region10: #{tpu_custom_call.1} parent=1 // pred_check
      _
    $region11: #{tpu_custom_call.1} parent=1 // pred_check_branch
      %34 = sbr.rel (0) target = $region13
    $region12: #{tpu_custom_call.1} parent=1 // pred_region
      %35 = dma.done [#allocation3], 1536
    $region13: #{tpu_custom_call.1} parent=1 // pred_fallthru
      _
    // Predicated region
    $region14: #{tpu_custom_call.1} parent=1 // pred_check
      _
    $region15: #{tpu_custom_call.1} parent=1 // pred_check_branch
      %37 = sbr.rel (0) target = $region17
    $region16: #{tpu_custom_call.1} parent=1 // pred_region
      %38 = dma.done [#allocation5], 1536
    $region17: #{tpu_custom_call.1} parent=1 // pred_fallthru
      _
    %v39 = vld [vmem:[#allocation2] sm:$0xff]
    %v40 = vld [vmem:[#allocation2 + $0x8] sm:$0xff]
    %v41 = vld [vmem:[#allocation2 + $0x10] sm:$0xff]
    %v42 = vld [vmem:[#allocation2 + $0x18] sm:$0xff]
    %v43 = vld [vmem:[#allocation2 + $0x20] sm:$0xff]
    %v44 = vld [vmem:[#allocation2 + $0x28] sm:$0xff]
    %v45 = vld [vmem:[#allocation2 + $0x30] sm:$0xff]
    %v46 = vld [vmem:[#allocation2 + $0x38] sm:$0xff]
    %v47 = vld [vmem:[#allocation2 + $0x40] sm:$0xff]
    %v48 = vld [vmem:[#allocation2 + $0x48] sm:$0xff]
    %v49 = vld [vmem:[#allocation2 + $0x50] sm:$0xff]
    %v50 = vld [vmem:[#allocation2 + $0x58] sm:$0xff]
    %v51 = vld [vmem:[#allocation4] sm:$0xff]
    %v52 = vld [vmem:[#allocation4 + $0x8] sm:$0xff]
    %v53 = vld [vmem:[#allocation4 + $0x10] sm:$0xff]
    %v54 = vld [vmem:[#allocation4 + $0x18] sm:$0xff]
    %v55 = vld [vmem:[#allocation4 + $0x20] sm:$0xff]
    %v56 = vld [vmem:[#allocation4 + $0x28] sm:$0xff]
    %v57 = vld [vmem:[#allocation4 + $0x30] sm:$0xff]
    %v58 = vld [vmem:[#allocation4 + $0x38] sm:$0xff]
    %v59 = vld [vmem:[#allocation4 + $0x40] sm:$0xff]
    %v60 = vld [vmem:[#allocation4 + $0x48] sm:$0xff]
    %v61 = vld [vmem:[#allocation4 + $0x50] sm:$0xff]
    %v62 = vld [vmem:[#allocation4 + $0x58] sm:$0xff]
    %v63 = vmul.f32 %v39, %v39
    %v64 = vmul.f32 %v40, %v40
    %v65 = vmul.f32 %v41, %v41
    %v66 = vmul.f32 %v42, %v42
    %v67 = vmul.f32 %v43, %v43
    %v68 = vmul.f32 %v44, %v44
    %v69 = vmul.f32 %v45, %v45
    %v70 = vmul.f32 %v46, %v46
    %v71 = vmul.f32 %v47, %v47
    %v72 = vmul.f32 %v48, %v48
    %v73 = vmul.f32 %v49, %v49
    %v74 = vmul.f32 %v50, %v50
    %v75 = vmul.f32 %v51, %v51
    %v76 = vmul.f32 %v52, %v52
    %v77 = vmul.f32 %v53, %v53
    %v78 = vmul.f32 %v54, %v54
    %v79 = vmul.f32 %v55, %v55
    %v80 = vmul.f32 %v56, %v56
    %v81 = vmul.f32 %v57, %v57
    %v82 = vmul.f32 %v58, %v58
    %v83 = vmul.f32 %v59, %v59
    %v84 = vmul.f32 %v60, %v60
    %v85 = vmul.f32 %v61, %v61
    %v86 = vmul.f32 %v62, %v62
    %v87 = vmul.f32 %v39, %v51
    %v88 = vmul.f32 %v40, %v52
    %v89 = vmul.f32 %v41, %v53
    %v90 = vmul.f32 %v42, %v54
    %v91 = vmul.f32 %v43, %v55
    %v92 = vmul.f32 %v44, %v56
    %v93 = vmul.f32 %v45, %v57
    %v94 = vmul.f32 %v46, %v58
    %v95 = vmul.f32 %v47, %v59
    %v96 = vmul.f32 %v48, %v60
    %v97 = vmul.f32 %v49, %v61
    %v98 = vmul.f32 %v50, %v62
    %159 = vrot.lane.b32.xlu0 %v39, 5
    %v160 = vpop.permute.xlu0 %159
    %161 = vrot.lane.b32.xlu0 %v40, 5
    %v162 = vpop.permute.xlu0 %161
    %163 = vrot.lane.b32.xlu0 %v41, 5
    %v164 = vpop.permute.xlu0 %163
    %165 = vrot.lane.b32.xlu0 %v42, 5
    %v166 = vpop.permute.xlu0 %165
    %167 = vrot.lane.b32.xlu0 %v43, 5
    %v168 = vpop.permute.xlu0 %167
    %169 = vrot.lane.b32.xlu0 %v44, 5
    %v170 = vpop.permute.xlu0 %169
    %171 = vrot.lane.b32.xlu0 %v45, 5
    %v172 = vpop.permute.xlu0 %171
    %173 = vrot.lane.b32.xlu0 %v46, 5
    %v174 = vpop.permute.xlu0 %173
    %175 = vrot.lane.b32.xlu0 %v47, 5
    %v176 = vpop.permute.xlu0 %175
    %177 = vrot.lane.b32.xlu0 %v48, 5
    %v178 = vpop.permute.xlu0 %177
    %179 = vrot.lane.b32.xlu0 %v49, 5
    %v180 = vpop.permute.xlu0 %179
    %181 = vrot.lane.b32.xlu0 %v50, 5
    %v182 = vpop.permute.xlu0 %181
    %183 = vrot.lane.b32.xlu0 %v51, 5
    %v184 = vpop.permute.xlu0 %183
    %185 = vrot.lane.b32.xlu0 %v52, 5
    %v186 = vpop.permute.xlu0 %185
    %187 = vrot.lane.b32.xlu0 %v53, 5
    %v188 = vpop.permute.xlu0 %187
    %189 = vrot.lane.b32.xlu0 %v54, 5
    %v190 = vpop.permute.xlu0 %189
    %191 = vrot.lane.b32.xlu0 %v55, 5
    %v192 = vpop.permute.xlu0 %191
    %193 = vrot.lane.b32.xlu0 %v56, 5
    %v194 = vpop.permute.xlu0 %193
    %195 = vrot.lane.b32.xlu0 %v57, 5
    %v196 = vpop.permute.xlu0 %195
    %197 = vrot.lane.b32.xlu0 %v58, 5
    %v198 = vpop.permute.xlu0 %197
    %199 = vrot.lane.b32.xlu0 %v59, 5
    %v200 = vpop.permute.xlu0 %199
    %201 = vrot.lane.b32.xlu0 %v60, 5
    %v202 = vpop.permute.xlu0 %201
    %203 = vrot.lane.b32.xlu0 %v61, 5
    %v204 = vpop.permute.xlu0 %203
    %205 = vrot.lane.b32.xlu0 %v62, 5
    %v206 = vpop.permute.xlu0 %205
    %207 = vrot.lane.b32.xlu0 %v63, 5
    %v208 = vpop.permute.xlu0 %207
    %209 = vrot.lane.b32.xlu0 %v64, 5
    %v210 = vpop.permute.xlu0 %209
    %211 = vrot.lane.b32.xlu0 %v65, 5
    %v212 = vpop.permute.xlu0 %211
    %213 = vrot.lane.b32.xlu0 %v66, 5
    %v214 = vpop.permute.xlu0 %213
    %215 = vrot.lane.b32.xlu0 %v67, 5
    %v216 = vpop.permute.xlu0 %215
    %217 = vrot.lane.b32.xlu0 %v68, 5
    %v218 = vpop.permute.xlu0 %217
    %219 = vrot.lane.b32.xlu0 %v69, 5
    %v220 = vpop.permute.xlu0 %219
    %221 = vrot.lane.b32.xlu0 %v70, 5
    %v222 = vpop.permute.xlu0 %221
    %223 = vrot.lane.b32.xlu0 %v71, 5
    %v224 = vpop.permute.xlu0 %223
    %225 = vrot.lane.b32.xlu0 %v72, 5
    %v226 = vpop.permute.xlu0 %225
    %227 = vrot.lane.b32.xlu0 %v73, 5
    %v228 = vpop.permute.xlu0 %227
    %229 = vrot.lane.b32.xlu0 %v74, 5
    %v230 = vpop.permute.xlu0 %229
    %231 = vrot.lane.b32.xlu0 %v75, 5
    %v232 = vpop.permute.xlu0 %231
    %233 = vrot.lane.b32.xlu0 %v76, 5
    %v234 = vpop.permute.xlu0 %233
    %235 = vrot.lane.b32.xlu0 %v77, 5
    %v236 = vpop.permute.xlu0 %235
    %237 = vrot.lane.b32.xlu0 %v78, 5
    %v238 = vpop.permute.xlu0 %237
    %239 = vrot.lane.b32.xlu0 %v79, 5
    %v240 = vpop.permute.xlu0 %239
    %241 = vrot.lane.b32.xlu0 %v80, 5
    %v242 = vpop.permute.xlu0 %241
    %243 = vrot.lane.b32.xlu0 %v81, 5
    %v244 = vpop.permute.xlu0 %243
    %245 = vrot.lane.b32.xlu0 %v82, 5
    %v246 = vpop.permute.xlu0 %245
    %247 = vrot.lane.b32.xlu0 %v83, 5
    %v248 = vpop.permute.xlu0 %247
    %249 = vrot.lane.b32.xlu0 %v84, 5
    %v250 = vpop.permute.xlu0 %249
    %251 = vrot.lane.b32.xlu0 %v85, 5
    %v252 = vpop.permute.xlu0 %251
    %253 = vrot.lane.b32.xlu0 %v86, 5
    %v254 = vpop.permute.xlu0 %253
    %255 = vrot.lane.b32.xlu0 %v87, 5
    %v256 = vpop.permute.xlu0 %255
    %257 = vrot.lane.b32.xlu0 %v88, 5
    %v258 = vpop.permute.xlu0 %257
    %259 = vrot.lane.b32.xlu0 %v89, 5
    %v260 = vpop.permute.xlu0 %259
    %261 = vrot.lane.b32.xlu0 %v90, 5
    %v262 = vpop.permute.xlu0 %261
    %263 = vrot.lane.b32.xlu0 %v91, 5
    %v264 = vpop.permute.xlu0 %263
    %265 = vrot.lane.b32.xlu0 %v92, 5
    %v266 = vpop.permute.xlu0 %265
    %267 = vrot.lane.b32.xlu0 %v93, 5
    %v268 = vpop.permute.xlu0 %267
    %269 = vrot.lane.b32.xlu0 %v94, 5
    %v270 = vpop.permute.xlu0 %269
    %271 = vrot.lane.b32.xlu0 %v95, 5
    %v272 = vpop.permute.xlu0 %271
    %273 = vrot.lane.b32.xlu0 %v96, 5
    %v274 = vpop.permute.xlu0 %273
    %275 = vrot.lane.b32.xlu0 %v97, 5
    %v276 = vpop.permute.xlu0 %275
    %277 = vrot.lane.b32.xlu0 %v98, 5
    %v278 = vpop.permute.xlu0 %277
    %vm339 = vcmask 39936
    %v340 = vsel %vm339, 0.0, %v160
    %v341 = vsel %vm339, 0.0, %v162
    %v342 = vsel %vm339, 0.0, %v164
    %v343 = vsel %vm339, 0.0, %v166
    %v344 = vsel %vm339, 0.0, %v168
    %v345 = vsel %vm339, 0.0, %v170
    %v346 = vsel %vm339, 0.0, %v172
    %v347 = vsel %vm339, 0.0, %v174
    %v348 = vsel %vm339, 0.0, %v176
    %v349 = vsel %vm339, 0.0, %v178
    %v350 = vsel %vm339, 0.0, %v180
    %v351 = vsel %vm339, 0.0, %v182
    %v352 = vsel %vm339, 0.0, %v184
    %v353 = vsel %vm339, 0.0, %v186
    %v354 = vsel %vm339, 0.0, %v188
    %v355 = vsel %vm339, 0.0, %v190
    %v356 = vsel %vm339, 0.0, %v192
    %v357 = vsel %vm339, 0.0, %v194
    %v358 = vsel %vm339, 0.0, %v196
    %v359 = vsel %vm339, 0.0, %v198
    %v360 = vsel %vm339, 0.0, %v200
    %v361 = vsel %vm339, 0.0, %v202
    %v362 = vsel %vm339, 0.0, %v204
    %v363 = vsel %vm339, 0.0, %v206
    %v364 = vsel %vm339, 0.0, %v208
    %v365 = vsel %vm339, 0.0, %v210
    %v366 = vsel %vm339, 0.0, %v212
    %v367 = vsel %vm339, 0.0, %v214
    %v368 = vsel %vm339, 0.0, %v216
    %v369 = vsel %vm339, 0.0, %v218
    %v370 = vsel %vm339, 0.0, %v220
    %v371 = vsel %vm339, 0.0, %v222
    %v372 = vsel %vm339, 0.0, %v224
    %v373 = vsel %vm339, 0.0, %v226
    %v374 = vsel %vm339, 0.0, %v228
    %v375 = vsel %vm339, 0.0, %v230
    %v376 = vsel %vm339, 0.0, %v232
    %v377 = vsel %vm339, 0.0, %v234
    %v378 = vsel %vm339, 0.0, %v236
    %v379 = vsel %vm339, 0.0, %v238
    %v380 = vsel %vm339, 0.0, %v240
    %v381 = vsel %vm339, 0.0, %v242
    %v382 = vsel %vm339, 0.0, %v244
    %v383 = vsel %vm339, 0.0, %v246
    %v384 = vsel %vm339, 0.0, %v248
    %v385 = vsel %vm339, 0.0, %v250
    %v386 = vsel %vm339, 0.0, %v252
    %v387 = vsel %vm339, 0.0, %v254
    %v388 = vsel %vm339, 0.0, %v256
    %v389 = vsel %vm339, 0.0, %v258
    %v390 = vsel %vm339, 0.0, %v260
    %v391 = vsel %vm339, 0.0, %v262
    %v392 = vsel %vm339, 0.0, %v264
    %v393 = vsel %vm339, 0.0, %v266
    %v394 = vsel %vm339, 0.0, %v268
    %v395 = vsel %vm339, 0.0, %v270
    %v396 = vsel %vm339, 0.0, %v272
    %v397 = vsel %vm339, 0.0, %v274
    %v398 = vsel %vm339, 0.0, %v276
    %v399 = vsel %vm339, 0.0, %v278
    %vm400 = vcmask 171008
    %v401 = vsel %vm400, %v340, 0.0
    %v402 = vsel %vm400, %v341, 0.0
    %v403 = vsel %vm400, %v342, 0.0
    %v404 = vsel %vm400, %v343, 0.0
    %v405 = vsel %vm400, %v344, 0.0
    %v406 = vsel %vm400, %v345, 0.0
    %v407 = vsel %vm400, %v346, 0.0
    %v408 = vsel %vm400, %v347, 0.0
    %v409 = vsel %vm400, %v348, 0.0
    %v410 = vsel %vm400, %v349, 0.0
    %v411 = vsel %vm400, %v350, 0.0
    %v412 = vsel %vm400, %v351, 0.0
    %v413 = vsel %vm400, %v352, 0.0
    %v414 = vsel %vm400, %v353, 0.0
    %v415 = vsel %vm400, %v354, 0.0
    %v416 = vsel %vm400, %v355, 0.0
    %v417 = vsel %vm400, %v356, 0.0
    %v418 = vsel %vm400, %v357, 0.0
    %v419 = vsel %vm400, %v358, 0.0
    %v420 = vsel %vm400, %v359, 0.0
    %v421 = vsel %vm400, %v360, 0.0
    %v422 = vsel %vm400, %v361, 0.0
    %v423 = vsel %vm400, %v362, 0.0
    %v424 = vsel %vm400, %v363, 0.0
    %v425 = vsel %vm400, %v364, 0.0
    %v426 = vsel %vm400, %v365, 0.0
    %v427 = vsel %vm400, %v366, 0.0
    %v428 = vsel %vm400, %v367, 0.0
    %v429 = vsel %vm400, %v368, 0.0
    %v430 = vsel %vm400, %v369, 0.0
    %v431 = vsel %vm400, %v370, 0.0
    %v432 = vsel %vm400, %v371, 0.0
    %v433 = vsel %vm400, %v372, 0.0
    %v434 = vsel %vm400, %v373, 0.0
    %v435 = vsel %vm400, %v374, 0.0
    %v436 = vsel %vm400, %v375, 0.0
    %v437 = vsel %vm400, %v376, 0.0
    %v438 = vsel %vm400, %v377, 0.0
    %v439 = vsel %vm400, %v378, 0.0
    %v440 = vsel %vm400, %v379, 0.0
    %v441 = vsel %vm400, %v380, 0.0
    %v442 = vsel %vm400, %v381, 0.0
    %v443 = vsel %vm400, %v382, 0.0
    %v444 = vsel %vm400, %v383, 0.0
    %v445 = vsel %vm400, %v384, 0.0
    %v446 = vsel %vm400, %v385, 0.0
    %v447 = vsel %vm400, %v386, 0.0
    %v448 = vsel %vm400, %v387, 0.0
    %v449 = vsel %vm400, %v388, 0.0
    %v450 = vsel %vm400, %v389, 0.0
    %v451 = vsel %vm400, %v390, 0.0
    %v452 = vsel %vm400, %v391, 0.0
    %v453 = vsel %vm400, %v392, 0.0
    %v454 = vsel %vm400, %v393, 0.0
    %v455 = vsel %vm400, %v394, 0.0
    %v456 = vsel %vm400, %v395, 0.0
    %v457 = vsel %vm400, %v396, 0.0
    %v458 = vsel %vm400, %v397, 0.0
    %v459 = vsel %vm400, %v398, 0.0
    %v460 = vsel %vm400, %v399, 0.0
    %v461 = vmul.f32 %v401, 0.0010283801
    %v462 = vmul.f32 %v402, 0.0010283801
    %v463 = vmul.f32 %v403, 0.0010283801
    %v464 = vmul.f32 %v404, 0.0010283801
    %v465 = vmul.f32 %v405, 0.0010283801
    %v466 = vmul.f32 %v406, 0.0010283801
    %v467 = vmul.f32 %v407, 0.0010283801
    %v468 = vmul.f32 %v408, 0.0010283801
    %v469 = vmul.f32 %v409, 0.0010283801
    %v470 = vmul.f32 %v410, 0.0010283801
    %v471 = vmul.f32 %v411, 0.0010283801
    %v472 = vmul.f32 %v412, 0.0010283801
    %v473 = vmul.f32 %v413, 0.0010283801
    %v474 = vmul.f32 %v414, 0.0010283801
    %v475 = vmul.f32 %v415, 0.0010283801
    %v476 = vmul.f32 %v416, 0.0010283801
    %v477 = vmul.f32 %v417, 0.0010283801
    %v478 = vmul.f32 %v418, 0.0010283801
    %v479 = vmul.f32 %v419, 0.0010283801
    %v480 = vmul.f32 %v420, 0.0010283801
    %v481 = vmul.f32 %v421, 0.0010283801
    %v482 = vmul.f32 %v422, 0.0010283801
    %v483 = vmul.f32 %v423, 0.0010283801
    %v484 = vmul.f32 %v424, 0.0010283801
    %v485 = vmul.f32 %v425, 0.0010283801
    %v486 = vmul.f32 %v426, 0.0010283801
    %v487 = vmul.f32 %v427, 0.0010283801
    %v488 = vmul.f32 %v428, 0.0010283801
    %v489 = vmul.f32 %v429, 0.0010283801
    %v490 = vmul.f32 %v430, 0.0010283801
    %v491 = vmul.f32 %v431, 0.0010283801
    %v492 = vmul.f32 %v432, 0.0010283801
    %v493 = vmul.f32 %v433, 0.0010283801
    %v494 = vmul.f32 %v434, 0.0010283801
    %v495 = vmul.f32 %v435, 0.0010283801
    %v496 = vmul.f32 %v436, 0.0010283801
    %v497 = vmul.f32 %v437, 0.0010283801
    %v498 = vmul.f32 %v438, 0.0010283801
    %v499 = vmul.f32 %v439, 0.0010283801
    %v500 = vmul.f32 %v440, 0.0010283801
    %v501 = vmul.f32 %v441, 0.0010283801
    %v502 = vmul.f32 %v442, 0.0010283801
    %v503 = vmul.f32 %v443, 0.0010283801
    %v504 = vmul.f32 %v444, 0.0010283801
    %v505 = vmul.f32 %v445, 0.0010283801
    %v506 = vmul.f32 %v446, 0.0010283801
    %v507 = vmul.f32 %v447, 0.0010283801
    %v508 = vmul.f32 %v448, 0.0010283801
    %v509 = vmul.f32 %v449, 0.0010283801
    %v510 = vmul.f32 %v450, 0.0010283801
    %v511 = vmul.f32 %v451, 0.0010283801
    %v512 = vmul.f32 %v452, 0.0010283801
    %v513 = vmul.f32 %v453, 0.0010283801
    %v514 = vmul.f32 %v454, 0.0010283801
    %v515 = vmul.f32 %v455, 0.0010283801
    %v516 = vmul.f32 %v456, 0.0010283801
    %v517 = vmul.f32 %v457, 0.0010283801
    %v518 = vmul.f32 %v458, 0.0010283801
    %v519 = vmul.f32 %v459, 0.0010283801
    %v520 = vmul.f32 %v460, 0.0010283801
    %v521 = vmul.f32 %v401, 0.007598758
    %v522 = vmul.f32 %v402, 0.007598758
    %v523 = vmul.f32 %v403, 0.007598758
    %v524 = vmul.f32 %v404, 0.007598758
    %v525 = vmul.f32 %v405, 0.007598758
    %v526 = vmul.f32 %v406, 0.007598758
    %v527 = vmul.f32 %v407, 0.007598758
    %v528 = vmul.f32 %v408, 0.007598758
    %v529 = vmul.f32 %v409, 0.007598758
    %v530 = vmul.f32 %v410, 0.007598758
    %v531 = vmul.f32 %v411, 0.007598758
    %v532 = vmul.f32 %v412, 0.007598758
    %v533 = vmul.f32 %v413, 0.007598758
    %v534 = vmul.f32 %v414, 0.007598758
    %v535 = vmul.f32 %v415, 0.007598758
    %v536 = vmul.f32 %v416, 0.007598758
    %v537 = vmul.f32 %v417, 0.007598758
    %v538 = vmul.f32 %v418, 0.007598758
    %v539 = vmul.f32 %v419, 0.007598758
    %v540 = vmul.f32 %v420, 0.007598758
    %v541 = vmul.f32 %v421, 0.007598758
    %v542 = vmul.f32 %v422, 0.007598758
    %v543 = vmul.f32 %v423, 0.007598758
    %v544 = vmul.f32 %v424, 0.007598758
    %v545 = vmul.f32 %v425, 0.007598758
    %v546 = vmul.f32 %v426, 0.007598758
    %v547 = vmul.f32 %v427, 0.007598758
    %v548 = vmul.f32 %v428, 0.007598758
    %v549 = vmul.f32 %v429, 0.007598758
    %v550 = vmul.f32 %v430, 0.007598758
    %v551 = vmul.f32 %v431, 0.007598758
    %v552 = vmul.f32 %v432, 0.007598758
    %v553 = vmul.f32 %v433, 0.007598758
    %v554 = vmul.f32 %v434, 0.007598758
    %v555 = vmul.f32 %v435, 0.007598758
    %v556 = vmul.f32 %v436, 0.007598758
    %v557 = vmul.f32 %v437, 0.007598758
    %v558 = vmul.f32 %v438, 0.007598758
    %v559 = vmul.f32 %v439, 0.007598758
    %v560 = vmul.f32 %v440, 0.007598758
    %v561 = vmul.f32 %v441, 0.007598758
    %v562 = vmul.f32 %v442, 0.007598758
    %v563 = vmul.f32 %v443, 0.007598758
    %v564 = vmul.f32 %v444, 0.007598758
    %v565 = vmul.f32 %v445, 0.007598758
    %v566 = vmul.f32 %v446, 0.007598758
    %v567 = vmul.f32 %v447, 0.007598758
    %v568 = vmul.f32 %v448, 0.007598758
    %v569 = vmul.f32 %v449, 0.007598758
    %v570 = vmul.f32 %v450, 0.007598758
    %v571 = vmul.f32 %v451, 0.007598758
    %v572 = vmul.f32 %v452, 0.007598758
    %v573 = vmul.f32 %v453, 0.007598758
    %v574 = vmul.f32 %v454, 0.007598758
    %v575 = vmul.f32 %v455, 0.007598758
    %v576 = vmul.f32 %v456, 0.007598758
    %v577 = vmul.f32 %v457, 0.007598758
    %v578 = vmul.f32 %v458, 0.007598758
    %v579 = vmul.f32 %v459, 0.007598758
    %v580 = vmul.f32 %v460, 0.007598758
    %641 = vrot.lane.b32.xlu0 %v521, 127
    %v642 = vpop.permute.xlu0 %641
    %643 = vrot.lane.b32.xlu0 %v522, 127
    %v644 = vpop.permute.xlu0 %643
    %645 = vrot.lane.b32.xlu0 %v523, 127
    %v646 = vpop.permute.xlu0 %645
    %647 = vrot.lane.b32.xlu0 %v524, 127
    %v648 = vpop.permute.xlu0 %647
    %649 = vrot.lane.b32.xlu0 %v525, 127
    %v650 = vpop.permute.xlu0 %649
    %651 = vrot.lane.b32.xlu0 %v526, 127
    %v652 = vpop.permute.xlu0 %651
    %653 = vrot.lane.b32.xlu0 %v527, 127
    %v654 = vpop.permute.xlu0 %653
    %655 = vrot.lane.b32.xlu0 %v528, 127
    %v656 = vpop.permute.xlu0 %655
    %657 = vrot.lane.b32.xlu0 %v529, 127
    %v658 = vpop.permute.xlu0 %657
    %659 = vrot.lane.b32.xlu0 %v530, 127
    %v660 = vpop.permute.xlu0 %659
    %661 = vrot.lane.b32.xlu0 %v531, 127
    %v662 = vpop.permute.xlu0 %661
    %663 = vrot.lane.b32.xlu0 %v532, 127
    %v664 = vpop.permute.xlu0 %663
    %665 = vrot.lane.b32.xlu0 %v533, 127
    %v666 = vpop.permute.xlu0 %665
    %667 = vrot.lane.b32.xlu0 %v534, 127
    %v668 = vpop.permute.xlu0 %667
    %669 = vrot.lane.b32.xlu0 %v535, 127
    %v670 = vpop.permute.xlu0 %669
    %671 = vrot.lane.b32.xlu0 %v536, 127
    %v672 = vpop.permute.xlu0 %671
    %673 = vrot.lane.b32.xlu0 %v537, 127
    %v674 = vpop.permute.xlu0 %673
    %675 = vrot.lane.b32.xlu0 %v538, 127
    %v676 = vpop.permute.xlu0 %675
    %677 = vrot.lane.b32.xlu0 %v539, 127
    %v678 = vpop.permute.xlu0 %677
    %679 = vrot.lane.b32.xlu0 %v540, 127
    %v680 = vpop.permute.xlu0 %679
    %681 = vrot.lane.b32.xlu0 %v541, 127
    %v682 = vpop.permute.xlu0 %681
    %683 = vrot.lane.b32.xlu0 %v542, 127
    %v684 = vpop.permute.xlu0 %683
    %685 = vrot.lane.b32.xlu0 %v543, 127
    %v686 = vpop.permute.xlu0 %685
    %687 = vrot.lane.b32.xlu0 %v544, 127
    %v688 = vpop.permute.xlu0 %687
    %689 = vrot.lane.b32.xlu0 %v545, 127
    %v690 = vpop.permute.xlu0 %689
    %691 = vrot.lane.b32.xlu0 %v546, 127
    %v692 = vpop.permute.xlu0 %691
    %693 = vrot.lane.b32.xlu0 %v547, 127
    %v694 = vpop.permute.xlu0 %693
    %695 = vrot.lane.b32.xlu0 %v548, 127
    %v696 = vpop.permute.xlu0 %695
    %697 = vrot.lane.b32.xlu0 %v549, 127
    %v698 = vpop.permute.xlu0 %697
    %699 = vrot.lane.b32.xlu0 %v550, 127
    %v700 = vpop.permute.xlu0 %699
    %701 = vrot.lane.b32.xlu0 %v551, 127
    %v702 = vpop.permute.xlu0 %701
    %703 = vrot.lane.b32.xlu0 %v552, 127
    %v704 = vpop.permute.xlu0 %703
    %705 = vrot.lane.b32.xlu0 %v553, 127
    %v706 = vpop.permute.xlu0 %705
    %707 = vrot.lane.b32.xlu0 %v554, 127
    %v708 = vpop.permute.xlu0 %707
    %709 = vrot.lane.b32.xlu0 %v555, 127
    %v710 = vpop.permute.xlu0 %709
    %711 = vrot.lane.b32.xlu0 %v556, 127
    %v712 = vpop.permute.xlu0 %711
    %713 = vrot.lane.b32.xlu0 %v557, 127
    %v714 = vpop.permute.xlu0 %713
    %715 = vrot.lane.b32.xlu0 %v558, 127
    %v716 = vpop.permute.xlu0 %715
    %717 = vrot.lane.b32.xlu0 %v559, 127
    %v718 = vpop.permute.xlu0 %717
    %719 = vrot.lane.b32.xlu0 %v560, 127
    %v720 = vpop.permute.xlu0 %719
    %721 = vrot.lane.b32.xlu0 %v561, 127
    %v722 = vpop.permute.xlu0 %721
    %723 = vrot.lane.b32.xlu0 %v562, 127
    %v724 = vpop.permute.xlu0 %723
    %725 = vrot.lane.b32.xlu0 %v563, 127
    %v726 = vpop.permute.xlu0 %725
    %727 = vrot.lane.b32.xlu0 %v564, 127
    %v728 = vpop.permute.xlu0 %727
    %729 = vrot.lane.b32.xlu0 %v565, 127
    %v730 = vpop.permute.xlu0 %729
    %731 = vrot.lane.b32.xlu0 %v566, 127
    %v732 = vpop.permute.xlu0 %731
    %733 = vrot.lane.b32.xlu0 %v567, 127
    %v734 = vpop.permute.xlu0 %733
    %735 = vrot.lane.b32.xlu0 %v568, 127
    %v736 = vpop.permute.xlu0 %735
    %737 = vrot.lane.b32.xlu0 %v569, 127
    %v738 = vpop.permute.xlu0 %737
    %739 = vrot.lane.b32.xlu0 %v570, 127
    %v740 = vpop.permute.xlu0 %739
    %741 = vrot.lane.b32.xlu0 %v571, 127
    %v742 = vpop.permute.xlu0 %741
    %743 = vrot.lane.b32.xlu0 %v572, 127
    %v744 = vpop.permute.xlu0 %743
    %745 = vrot.lane.b32.xlu0 %v573, 127
    %v746 = vpop.permute.xlu0 %745
    %747 = vrot.lane.b32.xlu0 %v574, 127
    %v748 = vpop.permute.xlu0 %747
    %749 = vrot.lane.b32.xlu0 %v575, 127
    %v750 = vpop.permute.xlu0 %749
    %751 = vrot.lane.b32.xlu0 %v576, 127
    %v752 = vpop.permute.xlu0 %751
    %753 = vrot.lane.b32.xlu0 %v577, 127
    %v754 = vpop.permute.xlu0 %753
    %755 = vrot.lane.b32.xlu0 %v578, 127
    %v756 = vpop.permute.xlu0 %755
    %757 = vrot.lane.b32.xlu0 %v579, 127
    %v758 = vpop.permute.xlu0 %757
    %759 = vrot.lane.b32.xlu0 %v580, 127
    %v760 = vpop.permute.xlu0 %759
    %v821 = vadd.f32 %v461, %v642
    %v822 = vadd.f32 %v462, %v644
    %v823 = vadd.f32 %v463, %v646
    %v824 = vadd.f32 %v464, %v648
    %v825 = vadd.f32 %v465, %v650
    %v826 = vadd.f32 %v466, %v652
    %v827 = vadd.f32 %v467, %v654
    %v828 = vadd.f32 %v468, %v656
    %v829 = vadd.f32 %v469, %v658
    %v830 = vadd.f32 %v470, %v660
    %v831 = vadd.f32 %v471, %v662
    %v832 = vadd.f32 %v472, %v664
    %v833 = vadd.f32 %v473, %v666
    %v834 = vadd.f32 %v474, %v668
    %v835 = vadd.f32 %v475, %v670
    %v836 = vadd.f32 %v476, %v672
    %v837 = vadd.f32 %v477, %v674
    %v838 = vadd.f32 %v478, %v676
    %v839 = vadd.f32 %v479, %v678
    %v840 = vadd.f32 %v480, %v680
    %v841 = vadd.f32 %v481, %v682
    %v842 = vadd.f32 %v482, %v684
    %v843 = vadd.f32 %v483, %v686
    %v844 = vadd.f32 %v484, %v688
    %v845 = vadd.f32 %v485, %v690
    %v846 = vadd.f32 %v486, %v692
    %v847 = vadd.f32 %v487, %v694
    %v848 = vadd.f32 %v488, %v696
    %v849 = vadd.f32 %v489, %v698
    %v850 = vadd.f32 %v490, %v700
    %v851 = vadd.f32 %v491, %v702
    %v852 = vadd.f32 %v492, %v704
    %v853 = vadd.f32 %v493, %v706
    %v854 = vadd.f32 %v494, %v708
    %v855 = vadd.f32 %v495, %v710
    %v856 = vadd.f32 %v496, %v712
    %v857 = vadd.f32 %v497, %v714
    %v858 = vadd.f32 %v498, %v716
    %v859 = vadd.f32 %v499, %v718
    %v860 = vadd.f32 %v500, %v720
    %v861 = vadd.f32 %v501, %v722
    %v862 = vadd.f32 %v502, %v724
    %v863 = vadd.f32 %v503, %v726
    %v864 = vadd.f32 %v504, %v728
    %v865 = vadd.f32 %v505, %v730
    %v866 = vadd.f32 %v506, %v732
    %v867 = vadd.f32 %v507, %v734
    %v868 = vadd.f32 %v508, %v736
    %v869 = vadd.f32 %v509, %v738
    %v870 = vadd.f32 %v510, %v740
    %v871 = vadd.f32 %v511, %v742
    %v872 = vadd.f32 %v512, %v744
    %v873 = vadd.f32 %v513, %v746
    %v874 = vadd.f32 %v514, %v748
    %v875 = vadd.f32 %v515, %v750
    %v876 = vadd.f32 %v516, %v752
    %v877 = vadd.f32 %v517, %v754
    %v878 = vadd.f32 %v518, %v756
    %v879 = vadd.f32 %v519, %v758
    %v880 = vadd.f32 %v520, %v760
    %v881 = vmul.f32 %v401, 0.036000773
    %v882 = vmul.f32 %v402, 0.036000773
    %v883 = vmul.f32 %v403, 0.036000773
    %v884 = vmul.f32 %v404, 0.036000773
    %v885 = vmul.f32 %v405, 0.036000773
    %v886 = vmul.f32 %v406, 0.036000773
    %v887 = vmul.f32 %v407, 0.036000773
    %v888 = vmul.f32 %v408, 0.036000773
    %v889 = vmul.f32 %v409, 0.036000773
    %v890 = vmul.f32 %v410, 0.036000773
    %v891 = vmul.f32 %v411, 0.036000773
    %v892 = vmul.f32 %v412, 0.036000773
    %v893 = vmul.f32 %v413, 0.036000773
    %v894 = vmul.f32 %v414, 0.036000773
    %v895 = vmul.f32 %v415, 0.036000773
    %v896 = vmul.f32 %v416, 0.036000773
    %v897 = vmul.f32 %v417, 0.036000773
    %v898 = vmul.f32 %v418, 0.036000773
    %v899 = vmul.f32 %v419, 0.036000773
    %v900 = vmul.f32 %v420, 0.036000773
    %v901 = vmul.f32 %v421, 0.036000773
    %v902 = vmul.f32 %v422, 0.036000773
    %v903 = vmul.f32 %v423, 0.036000773
    %v904 = vmul.f32 %v424, 0.036000773
    %v905 = vmul.f32 %v425, 0.036000773
    %v906 = vmul.f32 %v426, 0.036000773
    %v907 = vmul.f32 %v427, 0.036000773
    %v908 = vmul.f32 %v428, 0.036000773
    %v909 = vmul.f32 %v429, 0.036000773
    %v910 = vmul.f32 %v430, 0.036000773
    %v911 = vmul.f32 %v431, 0.036000773
    %v912 = vmul.f32 %v432, 0.036000773
    %v913 = vmul.f32 %v433, 0.036000773
    %v914 = vmul.f32 %v434, 0.036000773
    %v915 = vmul.f32 %v435, 0.036000773
    %v916 = vmul.f32 %v436, 0.036000773
    %v917 = vmul.f32 %v437, 0.036000773
    %v918 = vmul.f32 %v438, 0.036000773
    %v919 = vmul.f32 %v439, 0.036000773
    %v920 = vmul.f32 %v440, 0.036000773
    %v921 = vmul.f32 %v441, 0.036000773
    %v922 = vmul.f32 %v442, 0.036000773
    %v923 = vmul.f32 %v443, 0.036000773
    %v924 = vmul.f32 %v444, 0.036000773
    %v925 = vmul.f32 %v445, 0.036000773
    %v926 = vmul.f32 %v446, 0.036000773
    %v927 = vmul.f32 %v447, 0.036000773
    %v928 = vmul.f32 %v448, 0.036000773
    %v929 = vmul.f32 %v449, 0.036000773
    %v930 = vmul.f32 %v450, 0.036000773
    %v931 = vmul.f32 %v451, 0.036000773
    %v932 = vmul.f32 %v452, 0.036000773
    %v933 = vmul.f32 %v453, 0.036000773
    %v934 = vmul.f32 %v454, 0.036000773
    %v935 = vmul.f32 %v455, 0.036000773
    %v936 = vmul.f32 %v456, 0.036000773
    %v937 = vmul.f32 %v457, 0.036000773
    %v938 = vmul.f32 %v458, 0.036000773
    %v939 = vmul.f32 %v459, 0.036000773
    %v940 = vmul.f32 %v460, 0.036000773
    %1001 = vrot.lane.b32.xlu0 %v881, 126
    %v1002 = vpop.permute.xlu0 %1001
    %1003 = vrot.lane.b32.xlu0 %v882, 126
    %v1004 = vpop.permute.xlu0 %1003
    %1005 = vrot.lane.b32.xlu0 %v883, 126
    %v1006 = vpop.permute.xlu0 %1005
    %1007 = vrot.lane.b32.xlu0 %v884, 126
    %v1008 = vpop.permute.xlu0 %1007
    %1009 = vrot.lane.b32.xlu0 %v885, 126
    %v1010 = vpop.permute.xlu0 %1009
    %1011 = vrot.lane.b32.xlu0 %v886, 126
    %v1012 = vpop.permute.xlu0 %1011
    %1013 = vrot.lane.b32.xlu0 %v887, 126
    %v1014 = vpop.permute.xlu0 %1013
    %1015 = vrot.lane.b32.xlu0 %v888, 126
    %v1016 = vpop.permute.xlu0 %1015
    %1017 = vrot.lane.b32.xlu0 %v889, 126
    %v1018 = vpop.permute.xlu0 %1017
    %1019 = vrot.lane.b32.xlu0 %v890, 126
    %v1020 = vpop.permute.xlu0 %1019
    %1021 = vrot.lane.b32.xlu0 %v891, 126
    %v1022 = vpop.permute.xlu0 %1021
    %1023 = vrot.lane.b32.xlu0 %v892, 126
    %v1024 = vpop.permute.xlu0 %1023
    %1025 = vrot.lane.b32.xlu0 %v893, 126
    %v1026 = vpop.permute.xlu0 %1025
    %1027 = vrot.lane.b32.xlu0 %v894, 126
    %v1028 = vpop.permute.xlu0 %1027
    %1029 = vrot.lane.b32.xlu0 %v895, 126
    %v1030 = vpop.permute.xlu0 %1029
    %1031 = vrot.lane.b32.xlu0 %v896, 126
    %v1032 = vpop.permute.xlu0 %1031
    %1033 = vrot.lane.b32.xlu0 %v897, 126
    %v1034 = vpop.permute.xlu0 %1033
    %1035 = vrot.lane.b32.xlu0 %v898, 126
    %v1036 = vpop.permute.xlu0 %1035
    %1037 = vrot.lane.b32.xlu0 %v899, 126
    %v1038 = vpop.permute.xlu0 %1037
    %1039 = vrot.lane.b32.xlu0 %v900, 126
    %v1040 = vpop.permute.xlu0 %1039
    %1041 = vrot.lane.b32.xlu0 %v901, 126
    %v1042 = vpop.permute.xlu0 %1041
    %1043 = vrot.lane.b32.xlu0 %v902, 126
    %v1044 = vpop.permute.xlu0 %1043
    %1045 = vrot.lane.b32.xlu0 %v903, 126
    %v1046 = vpop.permute.xlu0 %1045
    %1047 = vrot.lane.b32.xlu0 %v904, 126
    %v1048 = vpop.permute.xlu0 %1047
    %1049 = vrot.lane.b32.xlu0 %v905, 126
    %v1050 = vpop.permute.xlu0 %1049
    %1051 = vrot.lane.b32.xlu0 %v906, 126
    %v1052 = vpop.permute.xlu0 %1051
    %1053 = vrot.lane.b32.xlu0 %v907, 126
    %v1054 = vpop.permute.xlu0 %1053
    %1055 = vrot.lane.b32.xlu0 %v908, 126
    %v1056 = vpop.permute.xlu0 %1055
    %1057 = vrot.lane.b32.xlu0 %v909, 126
    %v1058 = vpop.permute.xlu0 %1057
    %1059 = vrot.lane.b32.xlu0 %v910, 126
    %v1060 = vpop.permute.xlu0 %1059
    %1061 = vrot.lane.b32.xlu0 %v911, 126
    %v1062 = vpop.permute.xlu0 %1061
    %1063 = vrot.lane.b32.xlu0 %v912, 126
    %v1064 = vpop.permute.xlu0 %1063
    %1065 = vrot.lane.b32.xlu0 %v913, 126
    %v1066 = vpop.permute.xlu0 %1065
    %1067 = vrot.lane.b32.xlu0 %v914, 126
    %v1068 = vpop.permute.xlu0 %1067
    %1069 = vrot.lane.b32.xlu0 %v915, 126
    %v1070 = vpop.permute.xlu0 %1069
    %1071 = vrot.lane.b32.xlu0 %v916, 126
    %v1072 = vpop.permute.xlu0 %1071
    %1073 = vrot.lane.b32.xlu0 %v917, 126
    %v1074 = vpop.permute.xlu0 %1073
    %1075 = vrot.lane.b32.xlu0 %v918, 126
    %v1076 = vpop.permute.xlu0 %1075
    %1077 = vrot.lane.b32.xlu0 %v919, 126
    %v1078 = vpop.permute.xlu0 %1077
    %1079 = vrot.lane.b32.xlu0 %v920, 126
    %v1080 = vpop.permute.xlu0 %1079
    %1081 = vrot.lane.b32.xlu0 %v921, 126
    %v1082 = vpop.permute.xlu0 %1081
    %1083 = vrot.lane.b32.xlu0 %v922, 126
    %v1084 = vpop.permute.xlu0 %1083
    %1085 = vrot.lane.b32.xlu0 %v923, 126
    %v1086 = vpop.permute.xlu0 %1085
    %1087 = vrot.lane.b32.xlu0 %v924, 126
    %v1088 = vpop.permute.xlu0 %1087
    %1089 = vrot.lane.b32.xlu0 %v925, 126
    %v1090 = vpop.permute.xlu0 %1089
    %1091 = vrot.lane.b32.xlu0 %v926, 126
    %v1092 = vpop.permute.xlu0 %1091
    %1093 = vrot.lane.b32.xlu0 %v927, 126
    %v1094 = vpop.permute.xlu0 %1093
    %1095 = vrot.lane.b32.xlu0 %v928, 126
    %v1096 = vpop.permute.xlu0 %1095
    %1097 = vrot.lane.b32.xlu0 %v929, 126
    %v1098 = vpop.permute.xlu0 %1097
    %1099 = vrot.lane.b32.xlu0 %v930, 126
    %v1100 = vpop.permute.xlu0 %1099
    %1101 = vrot.lane.b32.xlu0 %v931, 126
    %v1102 = vpop.permute.xlu0 %1101
    %1103 = vrot.lane.b32.xlu0 %v932, 126
    %v1104 = vpop.permute.xlu0 %1103
    %1105 = vrot.lane.b32.xlu0 %v933, 126
    %v1106 = vpop.permute.xlu0 %1105
    %1107 = vrot.lane.b32.xlu0 %v934, 126
    %v1108 = vpop.permute.xlu0 %1107
    %1109 = vrot.lane.b32.xlu0 %v935, 126
    %v1110 = vpop.permute.xlu0 %1109
    %1111 = vrot.lane.b32.xlu0 %v936, 126
    %v1112 = vpop.permute.xlu0 %1111
    %1113 = vrot.lane.b32.xlu0 %v937, 126
    %v1114 = vpop.permute.xlu0 %1113
    %1115 = vrot.lane.b32.xlu0 %v938, 126
    %v1116 = vpop.permute.xlu0 %1115
    %1117 = vrot.lane.b32.xlu0 %v939, 126
    %v1118 = vpop.permute.xlu0 %1117
    %1119 = vrot.lane.b32.xlu0 %v940, 126
    %v1120 = vpop.permute.xlu0 %1119
    %v1181 = vadd.f32 %v821, %v1002
    %v1182 = vadd.f32 %v822, %v1004
    %v1183 = vadd.f32 %v823, %v1006
    %v1184 = vadd.f32 %v824, %v1008
    %v1185 = vadd.f32 %v825, %v1010
    %v1186 = vadd.f32 %v826, %v1012
    %v1187 = vadd.f32 %v827, %v1014
    %v1188 = vadd.f32 %v828, %v1016
    %v1189 = vadd.f32 %v829, %v1018
    %v1190 = vadd.f32 %v830, %v1020
    %v1191 = vadd.f32 %v831, %v1022
    %v1192 = vadd.f32 %v832, %v1024
    %v1193 = vadd.f32 %v833, %v1026
    %v1194 = vadd.f32 %v834, %v1028
    %v1195 = vadd.f32 %v835, %v1030
    %v1196 = vadd.f32 %v836, %v1032
    %v1197 = vadd.f32 %v837, %v1034
    %v1198 = vadd.f32 %v838, %v1036
    %v1199 = vadd.f32 %v839, %v1038
    %v1200 = vadd.f32 %v840, %v1040
    %v1201 = vadd.f32 %v841, %v1042
    %v1202 = vadd.f32 %v842, %v1044
    %v1203 = vadd.f32 %v843, %v1046
    %v1204 = vadd.f32 %v844, %v1048
    %v1205 = vadd.f32 %v845, %v1050
    %v1206 = vadd.f32 %v846, %v1052
    %v1207 = vadd.f32 %v847, %v1054
    %v1208 = vadd.f32 %v848, %v1056
    %v1209 = vadd.f32 %v849, %v1058
    %v1210 = vadd.f32 %v850, %v1060
    %v1211 = vadd.f32 %v851, %v1062
    %v1212 = vadd.f32 %v852, %v1064
    %v1213 = vadd.f32 %v853, %v1066
    %v1214 = vadd.f32 %v854, %v1068
    %v1215 = vadd.f32 %v855, %v1070
    %v1216 = vadd.f32 %v856, %v1072
    %v1217 = vadd.f32 %v857, %v1074
    %v1218 = vadd.f32 %v858, %v1076
    %v1219 = vadd.f32 %v859, %v1078
    %v1220 = vadd.f32 %v860, %v1080
    %v1221 = vadd.f32 %v861, %v1082
    %v1222 = vadd.f32 %v862, %v1084
    %v1223 = vadd.f32 %v863, %v1086
    %v1224 = vadd.f32 %v864, %v1088
    %v1225 = vadd.f32 %v865, %v1090
    %v1226 = vadd.f32 %v866, %v1092
    %v1227 = vadd.f32 %v867, %v1094
    %v1228 = vadd.f32 %v868, %v1096
    %v1229 = vadd.f32 %v869, %v1098
    %v1230 = vadd.f32 %v870, %v1100
    %v1231 = vadd.f32 %v871, %v1102
    %v1232 = vadd.f32 %v872, %v1104
    %v1233 = vadd.f32 %v873, %v1106
    %v1234 = vadd.f32 %v874, %v1108
    %v1235 = vadd.f32 %v875, %v1110
    %v1236 = vadd.f32 %v876, %v1112
    %v1237 = vadd.f32 %v877, %v1114
    %v1238 = vadd.f32 %v878, %v1116
    %v1239 = vadd.f32 %v879, %v1118
    %v1240 = vadd.f32 %v880, %v1120
    %v1241 = vmul.f32 %v401, 0.10936069
    %v1242 = vmul.f32 %v402, 0.10936069
    %v1243 = vmul.f32 %v403, 0.10936069
    %v1244 = vmul.f32 %v404, 0.10936069
    %v1245 = vmul.f32 %v405, 0.10936069
    %v1246 = vmul.f32 %v406, 0.10936069
    %v1247 = vmul.f32 %v407, 0.10936069
    %v1248 = vmul.f32 %v408, 0.10936069
    %v1249 = vmul.f32 %v409, 0.10936069
    %v1250 = vmul.f32 %v410, 0.10936069
    %v1251 = vmul.f32 %v411, 0.10936069
    %v1252 = vmul.f32 %v412, 0.10936069
    %v1253 = vmul.f32 %v413, 0.10936069
    %v1254 = vmul.f32 %v414, 0.10936069
    %v1255 = vmul.f32 %v415, 0.10936069
    %v1256 = vmul.f32 %v416, 0.10936069
    %v1257 = vmul.f32 %v417, 0.10936069
    %v1258 = vmul.f32 %v418, 0.10936069
    %v1259 = vmul.f32 %v419, 0.10936069
    %v1260 = vmul.f32 %v420, 0.10936069
    %v1261 = vmul.f32 %v421, 0.10936069
    %v1262 = vmul.f32 %v422, 0.10936069
    %v1263 = vmul.f32 %v423, 0.10936069
    %v1264 = vmul.f32 %v424, 0.10936069
    %v1265 = vmul.f32 %v425, 0.10936069
    %v1266 = vmul.f32 %v426, 0.10936069
    %v1267 = vmul.f32 %v427, 0.10936069
    %v1268 = vmul.f32 %v428, 0.10936069
    %v1269 = vmul.f32 %v429, 0.10936069
    %v1270 = vmul.f32 %v430, 0.10936069
    %v1271 = vmul.f32 %v431, 0.10936069
    %v1272 = vmul.f32 %v432, 0.10936069
    %v1273 = vmul.f32 %v433, 0.10936069
    %v1274 = vmul.f32 %v434, 0.10936069
    %v1275 = vmul.f32 %v435, 0.10936069
    %v1276 = vmul.f32 %v436, 0.10936069
    %v1277 = vmul.f32 %v437, 0.10936069
    %v1278 = vmul.f32 %v438, 0.10936069
    %v1279 = vmul.f32 %v439, 0.10936069
    %v1280 = vmul.f32 %v440, 0.10936069
    %v1281 = vmul.f32 %v441, 0.10936069
    %v1282 = vmul.f32 %v442, 0.10936069
    %v1283 = vmul.f32 %v443, 0.10936069
    %v1284 = vmul.f32 %v444, 0.10936069
    %v1285 = vmul.f32 %v445, 0.10936069
    %v1286 = vmul.f32 %v446, 0.10936069
    %v1287 = vmul.f32 %v447, 0.10936069
    %v1288 = vmul.f32 %v448, 0.10936069
    %v1289 = vmul.f32 %v449, 0.10936069
    %v1290 = vmul.f32 %v450, 0.10936069
    %v1291 = vmul.f32 %v451, 0.10936069
    %v1292 = vmul.f32 %v452, 0.10936069
    %v1293 = vmul.f32 %v453, 0.10936069
    %v1294 = vmul.f32 %v454, 0.10936069
    %v1295 = vmul.f32 %v455, 0.10936069
    %v1296 = vmul.f32 %v456, 0.10936069
    %v1297 = vmul.f32 %v457, 0.10936069
    %v1298 = vmul.f32 %v458, 0.10936069
    %v1299 = vmul.f32 %v459, 0.10936069
    %v1300 = vmul.f32 %v460, 0.10936069
    %1361 = vrot.lane.b32.xlu0 %v1241, 125
    %v1362 = vpop.permute.xlu0 %1361
    %1363 = vrot.lane.b32.xlu0 %v1242, 125
    %v1364 = vpop.permute.xlu0 %1363
    %1365 = vrot.lane.b32.xlu0 %v1243, 125
    %v1366 = vpop.permute.xlu0 %1365
    %1367 = vrot.lane.b32.xlu0 %v1244, 125
    %v1368 = vpop.permute.xlu0 %1367
    %1369 = vrot.lane.b32.xlu0 %v1245, 125
    %v1370 = vpop.permute.xlu0 %1369
    %1371 = vrot.lane.b32.xlu0 %v1246, 125
    %v1372 = vpop.permute.xlu0 %1371
    %1373 = vrot.lane.b32.xlu0 %v1247, 125
    %v1374 = vpop.permute.xlu0 %1373
    %1375 = vrot.lane.b32.xlu0 %v1248, 125
    %v1376 = vpop.permute.xlu0 %1375
    %1377 = vrot.lane.b32.xlu0 %v1249, 125
    %v1378 = vpop.permute.xlu0 %1377
    %1379 = vrot.lane.b32.xlu0 %v1250, 125
    %v1380 = vpop.permute.xlu0 %1379
    %1381 = vrot.lane.b32.xlu0 %v1251, 125
    %v1382 = vpop.permute.xlu0 %1381
    %1383 = vrot.lane.b32.xlu0 %v1252, 125
    %v1384 = vpop.permute.xlu0 %1383
    %1385 = vrot.lane.b32.xlu0 %v1253, 125
    %v1386 = vpop.permute.xlu0 %1385
    %1387 = vrot.lane.b32.xlu0 %v1254, 125
    %v1388 = vpop.permute.xlu0 %1387
    %1389 = vrot.lane.b32.xlu0 %v1255, 125
    %v1390 = vpop.permute.xlu0 %1389
    %1391 = vrot.lane.b32.xlu0 %v1256, 125
    %v1392 = vpop.permute.xlu0 %1391
    %1393 = vrot.lane.b32.xlu0 %v1257, 125
    %v1394 = vpop.permute.xlu0 %1393
    %1395 = vrot.lane.b32.xlu0 %v1258, 125
    %v1396 = vpop.permute.xlu0 %1395
    %1397 = vrot.lane.b32.xlu0 %v1259, 125
    %v1398 = vpop.permute.xlu0 %1397
    %1399 = vrot.lane.b32.xlu0 %v1260, 125
    %v1400 = vpop.permute.xlu0 %1399
    %1401 = vrot.lane.b32.xlu0 %v1261, 125
    %v1402 = vpop.permute.xlu0 %1401
    %1403 = vrot.lane.b32.xlu0 %v1262, 125
    %v1404 = vpop.permute.xlu0 %1403
    %1405 = vrot.lane.b32.xlu0 %v1263, 125
    %v1406 = vpop.permute.xlu0 %1405
    %1407 = vrot.lane.b32.xlu0 %v1264, 125
    %v1408 = vpop.permute.xlu0 %1407
    %1409 = vrot.lane.b32.xlu0 %v1265, 125
    %v1410 = vpop.permute.xlu0 %1409
    %1411 = vrot.lane.b32.xlu0 %v1266, 125
    %v1412 = vpop.permute.xlu0 %1411
    %1413 = vrot.lane.b32.xlu0 %v1267, 125
    %v1414 = vpop.permute.xlu0 %1413
    %1415 = vrot.lane.b32.xlu0 %v1268, 125
    %v1416 = vpop.permute.xlu0 %1415
    %1417 = vrot.lane.b32.xlu0 %v1269, 125
    %v1418 = vpop.permute.xlu0 %1417
    %1419 = vrot.lane.b32.xlu0 %v1270, 125
    %v1420 = vpop.permute.xlu0 %1419
    %1421 = vrot.lane.b32.xlu0 %v1271, 125
    %v1422 = vpop.permute.xlu0 %1421
    %1423 = vrot.lane.b32.xlu0 %v1272, 125
    %v1424 = vpop.permute.xlu0 %1423
    %1425 = vrot.lane.b32.xlu0 %v1273, 125
    %v1426 = vpop.permute.xlu0 %1425
    %1427 = vrot.lane.b32.xlu0 %v1274, 125
    %v1428 = vpop.permute.xlu0 %1427
    %1429 = vrot.lane.b32.xlu0 %v1275, 125
    %v1430 = vpop.permute.xlu0 %1429
    %1431 = vrot.lane.b32.xlu0 %v1276, 125
    %v1432 = vpop.permute.xlu0 %1431
    %1433 = vrot.lane.b32.xlu0 %v1277, 125
    %v1434 = vpop.permute.xlu0 %1433
    %1435 = vrot.lane.b32.xlu0 %v1278, 125
    %v1436 = vpop.permute.xlu0 %1435
    %1437 = vrot.lane.b32.xlu0 %v1279, 125
    %v1438 = vpop.permute.xlu0 %1437
    %1439 = vrot.lane.b32.xlu0 %v1280, 125
    %v1440 = vpop.permute.xlu0 %1439
    %1441 = vrot.lane.b32.xlu0 %v1281, 125
    %v1442 = vpop.permute.xlu0 %1441
    %1443 = vrot.lane.b32.xlu0 %v1282, 125
    %v1444 = vpop.permute.xlu0 %1443
    %1445 = vrot.lane.b32.xlu0 %v1283, 125
    %v1446 = vpop.permute.xlu0 %1445
    %1447 = vrot.lane.b32.xlu0 %v1284, 125
    %v1448 = vpop.permute.xlu0 %1447
    %1449 = vrot.lane.b32.xlu0 %v1285, 125
    %v1450 = vpop.permute.xlu0 %1449
    %1451 = vrot.lane.b32.xlu0 %v1286, 125
    %v1452 = vpop.permute.xlu0 %1451
    %1453 = vrot.lane.b32.xlu0 %v1287, 125
    %v1454 = vpop.permute.xlu0 %1453
    %1455 = vrot.lane.b32.xlu0 %v1288, 125
    %v1456 = vpop.permute.xlu0 %1455
    %1457 = vrot.lane.b32.xlu0 %v1289, 125
    %v1458 = vpop.permute.xlu0 %1457
    %1459 = vrot.lane.b32.xlu0 %v1290, 125
    %v1460 = vpop.permute.xlu0 %1459
    %1461 = vrot.lane.b32.xlu0 %v1291, 125
    %v1462 = vpop.permute.xlu0 %1461
    %1463 = vrot.lane.b32.xlu0 %v1292, 125
    %v1464 = vpop.permute.xlu0 %1463
    %1465 = vrot.lane.b32.xlu0 %v1293, 125
    %v1466 = vpop.permute.xlu0 %1465
    %1467 = vrot.lane.b32.xlu0 %v1294, 125
    %v1468 = vpop.permute.xlu0 %1467
    %1469 = vrot.lane.b32.xlu0 %v1295, 125
    %v1470 = vpop.permute.xlu0 %1469
    %1471 = vrot.lane.b32.xlu0 %v1296, 125
    %v1472 = vpop.permute.xlu0 %1471
    %1473 = vrot.lane.b32.xlu0 %v1297, 125
    %v1474 = vpop.permute.xlu0 %1473
    %1475 = vrot.lane.b32.xlu0 %v1298, 125
    %v1476 = vpop.permute.xlu0 %1475
    %1477 = vrot.lane.b32.xlu0 %v1299, 125
    %v1478 = vpop.permute.xlu0 %1477
    %1479 = vrot.lane.b32.xlu0 %v1300, 125
    %v1480 = vpop.permute.xlu0 %1479
    %v1541 = vadd.f32 %v1181, %v1362
    %v1542 = vadd.f32 %v1182, %v1364
    %v1543 = vadd.f32 %v1183, %v1366
    %v1544 = vadd.f32 %v1184, %v1368
    %v1545 = vadd.f32 %v1185, %v1370
    %v1546 = vadd.f32 %v1186, %v1372
    %v1547 = vadd.f32 %v1187, %v1374
    %v1548 = vadd.f32 %v1188, %v1376
    %v1549 = vadd.f32 %v1189, %v1378
    %v1550 = vadd.f32 %v1190, %v1380
    %v1551 = vadd.f32 %v1191, %v1382
    %v1552 = vadd.f32 %v1192, %v1384
    %v1553 = vadd.f32 %v1193, %v1386
    %v1554 = vadd.f32 %v1194, %v1388
    %v1555 = vadd.f32 %v1195, %v1390
    %v1556 = vadd.f32 %v1196, %v1392
    %v1557 = vadd.f32 %v1197, %v1394
    %v1558 = vadd.f32 %v1198, %v1396
    %v1559 = vadd.f32 %v1199, %v1398
    %v1560 = vadd.f32 %v1200, %v1400
    %v1561 = vadd.f32 %v1201, %v1402
    %v1562 = vadd.f32 %v1202, %v1404
    %v1563 = vadd.f32 %v1203, %v1406
    %v1564 = vadd.f32 %v1204, %v1408
    %v1565 = vadd.f32 %v1205, %v1410
    %v1566 = vadd.f32 %v1206, %v1412
    %v1567 = vadd.f32 %v1207, %v1414
    %v1568 = vadd.f32 %v1208, %v1416
    %v1569 = vadd.f32 %v1209, %v1418
    %v1570 = vadd.f32 %v1210, %v1420
    %v1571 = vadd.f32 %v1211, %v1422
    %v1572 = vadd.f32 %v1212, %v1424
    %v1573 = vadd.f32 %v1213, %v1426
    %v1574 = vadd.f32 %v1214, %v1428
    %v1575 = vadd.f32 %v1215, %v1430
    %v1576 = vadd.f32 %v1216, %v1432
    %v1577 = vadd.f32 %v1217, %v1434
    %v1578 = vadd.f32 %v1218, %v1436
    %v1579 = vadd.f32 %v1219, %v1438
    %v1580 = vadd.f32 %v1220, %v1440
    %v1581 = vadd.f32 %v1221, %v1442
    %v1582 = vadd.f32 %v1222, %v1444
    %v1583 = vadd.f32 %v1223, %v1446
    %v1584 = vadd.f32 %v1224, %v1448
    %v1585 = vadd.f32 %v1225, %v1450
    %v1586 = vadd.f32 %v1226, %v1452
    %v1587 = vadd.f32 %v1227, %v1454
    %v1588 = vadd.f32 %v1228, %v1456
    %v1589 = vadd.f32 %v1229, %v1458
    %v1590 = vadd.f32 %v1230, %v1460
    %v1591 = vadd.f32 %v1231, %v1462
    %v1592 = vadd.f32 %v1232, %v1464
    %v1593 = vadd.f32 %v1233, %v1466
    %v1594 = vadd.f32 %v1234, %v1468
    %v1595 = vadd.f32 %v1235, %v1470
    %v1596 = vadd.f32 %v1236, %v1472
    %v1597 = vadd.f32 %v1237, %v1474
    %v1598 = vadd.f32 %v1238, %v1476
    %v1599 = vadd.f32 %v1239, %v1478
    %v1600 = vadd.f32 %v1240, %v1480
    %v1601 = vmul.f32 %v401, 0.21300554
    %v1602 = vmul.f32 %v402, 0.21300554
    %v1603 = vmul.f32 %v403, 0.21300554
    %v1604 = vmul.f32 %v404, 0.21300554
    %v1605 = vmul.f32 %v405, 0.21300554
    %v1606 = vmul.f32 %v406, 0.21300554
    %v1607 = vmul.f32 %v407, 0.21300554
    %v1608 = vmul.f32 %v408, 0.21300554
    %v1609 = vmul.f32 %v409, 0.21300554
    %v1610 = vmul.f32 %v410, 0.21300554
    %v1611 = vmul.f32 %v411, 0.21300554
    %v1612 = vmul.f32 %v412, 0.21300554
    %v1613 = vmul.f32 %v413, 0.21300554
    %v1614 = vmul.f32 %v414, 0.21300554
    %v1615 = vmul.f32 %v415, 0.21300554
    %v1616 = vmul.f32 %v416, 0.21300554
    %v1617 = vmul.f32 %v417, 0.21300554
    %v1618 = vmul.f32 %v418, 0.21300554
    %v1619 = vmul.f32 %v419, 0.21300554
    %v1620 = vmul.f32 %v420, 0.21300554
    %v1621 = vmul.f32 %v421, 0.21300554
    %v1622 = vmul.f32 %v422, 0.21300554
    %v1623 = vmul.f32 %v423, 0.21300554
    %v1624 = vmul.f32 %v424, 0.21300554
    %v1625 = vmul.f32 %v425, 0.21300554
    %v1626 = vmul.f32 %v426, 0.21300554
    %v1627 = vmul.f32 %v427, 0.21300554
    %v1628 = vmul.f32 %v428, 0.21300554
    %v1629 = vmul.f32 %v429, 0.21300554
    %v1630 = vmul.f32 %v430, 0.21300554
    %v1631 = vmul.f32 %v431, 0.21300554
    %v1632 = vmul.f32 %v432, 0.21300554
    %v1633 = vmul.f32 %v433, 0.21300554
    %v1634 = vmul.f32 %v434, 0.21300554
    %v1635 = vmul.f32 %v435, 0.21300554
    %v1636 = vmul.f32 %v436, 0.21300554
    %v1637 = vmul.f32 %v437, 0.21300554
    %v1638 = vmul.f32 %v438, 0.21300554
    %v1639 = vmul.f32 %v439, 0.21300554
    %v1640 = vmul.f32 %v440, 0.21300554
    %v1641 = vmul.f32 %v441, 0.21300554
    %v1642 = vmul.f32 %v442, 0.21300554
    %v1643 = vmul.f32 %v443, 0.21300554
    %v1644 = vmul.f32 %v444, 0.21300554
    %v1645 = vmul.f32 %v445, 0.21300554
    %v1646 = vmul.f32 %v446, 0.21300554
    %v1647 = vmul.f32 %v447, 0.21300554
    %v1648 = vmul.f32 %v448, 0.21300554
    %v1649 = vmul.f32 %v449, 0.21300554
    %v1650 = vmul.f32 %v450, 0.21300554
    %v1651 = vmul.f32 %v451, 0.21300554
    %v1652 = vmul.f32 %v452, 0.21300554
    %v1653 = vmul.f32 %v453, 0.21300554
    %v1654 = vmul.f32 %v454, 0.21300554
    %v1655 = vmul.f32 %v455, 0.21300554
    %v1656 = vmul.f32 %v456, 0.21300554
    %v1657 = vmul.f32 %v457, 0.21300554
    %v1658 = vmul.f32 %v458, 0.21300554
    %v1659 = vmul.f32 %v459, 0.21300554
    %v1660 = vmul.f32 %v460, 0.21300554
    %1721 = vrot.lane.b32.xlu0 %v1601, 124
    %v1722 = vpop.permute.xlu0 %1721
    %1723 = vrot.lane.b32.xlu0 %v1602, 124
    %v1724 = vpop.permute.xlu0 %1723
    %1725 = vrot.lane.b32.xlu0 %v1603, 124
    %v1726 = vpop.permute.xlu0 %1725
    %1727 = vrot.lane.b32.xlu0 %v1604, 124
    %v1728 = vpop.permute.xlu0 %1727
    %1729 = vrot.lane.b32.xlu0 %v1605, 124
    %v1730 = vpop.permute.xlu0 %1729
    %1731 = vrot.lane.b32.xlu0 %v1606, 124
    %v1732 = vpop.permute.xlu0 %1731
    %1733 = vrot.lane.b32.xlu0 %v1607, 124
    %v1734 = vpop.permute.xlu0 %1733
    %1735 = vrot.lane.b32.xlu0 %v1608, 124
    %v1736 = vpop.permute.xlu0 %1735
    %1737 = vrot.lane.b32.xlu0 %v1609, 124
    %v1738 = vpop.permute.xlu0 %1737
    %1739 = vrot.lane.b32.xlu0 %v1610, 124
    %v1740 = vpop.permute.xlu0 %1739
    %1741 = vrot.lane.b32.xlu0 %v1611, 124
    %v1742 = vpop.permute.xlu0 %1741
    %1743 = vrot.lane.b32.xlu0 %v1612, 124
    %v1744 = vpop.permute.xlu0 %1743
    %1745 = vrot.lane.b32.xlu0 %v1613, 124
    %v1746 = vpop.permute.xlu0 %1745
    %1747 = vrot.lane.b32.xlu0 %v1614, 124
    %v1748 = vpop.permute.xlu0 %1747
    %1749 = vrot.lane.b32.xlu0 %v1615, 124
    %v1750 = vpop.permute.xlu0 %1749
    %1751 = vrot.lane.b32.xlu0 %v1616, 124
    %v1752 = vpop.permute.xlu0 %1751
    %1753 = vrot.lane.b32.xlu0 %v1617, 124
    %v1754 = vpop.permute.xlu0 %1753
    %1755 = vrot.lane.b32.xlu0 %v1618, 124
    %v1756 = vpop.permute.xlu0 %1755
    %1757 = vrot.lane.b32.xlu0 %v1619, 124
    %v1758 = vpop.permute.xlu0 %1757
    %1759 = vrot.lane.b32.xlu0 %v1620, 124
    %v1760 = vpop.permute.xlu0 %1759
    %1761 = vrot.lane.b32.xlu0 %v1621, 124
    %v1762 = vpop.permute.xlu0 %1761
    %1763 = vrot.lane.b32.xlu0 %v1622, 124
    %v1764 = vpop.permute.xlu0 %1763
    %1765 = vrot.lane.b32.xlu0 %v1623, 124
    %v1766 = vpop.permute.xlu0 %1765
    %1767 = vrot.lane.b32.xlu0 %v1624, 124
    %v1768 = vpop.permute.xlu0 %1767
    %1769 = vrot.lane.b32.xlu0 %v1625, 124
    %v1770 = vpop.permute.xlu0 %1769
    %1771 = vrot.lane.b32.xlu0 %v1626, 124
    %v1772 = vpop.permute.xlu0 %1771
    %1773 = vrot.lane.b32.xlu0 %v1627, 124
    %v1774 = vpop.permute.xlu0 %1773
    %1775 = vrot.lane.b32.xlu0 %v1628, 124
    %v1776 = vpop.permute.xlu0 %1775
    %1777 = vrot.lane.b32.xlu0 %v1629, 124
    %v1778 = vpop.permute.xlu0 %1777
    %1779 = vrot.lane.b32.xlu0 %v1630, 124
    %v1780 = vpop.permute.xlu0 %1779
    %1781 = vrot.lane.b32.xlu0 %v1631, 124
    %v1782 = vpop.permute.xlu0 %1781
    %1783 = vrot.lane.b32.xlu0 %v1632, 124
    %v1784 = vpop.permute.xlu0 %1783
    %1785 = vrot.lane.b32.xlu0 %v1633, 124
    %v1786 = vpop.permute.xlu0 %1785
    %1787 = vrot.lane.b32.xlu0 %v1634, 124
    %v1788 = vpop.permute.xlu0 %1787
    %1789 = vrot.lane.b32.xlu0 %v1635, 124
    %v1790 = vpop.permute.xlu0 %1789
    %1791 = vrot.lane.b32.xlu0 %v1636, 124
    %v1792 = vpop.permute.xlu0 %1791
    %1793 = vrot.lane.b32.xlu0 %v1637, 124
    %v1794 = vpop.permute.xlu0 %1793
    %1795 = vrot.lane.b32.xlu0 %v1638, 124
    %v1796 = vpop.permute.xlu0 %1795
    %1797 = vrot.lane.b32.xlu0 %v1639, 124
    %v1798 = vpop.permute.xlu0 %1797
    %1799 = vrot.lane.b32.xlu0 %v1640, 124
    %v1800 = vpop.permute.xlu0 %1799
    %1801 = vrot.lane.b32.xlu0 %v1641, 124
    %v1802 = vpop.permute.xlu0 %1801
    %1803 = vrot.lane.b32.xlu0 %v1642, 124
    %v1804 = vpop.permute.xlu0 %1803
    %1805 = vrot.lane.b32.xlu0 %v1643, 124
    %v1806 = vpop.permute.xlu0 %1805
    %1807 = vrot.lane.b32.xlu0 %v1644, 124
    %v1808 = vpop.permute.xlu0 %1807
    %1809 = vrot.lane.b32.xlu0 %v1645, 124
    %v1810 = vpop.permute.xlu0 %1809
    %1811 = vrot.lane.b32.xlu0 %v1646, 124
    %v1812 = vpop.permute.xlu0 %1811
    %1813 = vrot.lane.b32.xlu0 %v1647, 124
    %v1814 = vpop.permute.xlu0 %1813
    %1815 = vrot.lane.b32.xlu0 %v1648, 124
    %v1816 = vpop.permute.xlu0 %1815
    %1817 = vrot.lane.b32.xlu0 %v1649, 124
    %v1818 = vpop.permute.xlu0 %1817
    %1819 = vrot.lane.b32.xlu0 %v1650, 124
    %v1820 = vpop.permute.xlu0 %1819
    %1821 = vrot.lane.b32.xlu0 %v1651, 124
    %v1822 = vpop.permute.xlu0 %1821
    %1823 = vrot.lane.b32.xlu0 %v1652, 124
    %v1824 = vpop.permute.xlu0 %1823
    %1825 = vrot.lane.b32.xlu0 %v1653, 124
    %v1826 = vpop.permute.xlu0 %1825
    %1827 = vrot.lane.b32.xlu0 %v1654, 124
    %v1828 = vpop.permute.xlu0 %1827
    %1829 = vrot.lane.b32.xlu0 %v1655, 124
    %v1830 = vpop.permute.xlu0 %1829
    %1831 = vrot.lane.b32.xlu0 %v1656, 124
    %v1832 = vpop.permute.xlu0 %1831
    %1833 = vrot.lane.b32.xlu0 %v1657, 124
    %v1834 = vpop.permute.xlu0 %1833
    %1835 = vrot.lane.b32.xlu0 %v1658, 124
    %v1836 = vpop.permute.xlu0 %1835
    %1837 = vrot.lane.b32.xlu0 %v1659, 124
    %v1838 = vpop.permute.xlu0 %1837
    %1839 = vrot.lane.b32.xlu0 %v1660, 124
    %v1840 = vpop.permute.xlu0 %1839
    %v1901 = vadd.f32 %v1541, %v1722
    %v1902 = vadd.f32 %v1542, %v1724
    %v1903 = vadd.f32 %v1543, %v1726
    %v1904 = vadd.f32 %v1544, %v1728
    %v1905 = vadd.f32 %v1545, %v1730
    %v1906 = vadd.f32 %v1546, %v1732
    %v1907 = vadd.f32 %v1547, %v1734
    %v1908 = vadd.f32 %v1548, %v1736
    %v1909 = vadd.f32 %v1549, %v1738
    %v1910 = vadd.f32 %v1550, %v1740
    %v1911 = vadd.f32 %v1551, %v1742
    %v1912 = vadd.f32 %v1552, %v1744
    %v1913 = vadd.f32 %v1553, %v1746
    %v1914 = vadd.f32 %v1554, %v1748
    %v1915 = vadd.f32 %v1555, %v1750
    %v1916 = vadd.f32 %v1556, %v1752
    %v1917 = vadd.f32 %v1557, %v1754
    %v1918 = vadd.f32 %v1558, %v1756
    %v1919 = vadd.f32 %v1559, %v1758
    %v1920 = vadd.f32 %v1560, %v1760
    %v1921 = vadd.f32 %v1561, %v1762
    %v1922 = vadd.f32 %v1562, %v1764
    %v1923 = vadd.f32 %v1563, %v1766
    %v1924 = vadd.f32 %v1564, %v1768
    %v1925 = vadd.f32 %v1565, %v1770
    %v1926 = vadd.f32 %v1566, %v1772
    %v1927 = vadd.f32 %v1567, %v1774
    %v1928 = vadd.f32 %v1568, %v1776
    %v1929 = vadd.f32 %v1569, %v1778
    %v1930 = vadd.f32 %v1570, %v1780
    %v1931 = vadd.f32 %v1571, %v1782
    %v1932 = vadd.f32 %v1572, %v1784
    %v1933 = vadd.f32 %v1573, %v1786
    %v1934 = vadd.f32 %v1574, %v1788
    %v1935 = vadd.f32 %v1575, %v1790
    %v1936 = vadd.f32 %v1576, %v1792
    %v1937 = vadd.f32 %v1577, %v1794
    %v1938 = vadd.f32 %v1578, %v1796
    %v1939 = vadd.f32 %v1579, %v1798
    %v1940 = vadd.f32 %v1580, %v1800
    %v1941 = vadd.f32 %v1581, %v1802
    %v1942 = vadd.f32 %v1582, %v1804
    %v1943 = vadd.f32 %v1583, %v1806
    %v1944 = vadd.f32 %v1584, %v1808
    %v1945 = vadd.f32 %v1585, %v1810
    %v1946 = vadd.f32 %v1586, %v1812
    %v1947 = vadd.f32 %v1587, %v1814
    %v1948 = vadd.f32 %v1588, %v1816
    %v1949 = vadd.f32 %v1589, %v1818
    %v1950 = vadd.f32 %v1590, %v1820
    %v1951 = vadd.f32 %v1591, %v1822
    %v1952 = vadd.f32 %v1592, %v1824
    %v1953 = vadd.f32 %v1593, %v1826
    %v1954 = vadd.f32 %v1594, %v1828
    %v1955 = vadd.f32 %v1595, %v1830
    %v1956 = vadd.f32 %v1596, %v1832
    %v1957 = vadd.f32 %v1597, %v1834
    %v1958 = vadd.f32 %v1598, %v1836
    %v1959 = vadd.f32 %v1599, %v1838
    %v1960 = vadd.f32 %v1600, %v1840
    %v1961 = vmul.f32 %v401, 0.26601171
    %v1962 = vmul.f32 %v402, 0.26601171
    %v1963 = vmul.f32 %v403, 0.26601171
    %v1964 = vmul.f32 %v404, 0.26601171
    %v1965 = vmul.f32 %v405, 0.26601171
    %v1966 = vmul.f32 %v406, 0.26601171
    %v1967 = vmul.f32 %v407, 0.26601171
    %v1968 = vmul.f32 %v408, 0.26601171
    %v1969 = vmul.f32 %v409, 0.26601171
    %v1970 = vmul.f32 %v410, 0.26601171
    %v1971 = vmul.f32 %v411, 0.26601171
    %v1972 = vmul.f32 %v412, 0.26601171
    %v1973 = vmul.f32 %v413, 0.26601171
    %v1974 = vmul.f32 %v414, 0.26601171
    %v1975 = vmul.f32 %v415, 0.26601171
    %v1976 = vmul.f32 %v416, 0.26601171
    %v1977 = vmul.f32 %v417, 0.26601171
    %v1978 = vmul.f32 %v418, 0.26601171
    %v1979 = vmul.f32 %v419, 0.26601171
    %v1980 = vmul.f32 %v420, 0.26601171
    %v1981 = vmul.f32 %v421, 0.26601171
    %v1982 = vmul.f32 %v422, 0.26601171
    %v1983 = vmul.f32 %v423, 0.26601171
    %v1984 = vmul.f32 %v424, 0.26601171
    %v1985 = vmul.f32 %v425, 0.26601171
    %v1986 = vmul.f32 %v426, 0.26601171
    %v1987 = vmul.f32 %v427, 0.26601171
    %v1988 = vmul.f32 %v428, 0.26601171
    %v1989 = vmul.f32 %v429, 0.26601171
    %v1990 = vmul.f32 %v430, 0.26601171
    %v1991 = vmul.f32 %v431, 0.26601171
    %v1992 = vmul.f32 %v432, 0.26601171
    %v1993 = vmul.f32 %v433, 0.26601171
    %v1994 = vmul.f32 %v434, 0.26601171
    %v1995 = vmul.f32 %v435, 0.26601171
    %v1996 = vmul.f32 %v436, 0.26601171
    %v1997 = vmul.f32 %v437, 0.26601171
    %v1998 = vmul.f32 %v438, 0.26601171
    %v1999 = vmul.f32 %v439, 0.26601171
    %v2000 = vmul.f32 %v440, 0.26601171
    %v2001 = vmul.f32 %v441, 0.26601171
    %v2002 = vmul.f32 %v442, 0.26601171
    %v2003 = vmul.f32 %v443, 0.26601171
    %v2004 = vmul.f32 %v444, 0.26601171
    %v2005 = vmul.f32 %v445, 0.26601171
    %v2006 = vmul.f32 %v446, 0.26601171
    %v2007 = vmul.f32 %v447, 0.26601171
    %v2008 = vmul.f32 %v448, 0.26601171
    %v2009 = vmul.f32 %v449, 0.26601171
    %v2010 = vmul.f32 %v450, 0.26601171
    %v2011 = vmul.f32 %v451, 0.26601171
    %v2012 = vmul.f32 %v452, 0.26601171
    %v2013 = vmul.f32 %v453, 0.26601171
    %v2014 = vmul.f32 %v454, 0.26601171
    %v2015 = vmul.f32 %v455, 0.26601171
    %v2016 = vmul.f32 %v456, 0.26601171
    %v2017 = vmul.f32 %v457, 0.26601171
    %v2018 = vmul.f32 %v458, 0.26601171
    %v2019 = vmul.f32 %v459, 0.26601171
    %v2020 = vmul.f32 %v460, 0.26601171
    %2081 = vrot.lane.b32.xlu0 %v1961, 123
    %v2082 = vpop.permute.xlu0 %2081
    %2083 = vrot.lane.b32.xlu0 %v1962, 123
    %v2084 = vpop.permute.xlu0 %2083
    %2085 = vrot.lane.b32.xlu0 %v1963, 123
    %v2086 = vpop.permute.xlu0 %2085
    %2087 = vrot.lane.b32.xlu0 %v1964, 123
    %v2088 = vpop.permute.xlu0 %2087
    %2089 = vrot.lane.b32.xlu0 %v1965, 123
    %v2090 = vpop.permute.xlu0 %2089
    %2091 = vrot.lane.b32.xlu0 %v1966, 123
    %v2092 = vpop.permute.xlu0 %2091
    %2093 = vrot.lane.b32.xlu0 %v1967, 123
    %v2094 = vpop.permute.xlu0 %2093
    %2095 = vrot.lane.b32.xlu0 %v1968, 123
    %v2096 = vpop.permute.xlu0 %2095
    %2097 = vrot.lane.b32.xlu0 %v1969, 123
    %v2098 = vpop.permute.xlu0 %2097
    %2099 = vrot.lane.b32.xlu0 %v1970, 123
    %v2100 = vpop.permute.xlu0 %2099
    %2101 = vrot.lane.b32.xlu0 %v1971, 123
    %v2102 = vpop.permute.xlu0 %2101
    %2103 = vrot.lane.b32.xlu0 %v1972, 123
    %v2104 = vpop.permute.xlu0 %2103
    %2105 = vrot.lane.b32.xlu0 %v1973, 123
    %v2106 = vpop.permute.xlu0 %2105
    %2107 = vrot.lane.b32.xlu0 %v1974, 123
    %v2108 = vpop.permute.xlu0 %2107
    %2109 = vrot.lane.b32.xlu0 %v1975, 123
    %v2110 = vpop.permute.xlu0 %2109
    %2111 = vrot.lane.b32.xlu0 %v1976, 123
    %v2112 = vpop.permute.xlu0 %2111
    %2113 = vrot.lane.b32.xlu0 %v1977, 123
    %v2114 = vpop.permute.xlu0 %2113
    %2115 = vrot.lane.b32.xlu0 %v1978, 123
    %v2116 = vpop.permute.xlu0 %2115
    %2117 = vrot.lane.b32.xlu0 %v1979, 123
    %v2118 = vpop.permute.xlu0 %2117
    %2119 = vrot.lane.b32.xlu0 %v1980, 123
    %v2120 = vpop.permute.xlu0 %2119
    %2121 = vrot.lane.b32.xlu0 %v1981, 123
    %v2122 = vpop.permute.xlu0 %2121
    %2123 = vrot.lane.b32.xlu0 %v1982, 123
    %v2124 = vpop.permute.xlu0 %2123
    %2125 = vrot.lane.b32.xlu0 %v1983, 123
    %v2126 = vpop.permute.xlu0 %2125
    %2127 = vrot.lane.b32.xlu0 %v1984, 123
    %v2128 = vpop.permute.xlu0 %2127
    %2129 = vrot.lane.b32.xlu0 %v1985, 123
    %v2130 = vpop.permute.xlu0 %2129
    %2131 = vrot.lane.b32.xlu0 %v1986, 123
    %v2132 = vpop.permute.xlu0 %2131
    %2133 = vrot.lane.b32.xlu0 %v1987, 123
    %v2134 = vpop.permute.xlu0 %2133
    %2135 = vrot.lane.b32.xlu0 %v1988, 123
    %v2136 = vpop.permute.xlu0 %2135
    %2137 = vrot.lane.b32.xlu0 %v1989, 123
    %v2138 = vpop.permute.xlu0 %2137
    %2139 = vrot.lane.b32.xlu0 %v1990, 123
    %v2140 = vpop.permute.xlu0 %2139
    %2141 = vrot.lane.b32.xlu0 %v1991, 123
    %v2142 = vpop.permute.xlu0 %2141
    %2143 = vrot.lane.b32.xlu0 %v1992, 123
    %v2144 = vpop.permute.xlu0 %2143
    %2145 = vrot.lane.b32.xlu0 %v1993, 123
    %v2146 = vpop.permute.xlu0 %2145
    %2147 = vrot.lane.b32.xlu0 %v1994, 123
    %v2148 = vpop.permute.xlu0 %2147
    %2149 = vrot.lane.b32.xlu0 %v1995, 123
    %v2150 = vpop.permute.xlu0 %2149
    %2151 = vrot.lane.b32.xlu0 %v1996, 123
    %v2152 = vpop.permute.xlu0 %2151
    %2153 = vrot.lane.b32.xlu0 %v1997, 123
    %v2154 = vpop.permute.xlu0 %2153
    %2155 = vrot.lane.b32.xlu0 %v1998, 123
    %v2156 = vpop.permute.xlu0 %2155
    %2157 = vrot.lane.b32.xlu0 %v1999, 123
    %v2158 = vpop.permute.xlu0 %2157
    %2159 = vrot.lane.b32.xlu0 %v2000, 123
    %v2160 = vpop.permute.xlu0 %2159
    %2161 = vrot.lane.b32.xlu0 %v2001, 123
    %v2162 = vpop.permute.xlu0 %2161
    %2163 = vrot.lane.b32.xlu0 %v2002, 123
    %v2164 = vpop.permute.xlu0 %2163
    %2165 = vrot.lane.b32.xlu0 %v2003, 123
    %v2166 = vpop.permute.xlu0 %2165
    %2167 = vrot.lane.b32.xlu0 %v2004, 123
    %v2168 = vpop.permute.xlu0 %2167
    %2169 = vrot.lane.b32.xlu0 %v2005, 123
    %v2170 = vpop.permute.xlu0 %2169
    %2171 = vrot.lane.b32.xlu0 %v2006, 123
    %v2172 = vpop.permute.xlu0 %2171
    %2173 = vrot.lane.b32.xlu0 %v2007, 123
    %v2174 = vpop.permute.xlu0 %2173
    %2175 = vrot.lane.b32.xlu0 %v2008, 123
    %v2176 = vpop.permute.xlu0 %2175
    %2177 = vrot.lane.b32.xlu0 %v2009, 123
    %v2178 = vpop.permute.xlu0 %2177
    %2179 = vrot.lane.b32.xlu0 %v2010, 123
    %v2180 = vpop.permute.xlu0 %2179
    %2181 = vrot.lane.b32.xlu0 %v2011, 123
    %v2182 = vpop.permute.xlu0 %2181
    %2183 = vrot.lane.b32.xlu0 %v2012, 123
    %v2184 = vpop.permute.xlu0 %2183
    %2185 = vrot.lane.b32.xlu0 %v2013, 123
    %v2186 = vpop.permute.xlu0 %2185
    %2187 = vrot.lane.b32.xlu0 %v2014, 123
    %v2188 = vpop.permute.xlu0 %2187
    %2189 = vrot.lane.b32.xlu0 %v2015, 123
    %v2190 = vpop.permute.xlu0 %2189
    %2191 = vrot.lane.b32.xlu0 %v2016, 123
    %v2192 = vpop.permute.xlu0 %2191
    %2193 = vrot.lane.b32.xlu0 %v2017, 123
    %v2194 = vpop.permute.xlu0 %2193
    %2195 = vrot.lane.b32.xlu0 %v2018, 123
    %v2196 = vpop.permute.xlu0 %2195
    %2197 = vrot.lane.b32.xlu0 %v2019, 123
    %v2198 = vpop.permute.xlu0 %2197
    %2199 = vrot.lane.b32.xlu0 %v2020, 123
    %v2200 = vpop.permute.xlu0 %2199
    %v2261 = vadd.f32 %v1901, %v2082
    %v2262 = vadd.f32 %v1902, %v2084
    %v2263 = vadd.f32 %v1903, %v2086
    %v2264 = vadd.f32 %v1904, %v2088
    %v2265 = vadd.f32 %v1905, %v2090
    %v2266 = vadd.f32 %v1906, %v2092
    %v2267 = vadd.f32 %v1907, %v2094
    %v2268 = vadd.f32 %v1908, %v2096
    %v2269 = vadd.f32 %v1909, %v2098
    %v2270 = vadd.f32 %v1910, %v2100
    %v2271 = vadd.f32 %v1911, %v2102
    %v2272 = vadd.f32 %v1912, %v2104
    %v2273 = vadd.f32 %v1913, %v2106
    %v2274 = vadd.f32 %v1914, %v2108
    %v2275 = vadd.f32 %v1915, %v2110
    %v2276 = vadd.f32 %v1916, %v2112
    %v2277 = vadd.f32 %v1917, %v2114
    %v2278 = vadd.f32 %v1918, %v2116
    %v2279 = vadd.f32 %v1919, %v2118
    %v2280 = vadd.f32 %v1920, %v2120
    %v2281 = vadd.f32 %v1921, %v2122
    %v2282 = vadd.f32 %v1922, %v2124
    %v2283 = vadd.f32 %v1923, %v2126
    %v2284 = vadd.f32 %v1924, %v2128
    %v2285 = vadd.f32 %v1925, %v2130
    %v2286 = vadd.f32 %v1926, %v2132
    %v2287 = vadd.f32 %v1927, %v2134
    %v2288 = vadd.f32 %v1928, %v2136
    %v2289 = vadd.f32 %v1929, %v2138
    %v2290 = vadd.f32 %v1930, %v2140
    %v2291 = vadd.f32 %v1931, %v2142
    %v2292 = vadd.f32 %v1932, %v2144
    %v2293 = vadd.f32 %v1933, %v2146
    %v2294 = vadd.f32 %v1934, %v2148
    %v2295 = vadd.f32 %v1935, %v2150
    %v2296 = vadd.f32 %v1936, %v2152
    %v2297 = vadd.f32 %v1937, %v2154
    %v2298 = vadd.f32 %v1938, %v2156
    %v2299 = vadd.f32 %v1939, %v2158
    %v2300 = vadd.f32 %v1940, %v2160
    %v2301 = vadd.f32 %v1941, %v2162
    %v2302 = vadd.f32 %v1942, %v2164
    %v2303 = vadd.f32 %v1943, %v2166
    %v2304 = vadd.f32 %v1944, %v2168
    %v2305 = vadd.f32 %v1945, %v2170
    %v2306 = vadd.f32 %v1946, %v2172
    %v2307 = vadd.f32 %v1947, %v2174
    %v2308 = vadd.f32 %v1948, %v2176
    %v2309 = vadd.f32 %v1949, %v2178
    %v2310 = vadd.f32 %v1950, %v2180
    %v2311 = vadd.f32 %v1951, %v2182
    %v2312 = vadd.f32 %v1952, %v2184
    %v2313 = vadd.f32 %v1953, %v2186
    %v2314 = vadd.f32 %v1954, %v2188
    %v2315 = vadd.f32 %v1955, %v2190
    %v2316 = vadd.f32 %v1956, %v2192
    %v2317 = vadd.f32 %v1957, %v2194
    %v2318 = vadd.f32 %v1958, %v2196
    %v2319 = vadd.f32 %v1959, %v2198
    %v2320 = vadd.f32 %v1960, %v2200
    %2321 = vrot.lane.b32.xlu0 %v1601, 122
    %v2322 = vpop.permute.xlu0 %2321
    %2323 = vrot.lane.b32.xlu0 %v1602, 122
    %v2324 = vpop.permute.xlu0 %2323
    %2325 = vrot.lane.b32.xlu0 %v1603, 122
    %v2326 = vpop.permute.xlu0 %2325
    %2327 = vrot.lane.b32.xlu0 %v1604, 122
    %v2328 = vpop.permute.xlu0 %2327
    %2329 = vrot.lane.b32.xlu0 %v1605, 122
    %v2330 = vpop.permute.xlu0 %2329
    %2331 = vrot.lane.b32.xlu0 %v1606, 122
    %v2332 = vpop.permute.xlu0 %2331
    %2333 = vrot.lane.b32.xlu0 %v1607, 122
    %v2334 = vpop.permute.xlu0 %2333
    %2335 = vrot.lane.b32.xlu0 %v1608, 122
    %v2336 = vpop.permute.xlu0 %2335
    %2337 = vrot.lane.b32.xlu0 %v1609, 122
    %v2338 = vpop.permute.xlu0 %2337
    %2339 = vrot.lane.b32.xlu0 %v1610, 122
    %v2340 = vpop.permute.xlu0 %2339
    %2341 = vrot.lane.b32.xlu0 %v1611, 122
    %v2342 = vpop.permute.xlu0 %2341
    %2343 = vrot.lane.b32.xlu0 %v1612, 122
    %v2344 = vpop.permute.xlu0 %2343
    %2345 = vrot.lane.b32.xlu0 %v1613, 122
    %v2346 = vpop.permute.xlu0 %2345
    %2347 = vrot.lane.b32.xlu0 %v1614, 122
    %v2348 = vpop.permute.xlu0 %2347
    %2349 = vrot.lane.b32.xlu0 %v1615, 122
    %v2350 = vpop.permute.xlu0 %2349
    %2351 = vrot.lane.b32.xlu0 %v1616, 122
    %v2352 = vpop.permute.xlu0 %2351
    %2353 = vrot.lane.b32.xlu0 %v1617, 122
    %v2354 = vpop.permute.xlu0 %2353
    %2355 = vrot.lane.b32.xlu0 %v1618, 122
    %v2356 = vpop.permute.xlu0 %2355
    %2357 = vrot.lane.b32.xlu0 %v1619, 122
    %v2358 = vpop.permute.xlu0 %2357
    %2359 = vrot.lane.b32.xlu0 %v1620, 122
    %v2360 = vpop.permute.xlu0 %2359
    %2361 = vrot.lane.b32.xlu0 %v1621, 122
    %v2362 = vpop.permute.xlu0 %2361
    %2363 = vrot.lane.b32.xlu0 %v1622, 122
    %v2364 = vpop.permute.xlu0 %2363
    %2365 = vrot.lane.b32.xlu0 %v1623, 122
    %v2366 = vpop.permute.xlu0 %2365
    %2367 = vrot.lane.b32.xlu0 %v1624, 122
    %v2368 = vpop.permute.xlu0 %2367
    %2369 = vrot.lane.b32.xlu0 %v1625, 122
    %v2370 = vpop.permute.xlu0 %2369
    %2371 = vrot.lane.b32.xlu0 %v1626, 122
    %v2372 = vpop.permute.xlu0 %2371
    %2373 = vrot.lane.b32.xlu0 %v1627, 122
    %v2374 = vpop.permute.xlu0 %2373
    %2375 = vrot.lane.b32.xlu0 %v1628, 122
    %v2376 = vpop.permute.xlu0 %2375
    %2377 = vrot.lane.b32.xlu0 %v1629, 122
    %v2378 = vpop.permute.xlu0 %2377
    %2379 = vrot.lane.b32.xlu0 %v1630, 122
    %v2380 = vpop.permute.xlu0 %2379
    %2381 = vrot.lane.b32.xlu0 %v1631, 122
    %v2382 = vpop.permute.xlu0 %2381
    %2383 = vrot.lane.b32.xlu0 %v1632, 122
    %v2384 = vpop.permute.xlu0 %2383
    %2385 = vrot.lane.b32.xlu0 %v1633, 122
    %v2386 = vpop.permute.xlu0 %2385
    %2387 = vrot.lane.b32.xlu0 %v1634, 122
    %v2388 = vpop.permute.xlu0 %2387
    %2389 = vrot.lane.b32.xlu0 %v1635, 122
    %v2390 = vpop.permute.xlu0 %2389
    %2391 = vrot.lane.b32.xlu0 %v1636, 122
    %v2392 = vpop.permute.xlu0 %2391
    %2393 = vrot.lane.b32.xlu0 %v1637, 122
    %v2394 = vpop.permute.xlu0 %2393
    %2395 = vrot.lane.b32.xlu0 %v1638, 122
    %v2396 = vpop.permute.xlu0 %2395
    %2397 = vrot.lane.b32.xlu0 %v1639, 122
    %v2398 = vpop.permute.xlu0 %2397
    %2399 = vrot.lane.b32.xlu0 %v1640, 122
    %v2400 = vpop.permute.xlu0 %2399
    %2401 = vrot.lane.b32.xlu0 %v1641, 122
    %v2402 = vpop.permute.xlu0 %2401
    %2403 = vrot.lane.b32.xlu0 %v1642, 122
    %v2404 = vpop.permute.xlu0 %2403
    %2405 = vrot.lane.b32.xlu0 %v1643, 122
    %v2406 = vpop.permute.xlu0 %2405
    %2407 = vrot.lane.b32.xlu0 %v1644, 122
    %v2408 = vpop.permute.xlu0 %2407
    %2409 = vrot.lane.b32.xlu0 %v1645, 122
    %v2410 = vpop.permute.xlu0 %2409
    %2411 = vrot.lane.b32.xlu0 %v1646, 122
    %v2412 = vpop.permute.xlu0 %2411
    %2413 = vrot.lane.b32.xlu0 %v1647, 122
    %v2414 = vpop.permute.xlu0 %2413
    %2415 = vrot.lane.b32.xlu0 %v1648, 122
    %v2416 = vpop.permute.xlu0 %2415
    %2417 = vrot.lane.b32.xlu0 %v1649, 122
    %v2418 = vpop.permute.xlu0 %2417
    %2419 = vrot.lane.b32.xlu0 %v1650, 122
    %v2420 = vpop.permute.xlu0 %2419
    %2421 = vrot.lane.b32.xlu0 %v1651, 122
    %v2422 = vpop.permute.xlu0 %2421
    %2423 = vrot.lane.b32.xlu0 %v1652, 122
    %v2424 = vpop.permute.xlu0 %2423
    %2425 = vrot.lane.b32.xlu0 %v1653, 122
    %v2426 = vpop.permute.xlu0 %2425
    %2427 = vrot.lane.b32.xlu0 %v1654, 122
    %v2428 = vpop.permute.xlu0 %2427
    %2429 = vrot.lane.b32.xlu0 %v1655, 122
    %v2430 = vpop.permute.xlu0 %2429
    %2431 = vrot.lane.b32.xlu0 %v1656, 122
    %v2432 = vpop.permute.xlu0 %2431
    %2433 = vrot.lane.b32.xlu0 %v1657, 122
    %v2434 = vpop.permute.xlu0 %2433
    %2435 = vrot.lane.b32.xlu0 %v1658, 122
    %v2436 = vpop.permute.xlu0 %2435
    %2437 = vrot.lane.b32.xlu0 %v1659, 122
    %v2438 = vpop.permute.xlu0 %2437
    %2439 = vrot.lane.b32.xlu0 %v1660, 122
    %v2440 = vpop.permute.xlu0 %2439
    %v2501 = vadd.f32 %v2261, %v2322
    %v2502 = vadd.f32 %v2262, %v2324
    %v2503 = vadd.f32 %v2263, %v2326
    %v2504 = vadd.f32 %v2264, %v2328
    %v2505 = vadd.f32 %v2265, %v2330
    %v2506 = vadd.f32 %v2266, %v2332
    %v2507 = vadd.f32 %v2267, %v2334
    %v2508 = vadd.f32 %v2268, %v2336
    %v2509 = vadd.f32 %v2269, %v2338
    %v2510 = vadd.f32 %v2270, %v2340
    %v2511 = vadd.f32 %v2271, %v2342
    %v2512 = vadd.f32 %v2272, %v2344
    %v2513 = vadd.f32 %v2273, %v2346
    %v2514 = vadd.f32 %v2274, %v2348
    %v2515 = vadd.f32 %v2275, %v2350
    %v2516 = vadd.f32 %v2276, %v2352
    %v2517 = vadd.f32 %v2277, %v2354
    %v2518 = vadd.f32 %v2278, %v2356
    %v2519 = vadd.f32 %v2279, %v2358
    %v2520 = vadd.f32 %v2280, %v2360
    %v2521 = vadd.f32 %v2281, %v2362
    %v2522 = vadd.f32 %v2282, %v2364
    %v2523 = vadd.f32 %v2283, %v2366
    %v2524 = vadd.f32 %v2284, %v2368
    %v2525 = vadd.f32 %v2285, %v2370
    %v2526 = vadd.f32 %v2286, %v2372
    %v2527 = vadd.f32 %v2287, %v2374
    %v2528 = vadd.f32 %v2288, %v2376
    %v2529 = vadd.f32 %v2289, %v2378
    %v2530 = vadd.f32 %v2290, %v2380
    %v2531 = vadd.f32 %v2291, %v2382
    %v2532 = vadd.f32 %v2292, %v2384
    %v2533 = vadd.f32 %v2293, %v2386
    %v2534 = vadd.f32 %v2294, %v2388
    %v2535 = vadd.f32 %v2295, %v2390
    %v2536 = vadd.f32 %v2296, %v2392
    %v2537 = vadd.f32 %v2297, %v2394
    %v2538 = vadd.f32 %v2298, %v2396
    %v2539 = vadd.f32 %v2299, %v2398
    %v2540 = vadd.f32 %v2300, %v2400
    %v2541 = vadd.f32 %v2301, %v2402
    %v2542 = vadd.f32 %v2302, %v2404
    %v2543 = vadd.f32 %v2303, %v2406
    %v2544 = vadd.f32 %v2304, %v2408
    %v2545 = vadd.f32 %v2305, %v2410
    %v2546 = vadd.f32 %v2306, %v2412
    %v2547 = vadd.f32 %v2307, %v2414
    %v2548 = vadd.f32 %v2308, %v2416
    %v2549 = vadd.f32 %v2309, %v2418
    %v2550 = vadd.f32 %v2310, %v2420
    %v2551 = vadd.f32 %v2311, %v2422
    %v2552 = vadd.f32 %v2312, %v2424
    %v2553 = vadd.f32 %v2313, %v2426
    %v2554 = vadd.f32 %v2314, %v2428
    %v2555 = vadd.f32 %v2315, %v2430
    %v2556 = vadd.f32 %v2316, %v2432
    %v2557 = vadd.f32 %v2317, %v2434
    %v2558 = vadd.f32 %v2318, %v2436
    %v2559 = vadd.f32 %v2319, %v2438
    %v2560 = vadd.f32 %v2320, %v2440
    %2561 = vrot.lane.b32.xlu0 %v1241, 121
    %v2562 = vpop.permute.xlu0 %2561
    %2563 = vrot.lane.b32.xlu0 %v1242, 121
    %v2564 = vpop.permute.xlu0 %2563
    %2565 = vrot.lane.b32.xlu0 %v1243, 121
    %v2566 = vpop.permute.xlu0 %2565
    %2567 = vrot.lane.b32.xlu0 %v1244, 121
    %v2568 = vpop.permute.xlu0 %2567
    %2569 = vrot.lane.b32.xlu0 %v1245, 121
    %v2570 = vpop.permute.xlu0 %2569
    %2571 = vrot.lane.b32.xlu0 %v1246, 121
    %v2572 = vpop.permute.xlu0 %2571
    %2573 = vrot.lane.b32.xlu0 %v1247, 121
    %v2574 = vpop.permute.xlu0 %2573
    %2575 = vrot.lane.b32.xlu0 %v1248, 121
    %v2576 = vpop.permute.xlu0 %2575
    %2577 = vrot.lane.b32.xlu0 %v1249, 121
    %v2578 = vpop.permute.xlu0 %2577
    %2579 = vrot.lane.b32.xlu0 %v1250, 121
    %v2580 = vpop.permute.xlu0 %2579
    %2581 = vrot.lane.b32.xlu0 %v1251, 121
    %v2582 = vpop.permute.xlu0 %2581
    %2583 = vrot.lane.b32.xlu0 %v1252, 121
    %v2584 = vpop.permute.xlu0 %2583
    %2585 = vrot.lane.b32.xlu0 %v1253, 121
    %v2586 = vpop.permute.xlu0 %2585
    %2587 = vrot.lane.b32.xlu0 %v1254, 121
    %v2588 = vpop.permute.xlu0 %2587
    %2589 = vrot.lane.b32.xlu0 %v1255, 121
    %v2590 = vpop.permute.xlu0 %2589
    %2591 = vrot.lane.b32.xlu0 %v1256, 121
    %v2592 = vpop.permute.xlu0 %2591
    %2593 = vrot.lane.b32.xlu0 %v1257, 121
    %v2594 = vpop.permute.xlu0 %2593
    %2595 = vrot.lane.b32.xlu0 %v1258, 121
    %v2596 = vpop.permute.xlu0 %2595
    %2597 = vrot.lane.b32.xlu0 %v1259, 121
    %v2598 = vpop.permute.xlu0 %2597
    %2599 = vrot.lane.b32.xlu0 %v1260, 121
    %v2600 = vpop.permute.xlu0 %2599
    %2601 = vrot.lane.b32.xlu0 %v1261, 121
    %v2602 = vpop.permute.xlu0 %2601
    %2603 = vrot.lane.b32.xlu0 %v1262, 121
    %v2604 = vpop.permute.xlu0 %2603
    %2605 = vrot.lane.b32.xlu0 %v1263, 121
    %v2606 = vpop.permute.xlu0 %2605
    %2607 = vrot.lane.b32.xlu0 %v1264, 121
    %v2608 = vpop.permute.xlu0 %2607
    %2609 = vrot.lane.b32.xlu0 %v1265, 121
    %v2610 = vpop.permute.xlu0 %2609
    %2611 = vrot.lane.b32.xlu0 %v1266, 121
    %v2612 = vpop.permute.xlu0 %2611
    %2613 = vrot.lane.b32.xlu0 %v1267, 121
    %v2614 = vpop.permute.xlu0 %2613
    %2615 = vrot.lane.b32.xlu0 %v1268, 121
    %v2616 = vpop.permute.xlu0 %2615
    %2617 = vrot.lane.b32.xlu0 %v1269, 121
    %v2618 = vpop.permute.xlu0 %2617
    %2619 = vrot.lane.b32.xlu0 %v1270, 121
    %v2620 = vpop.permute.xlu0 %2619
    %2621 = vrot.lane.b32.xlu0 %v1271, 121
    %v2622 = vpop.permute.xlu0 %2621
    %2623 = vrot.lane.b32.xlu0 %v1272, 121
    %v2624 = vpop.permute.xlu0 %2623
    %2625 = vrot.lane.b32.xlu0 %v1273, 121
    %v2626 = vpop.permute.xlu0 %2625
    %2627 = vrot.lane.b32.xlu0 %v1274, 121
    %v2628 = vpop.permute.xlu0 %2627
    %2629 = vrot.lane.b32.xlu0 %v1275, 121
    %v2630 = vpop.permute.xlu0 %2629
    %2631 = vrot.lane.b32.xlu0 %v1276, 121
    %v2632 = vpop.permute.xlu0 %2631
    %2633 = vrot.lane.b32.xlu0 %v1277, 121
    %v2634 = vpop.permute.xlu0 %2633
    %2635 = vrot.lane.b32.xlu0 %v1278, 121
    %v2636 = vpop.permute.xlu0 %2635
    %2637 = vrot.lane.b32.xlu0 %v1279, 121
    %v2638 = vpop.permute.xlu0 %2637
    %2639 = vrot.lane.b32.xlu0 %v1280, 121
    %v2640 = vpop.permute.xlu0 %2639
    %2641 = vrot.lane.b32.xlu0 %v1281, 121
    %v2642 = vpop.permute.xlu0 %2641
    %2643 = vrot.lane.b32.xlu0 %v1282, 121
    %v2644 = vpop.permute.xlu0 %2643
    %2645 = vrot.lane.b32.xlu0 %v1283, 121
    %v2646 = vpop.permute.xlu0 %2645
    %2647 = vrot.lane.b32.xlu0 %v1284, 121
    %v2648 = vpop.permute.xlu0 %2647
    %2649 = vrot.lane.b32.xlu0 %v1285, 121
    %v2650 = vpop.permute.xlu0 %2649
    %2651 = vrot.lane.b32.xlu0 %v1286, 121
    %v2652 = vpop.permute.xlu0 %2651
    %2653 = vrot.lane.b32.xlu0 %v1287, 121
    %v2654 = vpop.permute.xlu0 %2653
    %2655 = vrot.lane.b32.xlu0 %v1288, 121
    %v2656 = vpop.permute.xlu0 %2655
    %2657 = vrot.lane.b32.xlu0 %v1289, 121
    %v2658 = vpop.permute.xlu0 %2657
    %2659 = vrot.lane.b32.xlu0 %v1290, 121
    %v2660 = vpop.permute.xlu0 %2659
    %2661 = vrot.lane.b32.xlu0 %v1291, 121
    %v2662 = vpop.permute.xlu0 %2661
    %2663 = vrot.lane.b32.xlu0 %v1292, 121
    %v2664 = vpop.permute.xlu0 %2663
    %2665 = vrot.lane.b32.xlu0 %v1293, 121
    %v2666 = vpop.permute.xlu0 %2665
    %2667 = vrot.lane.b32.xlu0 %v1294, 121
    %v2668 = vpop.permute.xlu0 %2667
    %2669 = vrot.lane.b32.xlu0 %v1295, 121
    %v2670 = vpop.permute.xlu0 %2669
    %2671 = vrot.lane.b32.xlu0 %v1296, 121
    %v2672 = vpop.permute.xlu0 %2671
    %2673 = vrot.lane.b32.xlu0 %v1297, 121
    %v2674 = vpop.permute.xlu0 %2673
    %2675 = vrot.lane.b32.xlu0 %v1298, 121
    %v2676 = vpop.permute.xlu0 %2675
    %2677 = vrot.lane.b32.xlu0 %v1299, 121
    %v2678 = vpop.permute.xlu0 %2677
    %2679 = vrot.lane.b32.xlu0 %v1300, 121
    %v2680 = vpop.permute.xlu0 %2679
    %v2741 = vadd.f32 %v2501, %v2562
    %v2742 = vadd.f32 %v2502, %v2564
    %v2743 = vadd.f32 %v2503, %v2566
    %v2744 = vadd.f32 %v2504, %v2568
    %v2745 = vadd.f32 %v2505, %v2570
    %v2746 = vadd.f32 %v2506, %v2572
    %v2747 = vadd.f32 %v2507, %v2574
    %v2748 = vadd.f32 %v2508, %v2576
    %v2749 = vadd.f32 %v2509, %v2578
    %v2750 = vadd.f32 %v2510, %v2580
    %v2751 = vadd.f32 %v2511, %v2582
    %v2752 = vadd.f32 %v2512, %v2584
    %v2753 = vadd.f32 %v2513, %v2586
    %v2754 = vadd.f32 %v2514, %v2588
    %v2755 = vadd.f32 %v2515, %v2590
    %v2756 = vadd.f32 %v2516, %v2592
    %v2757 = vadd.f32 %v2517, %v2594
    %v2758 = vadd.f32 %v2518, %v2596
    %v2759 = vadd.f32 %v2519, %v2598
    %v2760 = vadd.f32 %v2520, %v2600
    %v2761 = vadd.f32 %v2521, %v2602
    %v2762 = vadd.f32 %v2522, %v2604
    %v2763 = vadd.f32 %v2523, %v2606
    %v2764 = vadd.f32 %v2524, %v2608
    %v2765 = vadd.f32 %v2525, %v2610
    %v2766 = vadd.f32 %v2526, %v2612
    %v2767 = vadd.f32 %v2527, %v2614
    %v2768 = vadd.f32 %v2528, %v2616
    %v2769 = vadd.f32 %v2529, %v2618
    %v2770 = vadd.f32 %v2530, %v2620
    %v2771 = vadd.f32 %v2531, %v2622
    %v2772 = vadd.f32 %v2532, %v2624
    %v2773 = vadd.f32 %v2533, %v2626
    %v2774 = vadd.f32 %v2534, %v2628
    %v2775 = vadd.f32 %v2535, %v2630
    %v2776 = vadd.f32 %v2536, %v2632
    %v2777 = vadd.f32 %v2537, %v2634
    %v2778 = vadd.f32 %v2538, %v2636
    %v2779 = vadd.f32 %v2539, %v2638
    %v2780 = vadd.f32 %v2540, %v2640
    %v2781 = vadd.f32 %v2541, %v2642
    %v2782 = vadd.f32 %v2542, %v2644
    %v2783 = vadd.f32 %v2543, %v2646
    %v2784 = vadd.f32 %v2544, %v2648
    %v2785 = vadd.f32 %v2545, %v2650
    %v2786 = vadd.f32 %v2546, %v2652
    %v2787 = vadd.f32 %v2547, %v2654
    %v2788 = vadd.f32 %v2548, %v2656
    %v2789 = vadd.f32 %v2549, %v2658
    %v2790 = vadd.f32 %v2550, %v2660
    %v2791 = vadd.f32 %v2551, %v2662
    %v2792 = vadd.f32 %v2552, %v2664
    %v2793 = vadd.f32 %v2553, %v2666
    %v2794 = vadd.f32 %v2554, %v2668
    %v2795 = vadd.f32 %v2555, %v2670
    %v2796 = vadd.f32 %v2556, %v2672
    %v2797 = vadd.f32 %v2557, %v2674
    %v2798 = vadd.f32 %v2558, %v2676
    %v2799 = vadd.f32 %v2559, %v2678
    %v2800 = vadd.f32 %v2560, %v2680
    %2801 = vrot.lane.b32.xlu0 %v881, 120
    %v2802 = vpop.permute.xlu0 %2801
    %2803 = vrot.lane.b32.xlu0 %v882, 120
    %v2804 = vpop.permute.xlu0 %2803
    %2805 = vrot.lane.b32.xlu0 %v883, 120
    %v2806 = vpop.permute.xlu0 %2805
    %2807 = vrot.lane.b32.xlu0 %v884, 120
    %v2808 = vpop.permute.xlu0 %2807
    %2809 = vrot.lane.b32.xlu0 %v885, 120
    %v2810 = vpop.permute.xlu0 %2809
    %2811 = vrot.lane.b32.xlu0 %v886, 120
    %v2812 = vpop.permute.xlu0 %2811
    %2813 = vrot.lane.b32.xlu0 %v887, 120
    %v2814 = vpop.permute.xlu0 %2813
    %2815 = vrot.lane.b32.xlu0 %v888, 120
    %v2816 = vpop.permute.xlu0 %2815
    %2817 = vrot.lane.b32.xlu0 %v889, 120
    %v2818 = vpop.permute.xlu0 %2817
    %2819 = vrot.lane.b32.xlu0 %v890, 120
    %v2820 = vpop.permute.xlu0 %2819
    %2821 = vrot.lane.b32.xlu0 %v891, 120
    %v2822 = vpop.permute.xlu0 %2821
    %2823 = vrot.lane.b32.xlu0 %v892, 120
    %v2824 = vpop.permute.xlu0 %2823
    %2825 = vrot.lane.b32.xlu0 %v893, 120
    %v2826 = vpop.permute.xlu0 %2825
    %2827 = vrot.lane.b32.xlu0 %v894, 120
    %v2828 = vpop.permute.xlu0 %2827
    %2829 = vrot.lane.b32.xlu0 %v895, 120
    %v2830 = vpop.permute.xlu0 %2829
    %2831 = vrot.lane.b32.xlu0 %v896, 120
    %v2832 = vpop.permute.xlu0 %2831
    %2833 = vrot.lane.b32.xlu0 %v897, 120
    %v2834 = vpop.permute.xlu0 %2833
    %2835 = vrot.lane.b32.xlu0 %v898, 120
    %v2836 = vpop.permute.xlu0 %2835
    %2837 = vrot.lane.b32.xlu0 %v899, 120
    %v2838 = vpop.permute.xlu0 %2837
    %2839 = vrot.lane.b32.xlu0 %v900, 120
    %v2840 = vpop.permute.xlu0 %2839
    %2841 = vrot.lane.b32.xlu0 %v901, 120
    %v2842 = vpop.permute.xlu0 %2841
    %2843 = vrot.lane.b32.xlu0 %v902, 120
    %v2844 = vpop.permute.xlu0 %2843
    %2845 = vrot.lane.b32.xlu0 %v903, 120
    %v2846 = vpop.permute.xlu0 %2845
    %2847 = vrot.lane.b32.xlu0 %v904, 120
    %v2848 = vpop.permute.xlu0 %2847
    %2849 = vrot.lane.b32.xlu0 %v905, 120
    %v2850 = vpop.permute.xlu0 %2849
    %2851 = vrot.lane.b32.xlu0 %v906, 120
    %v2852 = vpop.permute.xlu0 %2851
    %2853 = vrot.lane.b32.xlu0 %v907, 120
    %v2854 = vpop.permute.xlu0 %2853
    %2855 = vrot.lane.b32.xlu0 %v908, 120
    %v2856 = vpop.permute.xlu0 %2855
    %2857 = vrot.lane.b32.xlu0 %v909, 120
    %v2858 = vpop.permute.xlu0 %2857
    %2859 = vrot.lane.b32.xlu0 %v910, 120
    %v2860 = vpop.permute.xlu0 %2859
    %2861 = vrot.lane.b32.xlu0 %v911, 120
    %v2862 = vpop.permute.xlu0 %2861
    %2863 = vrot.lane.b32.xlu0 %v912, 120
    %v2864 = vpop.permute.xlu0 %2863
    %2865 = vrot.lane.b32.xlu0 %v913, 120
    %v2866 = vpop.permute.xlu0 %2865
    %2867 = vrot.lane.b32.xlu0 %v914, 120
    %v2868 = vpop.permute.xlu0 %2867
    %2869 = vrot.lane.b32.xlu0 %v915, 120
    %v2870 = vpop.permute.xlu0 %2869
    %2871 = vrot.lane.b32.xlu0 %v916, 120
    %v2872 = vpop.permute.xlu0 %2871
    %2873 = vrot.lane.b32.xlu0 %v917, 120
    %v2874 = vpop.permute.xlu0 %2873
    %2875 = vrot.lane.b32.xlu0 %v918, 120
    %v2876 = vpop.permute.xlu0 %2875
    %2877 = vrot.lane.b32.xlu0 %v919, 120
    %v2878 = vpop.permute.xlu0 %2877
    %2879 = vrot.lane.b32.xlu0 %v920, 120
    %v2880 = vpop.permute.xlu0 %2879
    %2881 = vrot.lane.b32.xlu0 %v921, 120
    %v2882 = vpop.permute.xlu0 %2881
    %2883 = vrot.lane.b32.xlu0 %v922, 120
    %v2884 = vpop.permute.xlu0 %2883
    %2885 = vrot.lane.b32.xlu0 %v923, 120
    %v2886 = vpop.permute.xlu0 %2885
    %2887 = vrot.lane.b32.xlu0 %v924, 120
    %v2888 = vpop.permute.xlu0 %2887
    %2889 = vrot.lane.b32.xlu0 %v925, 120
    %v2890 = vpop.permute.xlu0 %2889
    %2891 = vrot.lane.b32.xlu0 %v926, 120
    %v2892 = vpop.permute.xlu0 %2891
    %2893 = vrot.lane.b32.xlu0 %v927, 120
    %v2894 = vpop.permute.xlu0 %2893
    %2895 = vrot.lane.b32.xlu0 %v928, 120
    %v2896 = vpop.permute.xlu0 %2895
    %2897 = vrot.lane.b32.xlu0 %v929, 120
    %v2898 = vpop.permute.xlu0 %2897
    %2899 = vrot.lane.b32.xlu0 %v930, 120
    %v2900 = vpop.permute.xlu0 %2899
    %2901 = vrot.lane.b32.xlu0 %v931, 120
    %v2902 = vpop.permute.xlu0 %2901
    %2903 = vrot.lane.b32.xlu0 %v932, 120
    %v2904 = vpop.permute.xlu0 %2903
    %2905 = vrot.lane.b32.xlu0 %v933, 120
    %v2906 = vpop.permute.xlu0 %2905
    %2907 = vrot.lane.b32.xlu0 %v934, 120
    %v2908 = vpop.permute.xlu0 %2907
    %2909 = vrot.lane.b32.xlu0 %v935, 120
    %v2910 = vpop.permute.xlu0 %2909
    %2911 = vrot.lane.b32.xlu0 %v936, 120
    %v2912 = vpop.permute.xlu0 %2911
    %2913 = vrot.lane.b32.xlu0 %v937, 120
    %v2914 = vpop.permute.xlu0 %2913
    %2915 = vrot.lane.b32.xlu0 %v938, 120
    %v2916 = vpop.permute.xlu0 %2915
    %2917 = vrot.lane.b32.xlu0 %v939, 120
    %v2918 = vpop.permute.xlu0 %2917
    %2919 = vrot.lane.b32.xlu0 %v940, 120
    %v2920 = vpop.permute.xlu0 %2919
    %v2981 = vadd.f32 %v2741, %v2802
    %v2982 = vadd.f32 %v2742, %v2804
    %v2983 = vadd.f32 %v2743, %v2806
    %v2984 = vadd.f32 %v2744, %v2808
    %v2985 = vadd.f32 %v2745, %v2810
    %v2986 = vadd.f32 %v2746, %v2812
    %v2987 = vadd.f32 %v2747, %v2814
    %v2988 = vadd.f32 %v2748, %v2816
    %v2989 = vadd.f32 %v2749, %v2818
    %v2990 = vadd.f32 %v2750, %v2820
    %v2991 = vadd.f32 %v2751, %v2822
    %v2992 = vadd.f32 %v2752, %v2824
    %v2993 = vadd.f32 %v2753, %v2826
    %v2994 = vadd.f32 %v2754, %v2828
    %v2995 = vadd.f32 %v2755, %v2830
    %v2996 = vadd.f32 %v2756, %v2832
    %v2997 = vadd.f32 %v2757, %v2834
    %v2998 = vadd.f32 %v2758, %v2836
    %v2999 = vadd.f32 %v2759, %v2838
    %v3000 = vadd.f32 %v2760, %v2840
    %v3001 = vadd.f32 %v2761, %v2842
    %v3002 = vadd.f32 %v2762, %v2844
    %v3003 = vadd.f32 %v2763, %v2846
    %v3004 = vadd.f32 %v2764, %v2848
    %v3005 = vadd.f32 %v2765, %v2850
    %v3006 = vadd.f32 %v2766, %v2852
    %v3007 = vadd.f32 %v2767, %v2854
    %v3008 = vadd.f32 %v2768, %v2856
    %v3009 = vadd.f32 %v2769, %v2858
    %v3010 = vadd.f32 %v2770, %v2860
    %v3011 = vadd.f32 %v2771, %v2862
    %v3012 = vadd.f32 %v2772, %v2864
    %v3013 = vadd.f32 %v2773, %v2866
    %v3014 = vadd.f32 %v2774, %v2868
    %v3015 = vadd.f32 %v2775, %v2870
    %v3016 = vadd.f32 %v2776, %v2872
    %v3017 = vadd.f32 %v2777, %v2874
    %v3018 = vadd.f32 %v2778, %v2876
    %v3019 = vadd.f32 %v2779, %v2878
    %v3020 = vadd.f32 %v2780, %v2880
    %v3021 = vadd.f32 %v2781, %v2882
    %v3022 = vadd.f32 %v2782, %v2884
    %v3023 = vadd.f32 %v2783, %v2886
    %v3024 = vadd.f32 %v2784, %v2888
    %v3025 = vadd.f32 %v2785, %v2890
    %v3026 = vadd.f32 %v2786, %v2892
    %v3027 = vadd.f32 %v2787, %v2894
    %v3028 = vadd.f32 %v2788, %v2896
    %v3029 = vadd.f32 %v2789, %v2898
    %v3030 = vadd.f32 %v2790, %v2900
    %v3031 = vadd.f32 %v2791, %v2902
    %v3032 = vadd.f32 %v2792, %v2904
    %v3033 = vadd.f32 %v2793, %v2906
    %v3034 = vadd.f32 %v2794, %v2908
    %v3035 = vadd.f32 %v2795, %v2910
    %v3036 = vadd.f32 %v2796, %v2912
    %v3037 = vadd.f32 %v2797, %v2914
    %v3038 = vadd.f32 %v2798, %v2916
    %v3039 = vadd.f32 %v2799, %v2918
    %v3040 = vadd.f32 %v2800, %v2920
    %3041 = vrot.lane.b32.xlu0 %v521, 119
    %v3042 = vpop.permute.xlu0 %3041
    %3043 = vrot.lane.b32.xlu0 %v522, 119
    %v3044 = vpop.permute.xlu0 %3043
    %3045 = vrot.lane.b32.xlu0 %v523, 119
    %v3046 = vpop.permute.xlu0 %3045
    %3047 = vrot.lane.b32.xlu0 %v524, 119
    %v3048 = vpop.permute.xlu0 %3047
    %3049 = vrot.lane.b32.xlu0 %v525, 119
    %v3050 = vpop.permute.xlu0 %3049
    %3051 = vrot.lane.b32.xlu0 %v526, 119
    %v3052 = vpop.permute.xlu0 %3051
    %3053 = vrot.lane.b32.xlu0 %v527, 119
    %v3054 = vpop.permute.xlu0 %3053
    %3055 = vrot.lane.b32.xlu0 %v528, 119
    %v3056 = vpop.permute.xlu0 %3055
    %3057 = vrot.lane.b32.xlu0 %v529, 119
    %v3058 = vpop.permute.xlu0 %3057
    %3059 = vrot.lane.b32.xlu0 %v530, 119
    %v3060 = vpop.permute.xlu0 %3059
    %3061 = vrot.lane.b32.xlu0 %v531, 119
    %v3062 = vpop.permute.xlu0 %3061
    %3063 = vrot.lane.b32.xlu0 %v532, 119
    %v3064 = vpop.permute.xlu0 %3063
    %3065 = vrot.lane.b32.xlu0 %v533, 119
    %v3066 = vpop.permute.xlu0 %3065
    %3067 = vrot.lane.b32.xlu0 %v534, 119
    %v3068 = vpop.permute.xlu0 %3067
    %3069 = vrot.lane.b32.xlu0 %v535, 119
    %v3070 = vpop.permute.xlu0 %3069
    %3071 = vrot.lane.b32.xlu0 %v536, 119
    %v3072 = vpop.permute.xlu0 %3071
    %3073 = vrot.lane.b32.xlu0 %v537, 119
    %v3074 = vpop.permute.xlu0 %3073
    %3075 = vrot.lane.b32.xlu0 %v538, 119
    %v3076 = vpop.permute.xlu0 %3075
    %3077 = vrot.lane.b32.xlu0 %v539, 119
    %v3078 = vpop.permute.xlu0 %3077
    %3079 = vrot.lane.b32.xlu0 %v540, 119
    %v3080 = vpop.permute.xlu0 %3079
    %3081 = vrot.lane.b32.xlu0 %v541, 119
    %v3082 = vpop.permute.xlu0 %3081
    %3083 = vrot.lane.b32.xlu0 %v542, 119
    %v3084 = vpop.permute.xlu0 %3083
    %3085 = vrot.lane.b32.xlu0 %v543, 119
    %v3086 = vpop.permute.xlu0 %3085
    %3087 = vrot.lane.b32.xlu0 %v544, 119
    %v3088 = vpop.permute.xlu0 %3087
    %3089 = vrot.lane.b32.xlu0 %v545, 119
    %v3090 = vpop.permute.xlu0 %3089
    %3091 = vrot.lane.b32.xlu0 %v546, 119
    %v3092 = vpop.permute.xlu0 %3091
    %3093 = vrot.lane.b32.xlu0 %v547, 119
    %v3094 = vpop.permute.xlu0 %3093
    %3095 = vrot.lane.b32.xlu0 %v548, 119
    %v3096 = vpop.permute.xlu0 %3095
    %3097 = vrot.lane.b32.xlu0 %v549, 119
    %v3098 = vpop.permute.xlu0 %3097
    %3099 = vrot.lane.b32.xlu0 %v550, 119
    %v3100 = vpop.permute.xlu0 %3099
    %3101 = vrot.lane.b32.xlu0 %v551, 119
    %v3102 = vpop.permute.xlu0 %3101
    %3103 = vrot.lane.b32.xlu0 %v552, 119
    %v3104 = vpop.permute.xlu0 %3103
    %3105 = vrot.lane.b32.xlu0 %v553, 119
    %v3106 = vpop.permute.xlu0 %3105
    %3107 = vrot.lane.b32.xlu0 %v554, 119
    %v3108 = vpop.permute.xlu0 %3107
    %3109 = vrot.lane.b32.xlu0 %v555, 119
    %v3110 = vpop.permute.xlu0 %3109
    %3111 = vrot.lane.b32.xlu0 %v556, 119
    %v3112 = vpop.permute.xlu0 %3111
    %3113 = vrot.lane.b32.xlu0 %v557, 119
    %v3114 = vpop.permute.xlu0 %3113
    %3115 = vrot.lane.b32.xlu0 %v558, 119
    %v3116 = vpop.permute.xlu0 %3115
    %3117 = vrot.lane.b32.xlu0 %v559, 119
    %v3118 = vpop.permute.xlu0 %3117
    %3119 = vrot.lane.b32.xlu0 %v560, 119
    %v3120 = vpop.permute.xlu0 %3119
    %3121 = vrot.lane.b32.xlu0 %v561, 119
    %v3122 = vpop.permute.xlu0 %3121
    %3123 = vrot.lane.b32.xlu0 %v562, 119
    %v3124 = vpop.permute.xlu0 %3123
    %3125 = vrot.lane.b32.xlu0 %v563, 119
    %v3126 = vpop.permute.xlu0 %3125
    %3127 = vrot.lane.b32.xlu0 %v564, 119
    %v3128 = vpop.permute.xlu0 %3127
    %3129 = vrot.lane.b32.xlu0 %v565, 119
    %v3130 = vpop.permute.xlu0 %3129
    %3131 = vrot.lane.b32.xlu0 %v566, 119
    %v3132 = vpop.permute.xlu0 %3131
    %3133 = vrot.lane.b32.xlu0 %v567, 119
    %v3134 = vpop.permute.xlu0 %3133
    %3135 = vrot.lane.b32.xlu0 %v568, 119
    %v3136 = vpop.permute.xlu0 %3135
    %3137 = vrot.lane.b32.xlu0 %v569, 119
    %v3138 = vpop.permute.xlu0 %3137
    %3139 = vrot.lane.b32.xlu0 %v570, 119
    %v3140 = vpop.permute.xlu0 %3139
    %3141 = vrot.lane.b32.xlu0 %v571, 119
    %v3142 = vpop.permute.xlu0 %3141
    %3143 = vrot.lane.b32.xlu0 %v572, 119
    %v3144 = vpop.permute.xlu0 %3143
    %3145 = vrot.lane.b32.xlu0 %v573, 119
    %v3146 = vpop.permute.xlu0 %3145
    %3147 = vrot.lane.b32.xlu0 %v574, 119
    %v3148 = vpop.permute.xlu0 %3147
    %3149 = vrot.lane.b32.xlu0 %v575, 119
    %v3150 = vpop.permute.xlu0 %3149
    %3151 = vrot.lane.b32.xlu0 %v576, 119
    %v3152 = vpop.permute.xlu0 %3151
    %3153 = vrot.lane.b32.xlu0 %v577, 119
    %v3154 = vpop.permute.xlu0 %3153
    %3155 = vrot.lane.b32.xlu0 %v578, 119
    %v3156 = vpop.permute.xlu0 %3155
    %3157 = vrot.lane.b32.xlu0 %v579, 119
    %v3158 = vpop.permute.xlu0 %3157
    %3159 = vrot.lane.b32.xlu0 %v580, 119
    %v3160 = vpop.permute.xlu0 %3159
    %v3221 = vadd.f32 %v2981, %v3042
    %v3222 = vadd.f32 %v2982, %v3044
    %v3223 = vadd.f32 %v2983, %v3046
    %v3224 = vadd.f32 %v2984, %v3048
    %v3225 = vadd.f32 %v2985, %v3050
    %v3226 = vadd.f32 %v2986, %v3052
    %v3227 = vadd.f32 %v2987, %v3054
    %v3228 = vadd.f32 %v2988, %v3056
    %v3229 = vadd.f32 %v2989, %v3058
    %v3230 = vadd.f32 %v2990, %v3060
    %v3231 = vadd.f32 %v2991, %v3062
    %v3232 = vadd.f32 %v2992, %v3064
    %v3233 = vadd.f32 %v2993, %v3066
    %v3234 = vadd.f32 %v2994, %v3068
    %v3235 = vadd.f32 %v2995, %v3070
    %v3236 = vadd.f32 %v2996, %v3072
    %v3237 = vadd.f32 %v2997, %v3074
    %v3238 = vadd.f32 %v2998, %v3076
    %v3239 = vadd.f32 %v2999, %v3078
    %v3240 = vadd.f32 %v3000, %v3080
    %v3241 = vadd.f32 %v3001, %v3082
    %v3242 = vadd.f32 %v3002, %v3084
    %v3243 = vadd.f32 %v3003, %v3086
    %v3244 = vadd.f32 %v3004, %v3088
    %v3245 = vadd.f32 %v3005, %v3090
    %v3246 = vadd.f32 %v3006, %v3092
    %v3247 = vadd.f32 %v3007, %v3094
    %v3248 = vadd.f32 %v3008, %v3096
    %v3249 = vadd.f32 %v3009, %v3098
    %v3250 = vadd.f32 %v3010, %v3100
    %v3251 = vadd.f32 %v3011, %v3102
    %v3252 = vadd.f32 %v3012, %v3104
    %v3253 = vadd.f32 %v3013, %v3106
    %v3254 = vadd.f32 %v3014, %v3108
    %v3255 = vadd.f32 %v3015, %v3110
    %v3256 = vadd.f32 %v3016, %v3112
    %v3257 = vadd.f32 %v3017, %v3114
    %v3258 = vadd.f32 %v3018, %v3116
    %v3259 = vadd.f32 %v3019, %v3118
    %v3260 = vadd.f32 %v3020, %v3120
    %v3261 = vadd.f32 %v3021, %v3122
    %v3262 = vadd.f32 %v3022, %v3124
    %v3263 = vadd.f32 %v3023, %v3126
    %v3264 = vadd.f32 %v3024, %v3128
    %v3265 = vadd.f32 %v3025, %v3130
    %v3266 = vadd.f32 %v3026, %v3132
    %v3267 = vadd.f32 %v3027, %v3134
    %v3268 = vadd.f32 %v3028, %v3136
    %v3269 = vadd.f32 %v3029, %v3138
    %v3270 = vadd.f32 %v3030, %v3140
    %v3271 = vadd.f32 %v3031, %v3142
    %v3272 = vadd.f32 %v3032, %v3144
    %v3273 = vadd.f32 %v3033, %v3146
    %v3274 = vadd.f32 %v3034, %v3148
    %v3275 = vadd.f32 %v3035, %v3150
    %v3276 = vadd.f32 %v3036, %v3152
    %v3277 = vadd.f32 %v3037, %v3154
    %v3278 = vadd.f32 %v3038, %v3156
    %v3279 = vadd.f32 %v3039, %v3158
    %v3280 = vadd.f32 %v3040, %v3160
    %3341 = vrot.lane.b32.xlu0 %v461, 118
    %v3342 = vpop.permute.xlu0 %3341
    %3343 = vrot.lane.b32.xlu0 %v462, 118
    %v3344 = vpop.permute.xlu0 %3343
    %3345 = vrot.lane.b32.xlu0 %v463, 118
    %v3346 = vpop.permute.xlu0 %3345
    %3347 = vrot.lane.b32.xlu0 %v464, 118
    %v3348 = vpop.permute.xlu0 %3347
    %3349 = vrot.lane.b32.xlu0 %v465, 118
    %v3350 = vpop.permute.xlu0 %3349
    %3351 = vrot.lane.b32.xlu0 %v466, 118
    %v3352 = vpop.permute.xlu0 %3351
    %3353 = vrot.lane.b32.xlu0 %v467, 118
    %v3354 = vpop.permute.xlu0 %3353
    %3355 = vrot.lane.b32.xlu0 %v468, 118
    %v3356 = vpop.permute.xlu0 %3355
    %3357 = vrot.lane.b32.xlu0 %v469, 118
    %v3358 = vpop.permute.xlu0 %3357
    %3359 = vrot.lane.b32.xlu0 %v470, 118
    %v3360 = vpop.permute.xlu0 %3359
    %3361 = vrot.lane.b32.xlu0 %v471, 118
    %v3362 = vpop.permute.xlu0 %3361
    %3363 = vrot.lane.b32.xlu0 %v472, 118
    %v3364 = vpop.permute.xlu0 %3363
    %3365 = vrot.lane.b32.xlu0 %v473, 118
    %v3366 = vpop.permute.xlu0 %3365
    %3367 = vrot.lane.b32.xlu0 %v474, 118
    %v3368 = vpop.permute.xlu0 %3367
    %3369 = vrot.lane.b32.xlu0 %v475, 118
    %v3370 = vpop.permute.xlu0 %3369
    %3371 = vrot.lane.b32.xlu0 %v476, 118
    %v3372 = vpop.permute.xlu0 %3371
    %3373 = vrot.lane.b32.xlu0 %v477, 118
    %v3374 = vpop.permute.xlu0 %3373
    %3375 = vrot.lane.b32.xlu0 %v478, 118
    %v3376 = vpop.permute.xlu0 %3375
    %3377 = vrot.lane.b32.xlu0 %v479, 118
    %v3378 = vpop.permute.xlu0 %3377
    %3379 = vrot.lane.b32.xlu0 %v480, 118
    %v3380 = vpop.permute.xlu0 %3379
    %3381 = vrot.lane.b32.xlu0 %v481, 118
    %v3382 = vpop.permute.xlu0 %3381
    %3383 = vrot.lane.b32.xlu0 %v482, 118
    %v3384 = vpop.permute.xlu0 %3383
    %3385 = vrot.lane.b32.xlu0 %v483, 118
    %v3386 = vpop.permute.xlu0 %3385
    %3387 = vrot.lane.b32.xlu0 %v484, 118
    %v3388 = vpop.permute.xlu0 %3387
    %3389 = vrot.lane.b32.xlu0 %v485, 118
    %v3390 = vpop.permute.xlu0 %3389
    %3391 = vrot.lane.b32.xlu0 %v486, 118
    %v3392 = vpop.permute.xlu0 %3391
    %3393 = vrot.lane.b32.xlu0 %v487, 118
    %v3394 = vpop.permute.xlu0 %3393
    %3395 = vrot.lane.b32.xlu0 %v488, 118
    %v3396 = vpop.permute.xlu0 %3395
    %3397 = vrot.lane.b32.xlu0 %v489, 118
    %v3398 = vpop.permute.xlu0 %3397
    %3399 = vrot.lane.b32.xlu0 %v490, 118
    %v3400 = vpop.permute.xlu0 %3399
    %3401 = vrot.lane.b32.xlu0 %v491, 118
    %v3402 = vpop.permute.xlu0 %3401
    %3403 = vrot.lane.b32.xlu0 %v492, 118
    %v3404 = vpop.permute.xlu0 %3403
    %3405 = vrot.lane.b32.xlu0 %v493, 118
    %v3406 = vpop.permute.xlu0 %3405
    %3407 = vrot.lane.b32.xlu0 %v494, 118
    %v3408 = vpop.permute.xlu0 %3407
    %3409 = vrot.lane.b32.xlu0 %v495, 118
    %v3410 = vpop.permute.xlu0 %3409
    %3411 = vrot.lane.b32.xlu0 %v496, 118
    %v3412 = vpop.permute.xlu0 %3411
    %3413 = vrot.lane.b32.xlu0 %v497, 118
    %v3414 = vpop.permute.xlu0 %3413
    %3415 = vrot.lane.b32.xlu0 %v498, 118
    %v3416 = vpop.permute.xlu0 %3415
    %3417 = vrot.lane.b32.xlu0 %v499, 118
    %v3418 = vpop.permute.xlu0 %3417
    %3419 = vrot.lane.b32.xlu0 %v500, 118
    %v3420 = vpop.permute.xlu0 %3419
    %3421 = vrot.lane.b32.xlu0 %v501, 118
    %v3422 = vpop.permute.xlu0 %3421
    %3423 = vrot.lane.b32.xlu0 %v502, 118
    %v3424 = vpop.permute.xlu0 %3423
    %3425 = vrot.lane.b32.xlu0 %v503, 118
    %v3426 = vpop.permute.xlu0 %3425
    %3427 = vrot.lane.b32.xlu0 %v504, 118
    %v3428 = vpop.permute.xlu0 %3427
    %3429 = vrot.lane.b32.xlu0 %v505, 118
    %v3430 = vpop.permute.xlu0 %3429
    %3431 = vrot.lane.b32.xlu0 %v506, 118
    %v3432 = vpop.permute.xlu0 %3431
    %3433 = vrot.lane.b32.xlu0 %v507, 118
    %v3434 = vpop.permute.xlu0 %3433
    %3435 = vrot.lane.b32.xlu0 %v508, 118
    %v3436 = vpop.permute.xlu0 %3435
    %3437 = vrot.lane.b32.xlu0 %v509, 118
    %v3438 = vpop.permute.xlu0 %3437
    %3439 = vrot.lane.b32.xlu0 %v510, 118
    %v3440 = vpop.permute.xlu0 %3439
    %3441 = vrot.lane.b32.xlu0 %v511, 118
    %v3442 = vpop.permute.xlu0 %3441
    %3443 = vrot.lane.b32.xlu0 %v512, 118
    %v3444 = vpop.permute.xlu0 %3443
    %3445 = vrot.lane.b32.xlu0 %v513, 118
    %v3446 = vpop.permute.xlu0 %3445
    %3447 = vrot.lane.b32.xlu0 %v514, 118
    %v3448 = vpop.permute.xlu0 %3447
    %3449 = vrot.lane.b32.xlu0 %v515, 118
    %v3450 = vpop.permute.xlu0 %3449
    %3451 = vrot.lane.b32.xlu0 %v516, 118
    %v3452 = vpop.permute.xlu0 %3451
    %3453 = vrot.lane.b32.xlu0 %v517, 118
    %v3454 = vpop.permute.xlu0 %3453
    %3455 = vrot.lane.b32.xlu0 %v518, 118
    %v3456 = vpop.permute.xlu0 %3455
    %3457 = vrot.lane.b32.xlu0 %v519, 118
    %v3458 = vpop.permute.xlu0 %3457
    %3459 = vrot.lane.b32.xlu0 %v520, 118
    %v3460 = vpop.permute.xlu0 %3459
    %v3521 = vadd.f32 %v3221, %v3342
    %v3522 = vadd.f32 %v3222, %v3344
    %v3523 = vadd.f32 %v3223, %v3346
    %v3524 = vadd.f32 %v3224, %v3348
    %v3525 = vadd.f32 %v3225, %v3350
    %v3526 = vadd.f32 %v3226, %v3352
    %v3527 = vadd.f32 %v3227, %v3354
    %v3528 = vadd.f32 %v3228, %v3356
    %v3529 = vadd.f32 %v3229, %v3358
    %v3530 = vadd.f32 %v3230, %v3360
    %v3531 = vadd.f32 %v3231, %v3362
    %v3532 = vadd.f32 %v3232, %v3364
    %v3533 = vadd.f32 %v3233, %v3366
    %v3534 = vadd.f32 %v3234, %v3368
    %v3535 = vadd.f32 %v3235, %v3370
    %v3536 = vadd.f32 %v3236, %v3372
    %v3537 = vadd.f32 %v3237, %v3374
    %v3538 = vadd.f32 %v3238, %v3376
    %v3539 = vadd.f32 %v3239, %v3378
    %v3540 = vadd.f32 %v3240, %v3380
    %v3541 = vadd.f32 %v3241, %v3382
    %v3542 = vadd.f32 %v3242, %v3384
    %v3543 = vadd.f32 %v3243, %v3386
    %v3544 = vadd.f32 %v3244, %v3388
    %v3545 = vadd.f32 %v3245, %v3390
    %v3546 = vadd.f32 %v3246, %v3392
    %v3547 = vadd.f32 %v3247, %v3394
    %v3548 = vadd.f32 %v3248, %v3396
    %v3549 = vadd.f32 %v3249, %v3398
    %v3550 = vadd.f32 %v3250, %v3400
    %v3551 = vadd.f32 %v3251, %v3402
    %v3552 = vadd.f32 %v3252, %v3404
    %v3553 = vadd.f32 %v3253, %v3406
    %v3554 = vadd.f32 %v3254, %v3408
    %v3555 = vadd.f32 %v3255, %v3410
    %v3556 = vadd.f32 %v3256, %v3412
    %v3557 = vadd.f32 %v3257, %v3414
    %v3558 = vadd.f32 %v3258, %v3416
    %v3559 = vadd.f32 %v3259, %v3418
    %v3560 = vadd.f32 %v3260, %v3420
    %v3561 = vadd.f32 %v3261, %v3422
    %v3562 = vadd.f32 %v3262, %v3424
    %v3563 = vadd.f32 %v3263, %v3426
    %v3564 = vadd.f32 %v3264, %v3428
    %v3565 = vadd.f32 %v3265, %v3430
    %v3566 = vadd.f32 %v3266, %v3432
    %v3567 = vadd.f32 %v3267, %v3434
    %v3568 = vadd.f32 %v3268, %v3436
    %v3569 = vadd.f32 %v3269, %v3438
    %v3570 = vadd.f32 %v3270, %v3440
    %v3571 = vadd.f32 %v3271, %v3442
    %v3572 = vadd.f32 %v3272, %v3444
    %v3573 = vadd.f32 %v3273, %v3446
    %v3574 = vadd.f32 %v3274, %v3448
    %v3575 = vadd.f32 %v3275, %v3450
    %v3576 = vadd.f32 %v3276, %v3452
    %v3577 = vadd.f32 %v3277, %v3454
    %v3578 = vadd.f32 %v3278, %v3456
    %v3579 = vadd.f32 %v3279, %v3458
    %v3580 = vadd.f32 %v3280, %v3460
    %vm3641 = vcmask 1044480
    %v3642 = vrot.slane %v3521, 3
    %v3643 = vrot.slane %v3522, 3
    %v3644 = vsel %vm3641, %v3642, %v3643
    %v3645 = vrot.slane %v3523, 3
    %v3646 = vrot.slane %v3524, 3
    %v3647 = vsel %vm3641, %v3645, %v3646
    %v3648 = vrot.slane %v3525, 3
    %v3649 = vrot.slane %v3526, 3
    %v3650 = vsel %vm3641, %v3648, %v3649
    %v3651 = vrot.slane %v3527, 3
    %v3652 = vrot.slane %v3528, 3
    %v3653 = vsel %vm3641, %v3651, %v3652
    %v3654 = vrot.slane %v3529, 3
    %v3655 = vrot.slane %v3530, 3
    %v3656 = vsel %vm3641, %v3654, %v3655
    %v3657 = vrot.slane %v3531, 3
    %v3658 = vrot.slane %v3532, 3
    %v3659 = vsel %vm3641, %v3657, %v3658
    %v3660 = vrot.slane %v3533, 3
    %v3661 = vrot.slane %v3534, 3
    %v3662 = vsel %vm3641, %v3660, %v3661
    %v3663 = vrot.slane %v3535, 3
    %v3664 = vrot.slane %v3536, 3
    %v3665 = vsel %vm3641, %v3663, %v3664
    %v3666 = vrot.slane %v3537, 3
    %v3667 = vrot.slane %v3538, 3
    %v3668 = vsel %vm3641, %v3666, %v3667
    %v3669 = vrot.slane %v3539, 3
    %v3670 = vrot.slane %v3540, 3
    %v3671 = vsel %vm3641, %v3669, %v3670
    %v3672 = vrot.slane %v3541, 3
    %v3673 = vrot.slane %v3542, 3
    %v3674 = vsel %vm3641, %v3672, %v3673
    %v3675 = vrot.slane %v3543, 3
    %v3676 = vrot.slane %v3544, 3
    %v3677 = vsel %vm3641, %v3675, %v3676
    %v3678 = vrot.slane %v3545, 3
    %v3679 = vrot.slane %v3546, 3
    %v3680 = vsel %vm3641, %v3678, %v3679
    %v3681 = vrot.slane %v3547, 3
    %v3682 = vrot.slane %v3548, 3
    %v3683 = vsel %vm3641, %v3681, %v3682
    %v3684 = vrot.slane %v3549, 3
    %v3685 = vrot.slane %v3550, 3
    %v3686 = vsel %vm3641, %v3684, %v3685
    %v3687 = vrot.slane %v3551, 3
    %v3688 = vrot.slane %v3552, 3
    %v3689 = vsel %vm3641, %v3687, %v3688
    %v3690 = vrot.slane %v3553, 3
    %v3691 = vrot.slane %v3554, 3
    %v3692 = vsel %vm3641, %v3690, %v3691
    %v3693 = vrot.slane %v3555, 3
    %v3694 = vrot.slane %v3556, 3
    %v3695 = vsel %vm3641, %v3693, %v3694
    %v3696 = vrot.slane %v3557, 3
    %v3697 = vrot.slane %v3558, 3
    %v3698 = vsel %vm3641, %v3696, %v3697
    %v3699 = vrot.slane %v3559, 3
    %v3700 = vrot.slane %v3560, 3
    %v3701 = vsel %vm3641, %v3699, %v3700
    %v3702 = vrot.slane %v3561, 3
    %v3703 = vrot.slane %v3562, 3
    %v3704 = vsel %vm3641, %v3702, %v3703
    %v3705 = vrot.slane %v3563, 3
    %v3706 = vrot.slane %v3564, 3
    %v3707 = vsel %vm3641, %v3705, %v3706
    %v3708 = vrot.slane %v3565, 3
    %v3709 = vrot.slane %v3566, 3
    %v3710 = vsel %vm3641, %v3708, %v3709
    %v3711 = vrot.slane %v3567, 3
    %v3712 = vrot.slane %v3568, 3
    %v3713 = vsel %vm3641, %v3711, %v3712
    %v3714 = vrot.slane %v3569, 3
    %v3715 = vrot.slane %v3570, 3
    %v3716 = vsel %vm3641, %v3714, %v3715
    %v3717 = vrot.slane %v3571, 3
    %v3718 = vrot.slane %v3572, 3
    %v3719 = vsel %vm3641, %v3717, %v3718
    %v3720 = vrot.slane %v3573, 3
    %v3721 = vrot.slane %v3574, 3
    %v3722 = vsel %vm3641, %v3720, %v3721
    %v3723 = vrot.slane %v3575, 3
    %v3724 = vrot.slane %v3576, 3
    %v3725 = vsel %vm3641, %v3723, %v3724
    %v3726 = vrot.slane %v3577, 3
    %v3727 = vrot.slane %v3578, 3
    %v3728 = vsel %vm3641, %v3726, %v3727
    %v3729 = vrot.slane %v3579, 3
    %v3730 = vrot.slane %v3580, 3
    %v3731 = vsel %vm3641, %v3729, %v3730
    %v3822 = vsel %vm3641, 0.0, %v3642
    %v3823 = vsel %vm3641, 0.0, %v3645
    %v3824 = vsel %vm3641, 0.0, %v3648
    %v3825 = vsel %vm3641, 0.0, %v3651
    %v3826 = vsel %vm3641, 0.0, %v3654
    %v3827 = vsel %vm3641, 0.0, %v3657
    %v3828 = vsel %vm3641, 0.0, %v3660
    %v3829 = vsel %vm3641, 0.0, %v3663
    %v3830 = vsel %vm3641, 0.0, %v3666
    %v3831 = vsel %vm3641, 0.0, %v3669
    %v3832 = vsel %vm3641, 0.0, %v3672
    %v3833 = vsel %vm3641, 0.0, %v3675
    %v3834 = vsel %vm3641, 0.0, %v3678
    %v3835 = vsel %vm3641, 0.0, %v3681
    %v3836 = vsel %vm3641, 0.0, %v3684
    %v3837 = vsel %vm3641, 0.0, %v3687
    %v3838 = vsel %vm3641, 0.0, %v3690
    %v3839 = vsel %vm3641, 0.0, %v3693
    %v3840 = vsel %vm3641, 0.0, %v3696
    %v3841 = vsel %vm3641, 0.0, %v3699
    %v3842 = vsel %vm3641, 0.0, %v3702
    %v3843 = vsel %vm3641, 0.0, %v3705
    %v3844 = vsel %vm3641, 0.0, %v3708
    %v3845 = vsel %vm3641, 0.0, %v3711
    %v3846 = vsel %vm3641, 0.0, %v3714
    %v3847 = vsel %vm3641, 0.0, %v3717
    %v3848 = vsel %vm3641, 0.0, %v3720
    %v3849 = vsel %vm3641, 0.0, %v3723
    %v3850 = vsel %vm3641, 0.0, %v3726
    %v3851 = vsel %vm3641, 0.0, %v3729
    %v3852 = vsel %vm3641, %v3643, 0.0
    %v3853 = vsel %vm3641, %v3646, 0.0
    %v3854 = vsel %vm3641, %v3649, 0.0
    %v3855 = vsel %vm3641, %v3652, 0.0
    %v3856 = vsel %vm3641, %v3655, 0.0
    %v3857 = vsel %vm3641, %v3658, 0.0
    %v3858 = vsel %vm3641, %v3661, 0.0
    %v3859 = vsel %vm3641, %v3664, 0.0
    %v3860 = vsel %vm3641, %v3667, 0.0
    %v3861 = vsel %vm3641, %v3670, 0.0
    %v3862 = vsel %vm3641, %v3673, 0.0
    %v3863 = vsel %vm3641, %v3676, 0.0
    %v3864 = vsel %vm3641, %v3679, 0.0
    %v3865 = vsel %vm3641, %v3682, 0.0
    %v3866 = vsel %vm3641, %v3685, 0.0
    %v3867 = vsel %vm3641, %v3688, 0.0
    %v3868 = vsel %vm3641, %v3691, 0.0
    %v3869 = vsel %vm3641, %v3694, 0.0
    %v3870 = vsel %vm3641, %v3697, 0.0
    %v3871 = vsel %vm3641, %v3700, 0.0
    %v3872 = vsel %vm3641, %v3703, 0.0
    %v3873 = vsel %vm3641, %v3706, 0.0
    %v3874 = vsel %vm3641, %v3709, 0.0
    %v3875 = vsel %vm3641, %v3712, 0.0
    %v3876 = vsel %vm3641, %v3715, 0.0
    %v3877 = vsel %vm3641, %v3718, 0.0
    %v3878 = vsel %vm3641, %v3721, 0.0
    %v3879 = vsel %vm3641, %v3724, 0.0
    %v3880 = vsel %vm3641, %v3727, 0.0
    %v3881 = vsel %vm3641, %v3730, 0.0
    %v3882 = vmul.f32 %v3822, 0.0010283801
    %v3883 = vmul.f32 %v3644, 0.0010283801
    %v3884 = vmul.f32 %v3823, 0.0010283801
    %v3885 = vmul.f32 %v3647, 0.0010283801
    %v3886 = vmul.f32 %v3824, 0.0010283801
    %v3887 = vmul.f32 %v3650, 0.0010283801
    %v3888 = vmul.f32 %v3825, 0.0010283801
    %v3889 = vmul.f32 %v3653, 0.0010283801
    %v3890 = vmul.f32 %v3826, 0.0010283801
    %v3891 = vmul.f32 %v3656, 0.0010283801
    %v3892 = vmul.f32 %v3827, 0.0010283801
    %v3893 = vmul.f32 %v3659, 0.0010283801
    %v3894 = vmul.f32 %v3828, 0.0010283801
    %v3895 = vmul.f32 %v3662, 0.0010283801
    %v3896 = vmul.f32 %v3829, 0.0010283801
    %v3897 = vmul.f32 %v3665, 0.0010283801
    %v3898 = vmul.f32 %v3830, 0.0010283801
    %v3899 = vmul.f32 %v3668, 0.0010283801
    %v3900 = vmul.f32 %v3831, 0.0010283801
    %v3901 = vmul.f32 %v3671, 0.0010283801
    %v3902 = vmul.f32 %v3832, 0.0010283801
    %v3903 = vmul.f32 %v3674, 0.0010283801
    %v3904 = vmul.f32 %v3833, 0.0010283801
    %v3905 = vmul.f32 %v3677, 0.0010283801
    %v3906 = vmul.f32 %v3834, 0.0010283801
    %v3907 = vmul.f32 %v3680, 0.0010283801
    %v3908 = vmul.f32 %v3835, 0.0010283801
    %v3909 = vmul.f32 %v3683, 0.0010283801
    %v3910 = vmul.f32 %v3836, 0.0010283801
    %v3911 = vmul.f32 %v3686, 0.0010283801
    %v3912 = vmul.f32 %v3837, 0.0010283801
    %v3913 = vmul.f32 %v3689, 0.0010283801
    %v3914 = vmul.f32 %v3838, 0.0010283801
    %v3915 = vmul.f32 %v3692, 0.0010283801
    %v3916 = vmul.f32 %v3839, 0.0010283801
    %v3917 = vmul.f32 %v3695, 0.0010283801
    %v3918 = vmul.f32 %v3840, 0.0010283801
    %v3919 = vmul.f32 %v3698, 0.0010283801
    %v3920 = vmul.f32 %v3841, 0.0010283801
    %v3921 = vmul.f32 %v3701, 0.0010283801
    %v3922 = vmul.f32 %v3842, 0.0010283801
    %v3923 = vmul.f32 %v3704, 0.0010283801
    %v3924 = vmul.f32 %v3843, 0.0010283801
    %v3925 = vmul.f32 %v3707, 0.0010283801
    %v3926 = vmul.f32 %v3844, 0.0010283801
    %v3927 = vmul.f32 %v3710, 0.0010283801
    %v3928 = vmul.f32 %v3845, 0.0010283801
    %v3929 = vmul.f32 %v3713, 0.0010283801
    %v3930 = vmul.f32 %v3846, 0.0010283801
    %v3931 = vmul.f32 %v3716, 0.0010283801
    %v3932 = vmul.f32 %v3847, 0.0010283801
    %v3933 = vmul.f32 %v3719, 0.0010283801
    %v3934 = vmul.f32 %v3848, 0.0010283801
    %v3935 = vmul.f32 %v3722, 0.0010283801
    %v3936 = vmul.f32 %v3849, 0.0010283801
    %v3937 = vmul.f32 %v3725, 0.0010283801
    %v3938 = vmul.f32 %v3850, 0.0010283801
    %v3939 = vmul.f32 %v3728, 0.0010283801
    %v3940 = vmul.f32 %v3851, 0.0010283801
    %v3941 = vmul.f32 %v3731, 0.0010283801
    %v3942 = vmul.f32 %v3822, 0.007598758
    %v3943 = vmul.f32 %v3644, 0.007598758
    %v3944 = vmul.f32 %v3852, 0.007598758
    %v3945 = vmul.f32 %v3823, 0.007598758
    %v3946 = vmul.f32 %v3647, 0.007598758
    %v3947 = vmul.f32 %v3853, 0.007598758
    %v3948 = vmul.f32 %v3824, 0.007598758
    %v3949 = vmul.f32 %v3650, 0.007598758
    %v3950 = vmul.f32 %v3854, 0.007598758
    %v3951 = vmul.f32 %v3825, 0.007598758
    %v3952 = vmul.f32 %v3653, 0.007598758
    %v3953 = vmul.f32 %v3855, 0.007598758
    %v3954 = vmul.f32 %v3826, 0.007598758
    %v3955 = vmul.f32 %v3656, 0.007598758
    %v3956 = vmul.f32 %v3856, 0.007598758
    %v3957 = vmul.f32 %v3827, 0.007598758
    %v3958 = vmul.f32 %v3659, 0.007598758
    %v3959 = vmul.f32 %v3857, 0.007598758
    %v3960 = vmul.f32 %v3828, 0.007598758
    %v3961 = vmul.f32 %v3662, 0.007598758
    %v3962 = vmul.f32 %v3858, 0.007598758
    %v3963 = vmul.f32 %v3829, 0.007598758
    %v3964 = vmul.f32 %v3665, 0.007598758
    %v3965 = vmul.f32 %v3859, 0.007598758
    %v3966 = vmul.f32 %v3830, 0.007598758
    %v3967 = vmul.f32 %v3668, 0.007598758
    %v3968 = vmul.f32 %v3860, 0.007598758
    %v3969 = vmul.f32 %v3831, 0.007598758
    %v3970 = vmul.f32 %v3671, 0.007598758
    %v3971 = vmul.f32 %v3861, 0.007598758
    %v3972 = vmul.f32 %v3832, 0.007598758
    %v3973 = vmul.f32 %v3674, 0.007598758
    %v3974 = vmul.f32 %v3862, 0.007598758
    %v3975 = vmul.f32 %v3833, 0.007598758
    %v3976 = vmul.f32 %v3677, 0.007598758
    %v3977 = vmul.f32 %v3863, 0.007598758
    %v3978 = vmul.f32 %v3834, 0.007598758
    %v3979 = vmul.f32 %v3680, 0.007598758
    %v3980 = vmul.f32 %v3864, 0.007598758
    %v3981 = vmul.f32 %v3835, 0.007598758
    %v3982 = vmul.f32 %v3683, 0.007598758
    %v3983 = vmul.f32 %v3865, 0.007598758
    %v3984 = vmul.f32 %v3836, 0.007598758
    %v3985 = vmul.f32 %v3686, 0.007598758
    %v3986 = vmul.f32 %v3866, 0.007598758
    %v3987 = vmul.f32 %v3837, 0.007598758
    %v3988 = vmul.f32 %v3689, 0.007598758
    %v3989 = vmul.f32 %v3867, 0.007598758
    %v3990 = vmul.f32 %v3838, 0.007598758
    %v3991 = vmul.f32 %v3692, 0.007598758
    %v3992 = vmul.f32 %v3868, 0.007598758
    %v3993 = vmul.f32 %v3839, 0.007598758
    %v3994 = vmul.f32 %v3695, 0.007598758
    %v3995 = vmul.f32 %v3869, 0.007598758
    %v3996 = vmul.f32 %v3840, 0.007598758
    %v3997 = vmul.f32 %v3698, 0.007598758
    %v3998 = vmul.f32 %v3870, 0.007598758
    %v3999 = vmul.f32 %v3841, 0.007598758
    %v4000 = vmul.f32 %v3701, 0.007598758
    %v4001 = vmul.f32 %v3871, 0.007598758
    %v4002 = vmul.f32 %v3842, 0.007598758
    %v4003 = vmul.f32 %v3704, 0.007598758
    %v4004 = vmul.f32 %v3872, 0.007598758
    %v4005 = vmul.f32 %v3843, 0.007598758
    %v4006 = vmul.f32 %v3707, 0.007598758
    %v4007 = vmul.f32 %v3873, 0.007598758
    %v4008 = vmul.f32 %v3844, 0.007598758
    %v4009 = vmul.f32 %v3710, 0.007598758
    %v4010 = vmul.f32 %v3874, 0.007598758
    %v4011 = vmul.f32 %v3845, 0.007598758
    %v4012 = vmul.f32 %v3713, 0.007598758
    %v4013 = vmul.f32 %v3875, 0.007598758
    %v4014 = vmul.f32 %v3846, 0.007598758
    %v4015 = vmul.f32 %v3716, 0.007598758
    %v4016 = vmul.f32 %v3876, 0.007598758
    %v4017 = vmul.f32 %v3847, 0.007598758
    %v4018 = vmul.f32 %v3719, 0.007598758
    %v4019 = vmul.f32 %v3877, 0.007598758
    %v4020 = vmul.f32 %v3848, 0.007598758
    %v4021 = vmul.f32 %v3722, 0.007598758
    %v4022 = vmul.f32 %v3878, 0.007598758
    %v4023 = vmul.f32 %v3849, 0.007598758
    %v4024 = vmul.f32 %v3725, 0.007598758
    %v4025 = vmul.f32 %v3879, 0.007598758
    %v4026 = vmul.f32 %v3850, 0.007598758
    %v4027 = vmul.f32 %v3728, 0.007598758
    %v4028 = vmul.f32 %v3880, 0.007598758
    %v4029 = vmul.f32 %v3851, 0.007598758
    %v4030 = vmul.f32 %v3731, 0.007598758
    %v4031 = vmul.f32 %v3881, 0.007598758
    %vm4122 = vcmask 1046528
    %v4123 = vrot.slane %v3942, 1
    %v4124 = vrot.slane %v3943, 1
    %v4125 = vsel %vm4122, %v4123, %v4124
    %v4126 = vrot.slane %v3944, 1
    %v4127 = vsel %vm4122, %v4124, %v4126
    %v4128 = vrot.slane %v3945, 1
    %v4129 = vrot.slane %v3946, 1
    %v4130 = vsel %vm4122, %v4128, %v4129
    %v4131 = vrot.slane %v3947, 1
    %v4132 = vsel %vm4122, %v4129, %v4131
    %v4133 = vrot.slane %v3948, 1
    %v4134 = vrot.slane %v3949, 1
    %v4135 = vsel %vm4122, %v4133, %v4134
    %v4136 = vrot.slane %v3950, 1
    %v4137 = vsel %vm4122, %v4134, %v4136
    %v4138 = vrot.slane %v3951, 1
    %v4139 = vrot.slane %v3952, 1
    %v4140 = vsel %vm4122, %v4138, %v4139
    %v4141 = vrot.slane %v3953, 1
    %v4142 = vsel %vm4122, %v4139, %v4141
    %v4143 = vrot.slane %v3954, 1
    %v4144 = vrot.slane %v3955, 1
    %v4145 = vsel %vm4122, %v4143, %v4144
    %v4146 = vrot.slane %v3956, 1
    %v4147 = vsel %vm4122, %v4144, %v4146
    %v4148 = vrot.slane %v3957, 1
    %v4149 = vrot.slane %v3958, 1
    %v4150 = vsel %vm4122, %v4148, %v4149
    %v4151 = vrot.slane %v3959, 1
    %v4152 = vsel %vm4122, %v4149, %v4151
    %v4153 = vrot.slane %v3960, 1
    %v4154 = vrot.slane %v3961, 1
    %v4155 = vsel %vm4122, %v4153, %v4154
    %v4156 = vrot.slane %v3962, 1
    %v4157 = vsel %vm4122, %v4154, %v4156
    %v4158 = vrot.slane %v3963, 1
    %v4159 = vrot.slane %v3964, 1
    %v4160 = vsel %vm4122, %v4158, %v4159
    %v4161 = vrot.slane %v3965, 1
    %v4162 = vsel %vm4122, %v4159, %v4161
    %v4163 = vrot.slane %v3966, 1
    %v4164 = vrot.slane %v3967, 1
    %v4165 = vsel %vm4122, %v4163, %v4164
    %v4166 = vrot.slane %v3968, 1
    %v4167 = vsel %vm4122, %v4164, %v4166
    %v4168 = vrot.slane %v3969, 1
    %v4169 = vrot.slane %v3970, 1
    %v4170 = vsel %vm4122, %v4168, %v4169
    %v4171 = vrot.slane %v3971, 1
    %v4172 = vsel %vm4122, %v4169, %v4171
    %v4173 = vrot.slane %v3972, 1
    %v4174 = vrot.slane %v3973, 1
    %v4175 = vsel %vm4122, %v4173, %v4174
    %v4176 = vrot.slane %v3974, 1
    %v4177 = vsel %vm4122, %v4174, %v4176
    %v4178 = vrot.slane %v3975, 1
    %v4179 = vrot.slane %v3976, 1
    %v4180 = vsel %vm4122, %v4178, %v4179
    %v4181 = vrot.slane %v3977, 1
    %v4182 = vsel %vm4122, %v4179, %v4181
    %v4183 = vrot.slane %v3978, 1
    %v4184 = vrot.slane %v3979, 1
    %v4185 = vsel %vm4122, %v4183, %v4184
    %v4186 = vrot.slane %v3980, 1
    %v4187 = vsel %vm4122, %v4184, %v4186
    %v4188 = vrot.slane %v3981, 1
    %v4189 = vrot.slane %v3982, 1
    %v4190 = vsel %vm4122, %v4188, %v4189
    %v4191 = vrot.slane %v3983, 1
    %v4192 = vsel %vm4122, %v4189, %v4191
    %v4193 = vrot.slane %v3984, 1
    %v4194 = vrot.slane %v3985, 1
    %v4195 = vsel %vm4122, %v4193, %v4194
    %v4196 = vrot.slane %v3986, 1
    %v4197 = vsel %vm4122, %v4194, %v4196
    %v4198 = vrot.slane %v3987, 1
    %v4199 = vrot.slane %v3988, 1
    %v4200 = vsel %vm4122, %v4198, %v4199
    %v4201 = vrot.slane %v3989, 1
    %v4202 = vsel %vm4122, %v4199, %v4201
    %v4203 = vrot.slane %v3990, 1
    %v4204 = vrot.slane %v3991, 1
    %v4205 = vsel %vm4122, %v4203, %v4204
    %v4206 = vrot.slane %v3992, 1
    %v4207 = vsel %vm4122, %v4204, %v4206
    %v4208 = vrot.slane %v3993, 1
    %v4209 = vrot.slane %v3994, 1
    %v4210 = vsel %vm4122, %v4208, %v4209
    %v4211 = vrot.slane %v3995, 1
    %v4212 = vsel %vm4122, %v4209, %v4211
    %v4213 = vrot.slane %v3996, 1
    %v4214 = vrot.slane %v3997, 1
    %v4215 = vsel %vm4122, %v4213, %v4214
    %v4216 = vrot.slane %v3998, 1
    %v4217 = vsel %vm4122, %v4214, %v4216
    %v4218 = vrot.slane %v3999, 1
    %v4219 = vrot.slane %v4000, 1
    %v4220 = vsel %vm4122, %v4218, %v4219
    %v4221 = vrot.slane %v4001, 1
    %v4222 = vsel %vm4122, %v4219, %v4221
    %v4223 = vrot.slane %v4002, 1
    %v4224 = vrot.slane %v4003, 1
    %v4225 = vsel %vm4122, %v4223, %v4224
    %v4226 = vrot.slane %v4004, 1
    %v4227 = vsel %vm4122, %v4224, %v4226
    %v4228 = vrot.slane %v4005, 1
    %v4229 = vrot.slane %v4006, 1
    %v4230 = vsel %vm4122, %v4228, %v4229
    %v4231 = vrot.slane %v4007, 1
    %v4232 = vsel %vm4122, %v4229, %v4231
    %v4233 = vrot.slane %v4008, 1
    %v4234 = vrot.slane %v4009, 1
    %v4235 = vsel %vm4122, %v4233, %v4234
    %v4236 = vrot.slane %v4010, 1
    %v4237 = vsel %vm4122, %v4234, %v4236
    %v4238 = vrot.slane %v4011, 1
    %v4239 = vrot.slane %v4012, 1
    %v4240 = vsel %vm4122, %v4238, %v4239
    %v4241 = vrot.slane %v4013, 1
    %v4242 = vsel %vm4122, %v4239, %v4241
    %v4243 = vrot.slane %v4014, 1
    %v4244 = vrot.slane %v4015, 1
    %v4245 = vsel %vm4122, %v4243, %v4244
    %v4246 = vrot.slane %v4016, 1
    %v4247 = vsel %vm4122, %v4244, %v4246
    %v4248 = vrot.slane %v4017, 1
    %v4249 = vrot.slane %v4018, 1
    %v4250 = vsel %vm4122, %v4248, %v4249
    %v4251 = vrot.slane %v4019, 1
    %v4252 = vsel %vm4122, %v4249, %v4251
    %v4253 = vrot.slane %v4020, 1
    %v4254 = vrot.slane %v4021, 1
    %v4255 = vsel %vm4122, %v4253, %v4254
    %v4256 = vrot.slane %v4022, 1
    %v4257 = vsel %vm4122, %v4254, %v4256
    %v4258 = vrot.slane %v4023, 1
    %v4259 = vrot.slane %v4024, 1
    %v4260 = vsel %vm4122, %v4258, %v4259
    %v4261 = vrot.slane %v4025, 1
    %v4262 = vsel %vm4122, %v4259, %v4261
    %v4263 = vrot.slane %v4026, 1
    %v4264 = vrot.slane %v4027, 1
    %v4265 = vsel %vm4122, %v4263, %v4264
    %v4266 = vrot.slane %v4028, 1
    %v4267 = vsel %vm4122, %v4264, %v4266
    %v4268 = vrot.slane %v4029, 1
    %v4269 = vrot.slane %v4030, 1
    %v4270 = vsel %vm4122, %v4268, %v4269
    %v4271 = vrot.slane %v4031, 1
    %v4272 = vsel %vm4122, %v4269, %v4271
    %v4333 = vadd.f32 %v3882, %v4125
    %v4334 = vadd.f32 %v3883, %v4127
    %v4335 = vadd.f32 %v3884, %v4130
    %v4336 = vadd.f32 %v3885, %v4132
    %v4337 = vadd.f32 %v3886, %v4135
    %v4338 = vadd.f32 %v3887, %v4137
    %v4339 = vadd.f32 %v3888, %v4140
    %v4340 = vadd.f32 %v3889, %v4142
    %v4341 = vadd.f32 %v3890, %v4145
    %v4342 = vadd.f32 %v3891, %v4147
    %v4343 = vadd.f32 %v3892, %v4150
    %v4344 = vadd.f32 %v3893, %v4152
    %v4345 = vadd.f32 %v3894, %v4155
    %v4346 = vadd.f32 %v3895, %v4157
    %v4347 = vadd.f32 %v3896, %v4160
    %v4348 = vadd.f32 %v3897, %v4162
    %v4349 = vadd.f32 %v3898, %v4165
    %v4350 = vadd.f32 %v3899, %v4167
    %v4351 = vadd.f32 %v3900, %v4170
    %v4352 = vadd.f32 %v3901, %v4172
    %v4353 = vadd.f32 %v3902, %v4175
    %v4354 = vadd.f32 %v3903, %v4177
    %v4355 = vadd.f32 %v3904, %v4180
    %v4356 = vadd.f32 %v3905, %v4182
    %v4357 = vadd.f32 %v3906, %v4185
    %v4358 = vadd.f32 %v3907, %v4187
    %v4359 = vadd.f32 %v3908, %v4190
    %v4360 = vadd.f32 %v3909, %v4192
    %v4361 = vadd.f32 %v3910, %v4195
    %v4362 = vadd.f32 %v3911, %v4197
    %v4363 = vadd.f32 %v3912, %v4200
    %v4364 = vadd.f32 %v3913, %v4202
    %v4365 = vadd.f32 %v3914, %v4205
    %v4366 = vadd.f32 %v3915, %v4207
    %v4367 = vadd.f32 %v3916, %v4210
    %v4368 = vadd.f32 %v3917, %v4212
    %v4369 = vadd.f32 %v3918, %v4215
    %v4370 = vadd.f32 %v3919, %v4217
    %v4371 = vadd.f32 %v3920, %v4220
    %v4372 = vadd.f32 %v3921, %v4222
    %v4373 = vadd.f32 %v3922, %v4225
    %v4374 = vadd.f32 %v3923, %v4227
    %v4375 = vadd.f32 %v3924, %v4230
    %v4376 = vadd.f32 %v3925, %v4232
    %v4377 = vadd.f32 %v3926, %v4235
    %v4378 = vadd.f32 %v3927, %v4237
    %v4379 = vadd.f32 %v3928, %v4240
    %v4380 = vadd.f32 %v3929, %v4242
    %v4381 = vadd.f32 %v3930, %v4245
    %v4382 = vadd.f32 %v3931, %v4247
    %v4383 = vadd.f32 %v3932, %v4250
    %v4384 = vadd.f32 %v3933, %v4252
    %v4385 = vadd.f32 %v3934, %v4255
    %v4386 = vadd.f32 %v3935, %v4257
    %v4387 = vadd.f32 %v3936, %v4260
    %v4388 = vadd.f32 %v3937, %v4262
    %v4389 = vadd.f32 %v3938, %v4265
    %v4390 = vadd.f32 %v3939, %v4267
    %v4391 = vadd.f32 %v3940, %v4270
    %v4392 = vadd.f32 %v3941, %v4272
    %v4393 = vmul.f32 %v3822, 0.036000773
    %v4394 = vmul.f32 %v3644, 0.036000773
    %v4395 = vmul.f32 %v3852, 0.036000773
    %v4396 = vmul.f32 %v3823, 0.036000773
    %v4397 = vmul.f32 %v3647, 0.036000773
    %v4398 = vmul.f32 %v3853, 0.036000773
    %v4399 = vmul.f32 %v3824, 0.036000773
    %v4400 = vmul.f32 %v3650, 0.036000773
    %v4401 = vmul.f32 %v3854, 0.036000773
    %v4402 = vmul.f32 %v3825, 0.036000773
    %v4403 = vmul.f32 %v3653, 0.036000773
    %v4404 = vmul.f32 %v3855, 0.036000773
    %v4405 = vmul.f32 %v3826, 0.036000773
    %v4406 = vmul.f32 %v3656, 0.036000773
    %v4407 = vmul.f32 %v3856, 0.036000773
    %v4408 = vmul.f32 %v3827, 0.036000773
    %v4409 = vmul.f32 %v3659, 0.036000773
    %v4410 = vmul.f32 %v3857, 0.036000773
    %v4411 = vmul.f32 %v3828, 0.036000773
    %v4412 = vmul.f32 %v3662, 0.036000773
    %v4413 = vmul.f32 %v3858, 0.036000773
    %v4414 = vmul.f32 %v3829, 0.036000773
    %v4415 = vmul.f32 %v3665, 0.036000773
    %v4416 = vmul.f32 %v3859, 0.036000773
    %v4417 = vmul.f32 %v3830, 0.036000773
    %v4418 = vmul.f32 %v3668, 0.036000773
    %v4419 = vmul.f32 %v3860, 0.036000773
    %v4420 = vmul.f32 %v3831, 0.036000773
    %v4421 = vmul.f32 %v3671, 0.036000773
    %v4422 = vmul.f32 %v3861, 0.036000773
    %v4423 = vmul.f32 %v3832, 0.036000773
    %v4424 = vmul.f32 %v3674, 0.036000773
    %v4425 = vmul.f32 %v3862, 0.036000773
    %v4426 = vmul.f32 %v3833, 0.036000773
    %v4427 = vmul.f32 %v3677, 0.036000773
    %v4428 = vmul.f32 %v3863, 0.036000773
    %v4429 = vmul.f32 %v3834, 0.036000773
    %v4430 = vmul.f32 %v3680, 0.036000773
    %v4431 = vmul.f32 %v3864, 0.036000773
    %v4432 = vmul.f32 %v3835, 0.036000773
    %v4433 = vmul.f32 %v3683, 0.036000773
    %v4434 = vmul.f32 %v3865, 0.036000773
    %v4435 = vmul.f32 %v3836, 0.036000773
    %v4436 = vmul.f32 %v3686, 0.036000773
    %v4437 = vmul.f32 %v3866, 0.036000773
    %v4438 = vmul.f32 %v3837, 0.036000773
    %v4439 = vmul.f32 %v3689, 0.036000773
    %v4440 = vmul.f32 %v3867, 0.036000773
    %v4441 = vmul.f32 %v3838, 0.036000773
    %v4442 = vmul.f32 %v3692, 0.036000773
    %v4443 = vmul.f32 %v3868, 0.036000773
    %v4444 = vmul.f32 %v3839, 0.036000773
    %v4445 = vmul.f32 %v3695, 0.036000773
    %v4446 = vmul.f32 %v3869, 0.036000773
    %v4447 = vmul.f32 %v3840, 0.036000773
    %v4448 = vmul.f32 %v3698, 0.036000773
    %v4449 = vmul.f32 %v3870, 0.036000773
    %v4450 = vmul.f32 %v3841, 0.036000773
    %v4451 = vmul.f32 %v3701, 0.036000773
    %v4452 = vmul.f32 %v3871, 0.036000773
    %v4453 = vmul.f32 %v3842, 0.036000773
    %v4454 = vmul.f32 %v3704, 0.036000773
    %v4455 = vmul.f32 %v3872, 0.036000773
    %v4456 = vmul.f32 %v3843, 0.036000773
    %v4457 = vmul.f32 %v3707, 0.036000773
    %v4458 = vmul.f32 %v3873, 0.036000773
    %v4459 = vmul.f32 %v3844, 0.036000773
    %v4460 = vmul.f32 %v3710, 0.036000773
    %v4461 = vmul.f32 %v3874, 0.036000773
    %v4462 = vmul.f32 %v3845, 0.036000773
    %v4463 = vmul.f32 %v3713, 0.036000773
    %v4464 = vmul.f32 %v3875, 0.036000773
    %v4465 = vmul.f32 %v3846, 0.036000773
    %v4466 = vmul.f32 %v3716, 0.036000773
    %v4467 = vmul.f32 %v3876, 0.036000773
    %v4468 = vmul.f32 %v3847, 0.036000773
    %v4469 = vmul.f32 %v3719, 0.036000773
    %v4470 = vmul.f32 %v3877, 0.036000773
    %v4471 = vmul.f32 %v3848, 0.036000773
    %v4472 = vmul.f32 %v3722, 0.036000773
    %v4473 = vmul.f32 %v3878, 0.036000773
    %v4474 = vmul.f32 %v3849, 0.036000773
    %v4475 = vmul.f32 %v3725, 0.036000773
    %v4476 = vmul.f32 %v3879, 0.036000773
    %v4477 = vmul.f32 %v3850, 0.036000773
    %v4478 = vmul.f32 %v3728, 0.036000773
    %v4479 = vmul.f32 %v3880, 0.036000773
    %v4480 = vmul.f32 %v3851, 0.036000773
    %v4481 = vmul.f32 %v3731, 0.036000773
    %v4482 = vmul.f32 %v3881, 0.036000773
    %vm4573 = vcmask 1045504
    %v4574 = vrot.slane %v4393, 2
    %v4575 = vrot.slane %v4394, 2
    %v4576 = vsel %vm4573, %v4574, %v4575
    %v4577 = vrot.slane %v4395, 2
    %v4578 = vsel %vm4573, %v4575, %v4577
    %v4579 = vrot.slane %v4396, 2
    %v4580 = vrot.slane %v4397, 2
    %v4581 = vsel %vm4573, %v4579, %v4580
    %v4582 = vrot.slane %v4398, 2
    %v4583 = vsel %vm4573, %v4580, %v4582
    %v4584 = vrot.slane %v4399, 2
    %v4585 = vrot.slane %v4400, 2
    %v4586 = vsel %vm4573, %v4584, %v4585
    %v4587 = vrot.slane %v4401, 2
    %v4588 = vsel %vm4573, %v4585, %v4587
    %v4589 = vrot.slane %v4402, 2
    %v4590 = vrot.slane %v4403, 2
    %v4591 = vsel %vm4573, %v4589, %v4590
    %v4592 = vrot.slane %v4404, 2
    %v4593 = vsel %vm4573, %v4590, %v4592
    %v4594 = vrot.slane %v4405, 2
    %v4595 = vrot.slane %v4406, 2
    %v4596 = vsel %vm4573, %v4594, %v4595
    %v4597 = vrot.slane %v4407, 2
    %v4598 = vsel %vm4573, %v4595, %v4597
    %v4599 = vrot.slane %v4408, 2
    %v4600 = vrot.slane %v4409, 2
    %v4601 = vsel %vm4573, %v4599, %v4600
    %v4602 = vrot.slane %v4410, 2
    %v4603 = vsel %vm4573, %v4600, %v4602
    %v4604 = vrot.slane %v4411, 2
    %v4605 = vrot.slane %v4412, 2
    %v4606 = vsel %vm4573, %v4604, %v4605
    %v4607 = vrot.slane %v4413, 2
    %v4608 = vsel %vm4573, %v4605, %v4607
    %v4609 = vrot.slane %v4414, 2
    %v4610 = vrot.slane %v4415, 2
    %v4611 = vsel %vm4573, %v4609, %v4610
    %v4612 = vrot.slane %v4416, 2
    %v4613 = vsel %vm4573, %v4610, %v4612
    %v4614 = vrot.slane %v4417, 2
    %v4615 = vrot.slane %v4418, 2
    %v4616 = vsel %vm4573, %v4614, %v4615
    %v4617 = vrot.slane %v4419, 2
    %v4618 = vsel %vm4573, %v4615, %v4617
    %v4619 = vrot.slane %v4420, 2
    %v4620 = vrot.slane %v4421, 2
    %v4621 = vsel %vm4573, %v4619, %v4620
    %v4622 = vrot.slane %v4422, 2
    %v4623 = vsel %vm4573, %v4620, %v4622
    %v4624 = vrot.slane %v4423, 2
    %v4625 = vrot.slane %v4424, 2
    %v4626 = vsel %vm4573, %v4624, %v4625
    %v4627 = vrot.slane %v4425, 2
    %v4628 = vsel %vm4573, %v4625, %v4627
    %v4629 = vrot.slane %v4426, 2
    %v4630 = vrot.slane %v4427, 2
    %v4631 = vsel %vm4573, %v4629, %v4630
    %v4632 = vrot.slane %v4428, 2
    %v4633 = vsel %vm4573, %v4630, %v4632
    %v4634 = vrot.slane %v4429, 2
    %v4635 = vrot.slane %v4430, 2
    %v4636 = vsel %vm4573, %v4634, %v4635
    %v4637 = vrot.slane %v4431, 2
    %v4638 = vsel %vm4573, %v4635, %v4637
    %v4639 = vrot.slane %v4432, 2
    %v4640 = vrot.slane %v4433, 2
    %v4641 = vsel %vm4573, %v4639, %v4640
    %v4642 = vrot.slane %v4434, 2
    %v4643 = vsel %vm4573, %v4640, %v4642
    %v4644 = vrot.slane %v4435, 2
    %v4645 = vrot.slane %v4436, 2
    %v4646 = vsel %vm4573, %v4644, %v4645
    %v4647 = vrot.slane %v4437, 2
    %v4648 = vsel %vm4573, %v4645, %v4647
    %v4649 = vrot.slane %v4438, 2
    %v4650 = vrot.slane %v4439, 2
    %v4651 = vsel %vm4573, %v4649, %v4650
    %v4652 = vrot.slane %v4440, 2
    %v4653 = vsel %vm4573, %v4650, %v4652
    %v4654 = vrot.slane %v4441, 2
    %v4655 = vrot.slane %v4442, 2
    %v4656 = vsel %vm4573, %v4654, %v4655
    %v4657 = vrot.slane %v4443, 2
    %v4658 = vsel %vm4573, %v4655, %v4657
    %v4659 = vrot.slane %v4444, 2
    %v4660 = vrot.slane %v4445, 2
    %v4661 = vsel %vm4573, %v4659, %v4660
    %v4662 = vrot.slane %v4446, 2
    %v4663 = vsel %vm4573, %v4660, %v4662
    %v4664 = vrot.slane %v4447, 2
    %v4665 = vrot.slane %v4448, 2
    %v4666 = vsel %vm4573, %v4664, %v4665
    %v4667 = vrot.slane %v4449, 2
    %v4668 = vsel %vm4573, %v4665, %v4667
    %v4669 = vrot.slane %v4450, 2
    %v4670 = vrot.slane %v4451, 2
    %v4671 = vsel %vm4573, %v4669, %v4670
    %v4672 = vrot.slane %v4452, 2
    %v4673 = vsel %vm4573, %v4670, %v4672
    %v4674 = vrot.slane %v4453, 2
    %v4675 = vrot.slane %v4454, 2
    %v4676 = vsel %vm4573, %v4674, %v4675
    %v4677 = vrot.slane %v4455, 2
    %v4678 = vsel %vm4573, %v4675, %v4677
    %v4679 = vrot.slane %v4456, 2
    %v4680 = vrot.slane %v4457, 2
    %v4681 = vsel %vm4573, %v4679, %v4680
    %v4682 = vrot.slane %v4458, 2
    %v4683 = vsel %vm4573, %v4680, %v4682
    %v4684 = vrot.slane %v4459, 2
    %v4685 = vrot.slane %v4460, 2
    %v4686 = vsel %vm4573, %v4684, %v4685
    %v4687 = vrot.slane %v4461, 2
    %v4688 = vsel %vm4573, %v4685, %v4687
    %v4689 = vrot.slane %v4462, 2
    %v4690 = vrot.slane %v4463, 2
    %v4691 = vsel %vm4573, %v4689, %v4690
    %v4692 = vrot.slane %v4464, 2
    %v4693 = vsel %vm4573, %v4690, %v4692
    %v4694 = vrot.slane %v4465, 2
    %v4695 = vrot.slane %v4466, 2
    %v4696 = vsel %vm4573, %v4694, %v4695
    %v4697 = vrot.slane %v4467, 2
    %v4698 = vsel %vm4573, %v4695, %v4697
    %v4699 = vrot.slane %v4468, 2
    %v4700 = vrot.slane %v4469, 2
    %v4701 = vsel %vm4573, %v4699, %v4700
    %v4702 = vrot.slane %v4470, 2
    %v4703 = vsel %vm4573, %v4700, %v4702
    %v4704 = vrot.slane %v4471, 2
    %v4705 = vrot.slane %v4472, 2
    %v4706 = vsel %vm4573, %v4704, %v4705
    %v4707 = vrot.slane %v4473, 2
    %v4708 = vsel %vm4573, %v4705, %v4707
    %v4709 = vrot.slane %v4474, 2
    %v4710 = vrot.slane %v4475, 2
    %v4711 = vsel %vm4573, %v4709, %v4710
    %v4712 = vrot.slane %v4476, 2
    %v4713 = vsel %vm4573, %v4710, %v4712
    %v4714 = vrot.slane %v4477, 2
    %v4715 = vrot.slane %v4478, 2
    %v4716 = vsel %vm4573, %v4714, %v4715
    %v4717 = vrot.slane %v4479, 2
    %v4718 = vsel %vm4573, %v4715, %v4717
    %v4719 = vrot.slane %v4480, 2
    %v4720 = vrot.slane %v4481, 2
    %v4721 = vsel %vm4573, %v4719, %v4720
    %v4722 = vrot.slane %v4482, 2
    %v4723 = vsel %vm4573, %v4720, %v4722
    %v4784 = vadd.f32 %v4333, %v4576
    %v4785 = vadd.f32 %v4334, %v4578
    %v4786 = vadd.f32 %v4335, %v4581
    %v4787 = vadd.f32 %v4336, %v4583
    %v4788 = vadd.f32 %v4337, %v4586
    %v4789 = vadd.f32 %v4338, %v4588
    %v4790 = vadd.f32 %v4339, %v4591
    %v4791 = vadd.f32 %v4340, %v4593
    %v4792 = vadd.f32 %v4341, %v4596
    %v4793 = vadd.f32 %v4342, %v4598
    %v4794 = vadd.f32 %v4343, %v4601
    %v4795 = vadd.f32 %v4344, %v4603
    %v4796 = vadd.f32 %v4345, %v4606
    %v4797 = vadd.f32 %v4346, %v4608
    %v4798 = vadd.f32 %v4347, %v4611
    %v4799 = vadd.f32 %v4348, %v4613
    %v4800 = vadd.f32 %v4349, %v4616
    %v4801 = vadd.f32 %v4350, %v4618
    %v4802 = vadd.f32 %v4351, %v4621
    %v4803 = vadd.f32 %v4352, %v4623
    %v4804 = vadd.f32 %v4353, %v4626
    %v4805 = vadd.f32 %v4354, %v4628
    %v4806 = vadd.f32 %v4355, %v4631
    %v4807 = vadd.f32 %v4356, %v4633
    %v4808 = vadd.f32 %v4357, %v4636
    %v4809 = vadd.f32 %v4358, %v4638
    %v4810 = vadd.f32 %v4359, %v4641
    %v4811 = vadd.f32 %v4360, %v4643
    %v4812 = vadd.f32 %v4361, %v4646
    %v4813 = vadd.f32 %v4362, %v4648
    %v4814 = vadd.f32 %v4363, %v4651
    %v4815 = vadd.f32 %v4364, %v4653
    %v4816 = vadd.f32 %v4365, %v4656
    %v4817 = vadd.f32 %v4366, %v4658
    %v4818 = vadd.f32 %v4367, %v4661
    %v4819 = vadd.f32 %v4368, %v4663
    %v4820 = vadd.f32 %v4369, %v4666
    %v4821 = vadd.f32 %v4370, %v4668
    %v4822 = vadd.f32 %v4371, %v4671
    %v4823 = vadd.f32 %v4372, %v4673
    %v4824 = vadd.f32 %v4373, %v4676
    %v4825 = vadd.f32 %v4374, %v4678
    %v4826 = vadd.f32 %v4375, %v4681
    %v4827 = vadd.f32 %v4376, %v4683
    %v4828 = vadd.f32 %v4377, %v4686
    %v4829 = vadd.f32 %v4378, %v4688
    %v4830 = vadd.f32 %v4379, %v4691
    %v4831 = vadd.f32 %v4380, %v4693
    %v4832 = vadd.f32 %v4381, %v4696
    %v4833 = vadd.f32 %v4382, %v4698
    %v4834 = vadd.f32 %v4383, %v4701
    %v4835 = vadd.f32 %v4384, %v4703
    %v4836 = vadd.f32 %v4385, %v4706
    %v4837 = vadd.f32 %v4386, %v4708
    %v4838 = vadd.f32 %v4387, %v4711
    %v4839 = vadd.f32 %v4388, %v4713
    %v4840 = vadd.f32 %v4389, %v4716
    %v4841 = vadd.f32 %v4390, %v4718
    %v4842 = vadd.f32 %v4391, %v4721
    %v4843 = vadd.f32 %v4392, %v4723
    %v4844 = vmul.f32 %v3822, 0.10936069
    %v4845 = vmul.f32 %v3644, 0.10936069
    %v4846 = vmul.f32 %v3852, 0.10936069
    %v4847 = vmul.f32 %v3823, 0.10936069
    %v4848 = vmul.f32 %v3647, 0.10936069
    %v4849 = vmul.f32 %v3853, 0.10936069
    %v4850 = vmul.f32 %v3824, 0.10936069
    %v4851 = vmul.f32 %v3650, 0.10936069
    %v4852 = vmul.f32 %v3854, 0.10936069
    %v4853 = vmul.f32 %v3825, 0.10936069
    %v4854 = vmul.f32 %v3653, 0.10936069
    %v4855 = vmul.f32 %v3855, 0.10936069
    %v4856 = vmul.f32 %v3826, 0.10936069
    %v4857 = vmul.f32 %v3656, 0.10936069
    %v4858 = vmul.f32 %v3856, 0.10936069
    %v4859 = vmul.f32 %v3827, 0.10936069
    %v4860 = vmul.f32 %v3659, 0.10936069
    %v4861 = vmul.f32 %v3857, 0.10936069
    %v4862 = vmul.f32 %v3828, 0.10936069
    %v4863 = vmul.f32 %v3662, 0.10936069
    %v4864 = vmul.f32 %v3858, 0.10936069
    %v4865 = vmul.f32 %v3829, 0.10936069
    %v4866 = vmul.f32 %v3665, 0.10936069
    %v4867 = vmul.f32 %v3859, 0.10936069
    %v4868 = vmul.f32 %v3830, 0.10936069
    %v4869 = vmul.f32 %v3668, 0.10936069
    %v4870 = vmul.f32 %v3860, 0.10936069
    %v4871 = vmul.f32 %v3831, 0.10936069
    %v4872 = vmul.f32 %v3671, 0.10936069
    %v4873 = vmul.f32 %v3861, 0.10936069
    %v4874 = vmul.f32 %v3832, 0.10936069
    %v4875 = vmul.f32 %v3674, 0.10936069
    %v4876 = vmul.f32 %v3862, 0.10936069
    %v4877 = vmul.f32 %v3833, 0.10936069
    %v4878 = vmul.f32 %v3677, 0.10936069
    %v4879 = vmul.f32 %v3863, 0.10936069
    %v4880 = vmul.f32 %v3834, 0.10936069
    %v4881 = vmul.f32 %v3680, 0.10936069
    %v4882 = vmul.f32 %v3864, 0.10936069
    %v4883 = vmul.f32 %v3835, 0.10936069
    %v4884 = vmul.f32 %v3683, 0.10936069
    %v4885 = vmul.f32 %v3865, 0.10936069
    %v4886 = vmul.f32 %v3836, 0.10936069
    %v4887 = vmul.f32 %v3686, 0.10936069
    %v4888 = vmul.f32 %v3866, 0.10936069
    %v4889 = vmul.f32 %v3837, 0.10936069
    %v4890 = vmul.f32 %v3689, 0.10936069
    %v4891 = vmul.f32 %v3867, 0.10936069
    %v4892 = vmul.f32 %v3838, 0.10936069
    %v4893 = vmul.f32 %v3692, 0.10936069
    %v4894 = vmul.f32 %v3868, 0.10936069
    %v4895 = vmul.f32 %v3839, 0.10936069
    %v4896 = vmul.f32 %v3695, 0.10936069
    %v4897 = vmul.f32 %v3869, 0.10936069
    %v4898 = vmul.f32 %v3840, 0.10936069
    %v4899 = vmul.f32 %v3698, 0.10936069
    %v4900 = vmul.f32 %v3870, 0.10936069
    %v4901 = vmul.f32 %v3841, 0.10936069
    %v4902 = vmul.f32 %v3701, 0.10936069
    %v4903 = vmul.f32 %v3871, 0.10936069
    %v4904 = vmul.f32 %v3842, 0.10936069
    %v4905 = vmul.f32 %v3704, 0.10936069
    %v4906 = vmul.f32 %v3872, 0.10936069
    %v4907 = vmul.f32 %v3843, 0.10936069
    %v4908 = vmul.f32 %v3707, 0.10936069
    %v4909 = vmul.f32 %v3873, 0.10936069
    %v4910 = vmul.f32 %v3844, 0.10936069
    %v4911 = vmul.f32 %v3710, 0.10936069
    %v4912 = vmul.f32 %v3874, 0.10936069
    %v4913 = vmul.f32 %v3845, 0.10936069
    %v4914 = vmul.f32 %v3713, 0.10936069
    %v4915 = vmul.f32 %v3875, 0.10936069
    %v4916 = vmul.f32 %v3846, 0.10936069
    %v4917 = vmul.f32 %v3716, 0.10936069
    %v4918 = vmul.f32 %v3876, 0.10936069
    %v4919 = vmul.f32 %v3847, 0.10936069
    %v4920 = vmul.f32 %v3719, 0.10936069
    %v4921 = vmul.f32 %v3877, 0.10936069
    %v4922 = vmul.f32 %v3848, 0.10936069
    %v4923 = vmul.f32 %v3722, 0.10936069
    %v4924 = vmul.f32 %v3878, 0.10936069
    %v4925 = vmul.f32 %v3849, 0.10936069
    %v4926 = vmul.f32 %v3725, 0.10936069
    %v4927 = vmul.f32 %v3879, 0.10936069
    %v4928 = vmul.f32 %v3850, 0.10936069
    %v4929 = vmul.f32 %v3728, 0.10936069
    %v4930 = vmul.f32 %v3880, 0.10936069
    %v4931 = vmul.f32 %v3851, 0.10936069
    %v4932 = vmul.f32 %v3731, 0.10936069
    %v4933 = vmul.f32 %v3881, 0.10936069
    %v5024 = vrot.slane %v4844, 3
    %v5025 = vrot.slane %v4845, 3
    %v5026 = vsel %vm3641, %v5024, %v5025
    %v5027 = vrot.slane %v4846, 3
    %v5028 = vsel %vm3641, %v5025, %v5027
    %v5029 = vrot.slane %v4847, 3
    %v5030 = vrot.slane %v4848, 3
    %v5031 = vsel %vm3641, %v5029, %v5030
    %v5032 = vrot.slane %v4849, 3
    %v5033 = vsel %vm3641, %v5030, %v5032
    %v5034 = vrot.slane %v4850, 3
    %v5035 = vrot.slane %v4851, 3
    %v5036 = vsel %vm3641, %v5034, %v5035
    %v5037 = vrot.slane %v4852, 3
    %v5038 = vsel %vm3641, %v5035, %v5037
    %v5039 = vrot.slane %v4853, 3
    %v5040 = vrot.slane %v4854, 3
    %v5041 = vsel %vm3641, %v5039, %v5040
    %v5042 = vrot.slane %v4855, 3
    %v5043 = vsel %vm3641, %v5040, %v5042
    %v5044 = vrot.slane %v4856, 3
    %v5045 = vrot.slane %v4857, 3
    %v5046 = vsel %vm3641, %v5044, %v5045
    %v5047 = vrot.slane %v4858, 3
    %v5048 = vsel %vm3641, %v5045, %v5047
    %v5049 = vrot.slane %v4859, 3
    %v5050 = vrot.slane %v4860, 3
    %v5051 = vsel %vm3641, %v5049, %v5050
    %v5052 = vrot.slane %v4861, 3
    %v5053 = vsel %vm3641, %v5050, %v5052
    %v5054 = vrot.slane %v4862, 3
    %v5055 = vrot.slane %v4863, 3
    %v5056 = vsel %vm3641, %v5054, %v5055
    %v5057 = vrot.slane %v4864, 3
    %v5058 = vsel %vm3641, %v5055, %v5057
    %v5059 = vrot.slane %v4865, 3
    %v5060 = vrot.slane %v4866, 3
    %v5061 = vsel %vm3641, %v5059, %v5060
    %v5062 = vrot.slane %v4867, 3
    %v5063 = vsel %vm3641, %v5060, %v5062
    %v5064 = vrot.slane %v4868, 3
    %v5065 = vrot.slane %v4869, 3
    %v5066 = vsel %vm3641, %v5064, %v5065
    %v5067 = vrot.slane %v4870, 3
    %v5068 = vsel %vm3641, %v5065, %v5067
    %v5069 = vrot.slane %v4871, 3
    %v5070 = vrot.slane %v4872, 3
    %v5071 = vsel %vm3641, %v5069, %v5070
    %v5072 = vrot.slane %v4873, 3
    %v5073 = vsel %vm3641, %v5070, %v5072
    %v5074 = vrot.slane %v4874, 3
    %v5075 = vrot.slane %v4875, 3
    %v5076 = vsel %vm3641, %v5074, %v5075
    %v5077 = vrot.slane %v4876, 3
    %v5078 = vsel %vm3641, %v5075, %v5077
    %v5079 = vrot.slane %v4877, 3
    %v5080 = vrot.slane %v4878, 3
    %v5081 = vsel %vm3641, %v5079, %v5080
    %v5082 = vrot.slane %v4879, 3
    %v5083 = vsel %vm3641, %v5080, %v5082
    %v5084 = vrot.slane %v4880, 3
    %v5085 = vrot.slane %v4881, 3
    %v5086 = vsel %vm3641, %v5084, %v5085
    %v5087 = vrot.slane %v4882, 3
    %v5088 = vsel %vm3641, %v5085, %v5087
    %v5089 = vrot.slane %v4883, 3
    %v5090 = vrot.slane %v4884, 3
    %v5091 = vsel %vm3641, %v5089, %v5090
    %v5092 = vrot.slane %v4885, 3
    %v5093 = vsel %vm3641, %v5090, %v5092
    %v5094 = vrot.slane %v4886, 3
    %v5095 = vrot.slane %v4887, 3
    %v5096 = vsel %vm3641, %v5094, %v5095
    %v5097 = vrot.slane %v4888, 3
    %v5098 = vsel %vm3641, %v5095, %v5097
    %v5099 = vrot.slane %v4889, 3
    %v5100 = vrot.slane %v4890, 3
    %v5101 = vsel %vm3641, %v5099, %v5100
    %v5102 = vrot.slane %v4891, 3
    %v5103 = vsel %vm3641, %v5100, %v5102
    %v5104 = vrot.slane %v4892, 3
    %v5105 = vrot.slane %v4893, 3
    %v5106 = vsel %vm3641, %v5104, %v5105
    %v5107 = vrot.slane %v4894, 3
    %v5108 = vsel %vm3641, %v5105, %v5107
    %v5109 = vrot.slane %v4895, 3
    %v5110 = vrot.slane %v4896, 3
    %v5111 = vsel %vm3641, %v5109, %v5110
    %v5112 = vrot.slane %v4897, 3
    %v5113 = vsel %vm3641, %v5110, %v5112
    %v5114 = vrot.slane %v4898, 3
    %v5115 = vrot.slane %v4899, 3
    %v5116 = vsel %vm3641, %v5114, %v5115
    %v5117 = vrot.slane %v4900, 3
    %v5118 = vsel %vm3641, %v5115, %v5117
    %v5119 = vrot.slane %v4901, 3
    %v5120 = vrot.slane %v4902, 3
    %v5121 = vsel %vm3641, %v5119, %v5120
    %v5122 = vrot.slane %v4903, 3
    %v5123 = vsel %vm3641, %v5120, %v5122
    %v5124 = vrot.slane %v4904, 3
    %v5125 = vrot.slane %v4905, 3
    %v5126 = vsel %vm3641, %v5124, %v5125
    %v5127 = vrot.slane %v4906, 3
    %v5128 = vsel %vm3641, %v5125, %v5127
    %v5129 = vrot.slane %v4907, 3
    %v5130 = vrot.slane %v4908, 3
    %v5131 = vsel %vm3641, %v5129, %v5130
    %v5132 = vrot.slane %v4909, 3
    %v5133 = vsel %vm3641, %v5130, %v5132
    %v5134 = vrot.slane %v4910, 3
    %v5135 = vrot.slane %v4911, 3
    %v5136 = vsel %vm3641, %v5134, %v5135
    %v5137 = vrot.slane %v4912, 3
    %v5138 = vsel %vm3641, %v5135, %v5137
    %v5139 = vrot.slane %v4913, 3
    %v5140 = vrot.slane %v4914, 3
    %v5141 = vsel %vm3641, %v5139, %v5140
    %v5142 = vrot.slane %v4915, 3
    %v5143 = vsel %vm3641, %v5140, %v5142
    %v5144 = vrot.slane %v4916, 3
    %v5145 = vrot.slane %v4917, 3
    %v5146 = vsel %vm3641, %v5144, %v5145
    %v5147 = vrot.slane %v4918, 3
    %v5148 = vsel %vm3641, %v5145, %v5147
    %v5149 = vrot.slane %v4919, 3
    %v5150 = vrot.slane %v4920, 3
    %v5151 = vsel %vm3641, %v5149, %v5150
    %v5152 = vrot.slane %v4921, 3
    %v5153 = vsel %vm3641, %v5150, %v5152
    %v5154 = vrot.slane %v4922, 3
    %v5155 = vrot.slane %v4923, 3
    %v5156 = vsel %vm3641, %v5154, %v5155
    %v5157 = vrot.slane %v4924, 3
    %v5158 = vsel %vm3641, %v5155, %v5157
    %v5159 = vrot.slane %v4925, 3
    %v5160 = vrot.slane %v4926, 3
    %v5161 = vsel %vm3641, %v5159, %v5160
    %v5162 = vrot.slane %v4927, 3
    %v5163 = vsel %vm3641, %v5160, %v5162
    %v5164 = vrot.slane %v4928, 3
    %v5165 = vrot.slane %v4929, 3
    %v5166 = vsel %vm3641, %v5164, %v5165
    %v5167 = vrot.slane %v4930, 3
    %v5168 = vsel %vm3641, %v5165, %v5167
    %v5169 = vrot.slane %v4931, 3
    %v5170 = vrot.slane %v4932, 3
    %v5171 = vsel %vm3641, %v5169, %v5170
    %v5172 = vrot.slane %v4933, 3
    %v5173 = vsel %vm3641, %v5170, %v5172
    %v5234 = vadd.f32 %v4784, %v5026
    %v5235 = vadd.f32 %v4785, %v5028
    %v5236 = vadd.f32 %v4786, %v5031
    %v5237 = vadd.f32 %v4787, %v5033
    %v5238 = vadd.f32 %v4788, %v5036
    %v5239 = vadd.f32 %v4789, %v5038
    %v5240 = vadd.f32 %v4790, %v5041
    %v5241 = vadd.f32 %v4791, %v5043
    %v5242 = vadd.f32 %v4792, %v5046
    %v5243 = vadd.f32 %v4793, %v5048
    %v5244 = vadd.f32 %v4794, %v5051
    %v5245 = vadd.f32 %v4795, %v5053
    %v5246 = vadd.f32 %v4796, %v5056
    %v5247 = vadd.f32 %v4797, %v5058
    %v5248 = vadd.f32 %v4798, %v5061
    %v5249 = vadd.f32 %v4799, %v5063
    %v5250 = vadd.f32 %v4800, %v5066
    %v5251 = vadd.f32 %v4801, %v5068
    %v5252 = vadd.f32 %v4802, %v5071
    %v5253 = vadd.f32 %v4803, %v5073
    %v5254 = vadd.f32 %v4804, %v5076
    %v5255 = vadd.f32 %v4805, %v5078
    %v5256 = vadd.f32 %v4806, %v5081
    %v5257 = vadd.f32 %v4807, %v5083
    %v5258 = vadd.f32 %v4808, %v5086
    %v5259 = vadd.f32 %v4809, %v5088
    %v5260 = vadd.f32 %v4810, %v5091
    %v5261 = vadd.f32 %v4811, %v5093
    %v5262 = vadd.f32 %v4812, %v5096
    %v5263 = vadd.f32 %v4813, %v5098
    %v5264 = vadd.f32 %v4814, %v5101
    %v5265 = vadd.f32 %v4815, %v5103
    %v5266 = vadd.f32 %v4816, %v5106
    %v5267 = vadd.f32 %v4817, %v5108
    %v5268 = vadd.f32 %v4818, %v5111
    %v5269 = vadd.f32 %v4819, %v5113
    %v5270 = vadd.f32 %v4820, %v5116
    %v5271 = vadd.f32 %v4821, %v5118
    %v5272 = vadd.f32 %v4822, %v5121
    %v5273 = vadd.f32 %v4823, %v5123
    %v5274 = vadd.f32 %v4824, %v5126
    %v5275 = vadd.f32 %v4825, %v5128
    %v5276 = vadd.f32 %v4826, %v5131
    %v5277 = vadd.f32 %v4827, %v5133
    %v5278 = vadd.f32 %v4828, %v5136
    %v5279 = vadd.f32 %v4829, %v5138
    %v5280 = vadd.f32 %v4830, %v5141
    %v5281 = vadd.f32 %v4831, %v5143
    %v5282 = vadd.f32 %v4832, %v5146
    %v5283 = vadd.f32 %v4833, %v5148
    %v5284 = vadd.f32 %v4834, %v5151
    %v5285 = vadd.f32 %v4835, %v5153
    %v5286 = vadd.f32 %v4836, %v5156
    %v5287 = vadd.f32 %v4837, %v5158
    %v5288 = vadd.f32 %v4838, %v5161
    %v5289 = vadd.f32 %v4839, %v5163
    %v5290 = vadd.f32 %v4840, %v5166
    %v5291 = vadd.f32 %v4841, %v5168
    %v5292 = vadd.f32 %v4842, %v5171
    %v5293 = vadd.f32 %v4843, %v5173
    %v5294 = vmul.f32 %v3822, 0.21300554
    %v5295 = vmul.f32 %v3644, 0.21300554
    %v5296 = vmul.f32 %v3852, 0.21300554
    %v5297 = vmul.f32 %v3823, 0.21300554
    %v5298 = vmul.f32 %v3647, 0.21300554
    %v5299 = vmul.f32 %v3853, 0.21300554
    %v5300 = vmul.f32 %v3824, 0.21300554
    %v5301 = vmul.f32 %v3650, 0.21300554
    %v5302 = vmul.f32 %v3854, 0.21300554
    %v5303 = vmul.f32 %v3825, 0.21300554
    %v5304 = vmul.f32 %v3653, 0.21300554
    %v5305 = vmul.f32 %v3855, 0.21300554
    %v5306 = vmul.f32 %v3826, 0.21300554
    %v5307 = vmul.f32 %v3656, 0.21300554
    %v5308 = vmul.f32 %v3856, 0.21300554
    %v5309 = vmul.f32 %v3827, 0.21300554
    %v5310 = vmul.f32 %v3659, 0.21300554
    %v5311 = vmul.f32 %v3857, 0.21300554
    %v5312 = vmul.f32 %v3828, 0.21300554
    %v5313 = vmul.f32 %v3662, 0.21300554
    %v5314 = vmul.f32 %v3858, 0.21300554
    %v5315 = vmul.f32 %v3829, 0.21300554
    %v5316 = vmul.f32 %v3665, 0.21300554
    %v5317 = vmul.f32 %v3859, 0.21300554
    %v5318 = vmul.f32 %v3830, 0.21300554
    %v5319 = vmul.f32 %v3668, 0.21300554
    %v5320 = vmul.f32 %v3860, 0.21300554
    %v5321 = vmul.f32 %v3831, 0.21300554
    %v5322 = vmul.f32 %v3671, 0.21300554
    %v5323 = vmul.f32 %v3861, 0.21300554
    %v5324 = vmul.f32 %v3832, 0.21300554
    %v5325 = vmul.f32 %v3674, 0.21300554
    %v5326 = vmul.f32 %v3862, 0.21300554
    %v5327 = vmul.f32 %v3833, 0.21300554
    %v5328 = vmul.f32 %v3677, 0.21300554
    %v5329 = vmul.f32 %v3863, 0.21300554
    %v5330 = vmul.f32 %v3834, 0.21300554
    %v5331 = vmul.f32 %v3680, 0.21300554
    %v5332 = vmul.f32 %v3864, 0.21300554
    %v5333 = vmul.f32 %v3835, 0.21300554
    %v5334 = vmul.f32 %v3683, 0.21300554
    %v5335 = vmul.f32 %v3865, 0.21300554
    %v5336 = vmul.f32 %v3836, 0.21300554
    %v5337 = vmul.f32 %v3686, 0.21300554
    %v5338 = vmul.f32 %v3866, 0.21300554
    %v5339 = vmul.f32 %v3837, 0.21300554
    %v5340 = vmul.f32 %v3689, 0.21300554
    %v5341 = vmul.f32 %v3867, 0.21300554
    %v5342 = vmul.f32 %v3838, 0.21300554
    %v5343 = vmul.f32 %v3692, 0.21300554
    %v5344 = vmul.f32 %v3868, 0.21300554
    %v5345 = vmul.f32 %v3839, 0.21300554
    %v5346 = vmul.f32 %v3695, 0.21300554
    %v5347 = vmul.f32 %v3869, 0.21300554
    %v5348 = vmul.f32 %v3840, 0.21300554
    %v5349 = vmul.f32 %v3698, 0.21300554
    %v5350 = vmul.f32 %v3870, 0.21300554
    %v5351 = vmul.f32 %v3841, 0.21300554
    %v5352 = vmul.f32 %v3701, 0.21300554
    %v5353 = vmul.f32 %v3871, 0.21300554
    %v5354 = vmul.f32 %v3842, 0.21300554
    %v5355 = vmul.f32 %v3704, 0.21300554
    %v5356 = vmul.f32 %v3872, 0.21300554
    %v5357 = vmul.f32 %v3843, 0.21300554
    %v5358 = vmul.f32 %v3707, 0.21300554
    %v5359 = vmul.f32 %v3873, 0.21300554
    %v5360 = vmul.f32 %v3844, 0.21300554
    %v5361 = vmul.f32 %v3710, 0.21300554
    %v5362 = vmul.f32 %v3874, 0.21300554
    %v5363 = vmul.f32 %v3845, 0.21300554
    %v5364 = vmul.f32 %v3713, 0.21300554
    %v5365 = vmul.f32 %v3875, 0.21300554
    %v5366 = vmul.f32 %v3846, 0.21300554
    %v5367 = vmul.f32 %v3716, 0.21300554
    %v5368 = vmul.f32 %v3876, 0.21300554
    %v5369 = vmul.f32 %v3847, 0.21300554
    %v5370 = vmul.f32 %v3719, 0.21300554
    %v5371 = vmul.f32 %v3877, 0.21300554
    %v5372 = vmul.f32 %v3848, 0.21300554
    %v5373 = vmul.f32 %v3722, 0.21300554
    %v5374 = vmul.f32 %v3878, 0.21300554
    %v5375 = vmul.f32 %v3849, 0.21300554
    %v5376 = vmul.f32 %v3725, 0.21300554
    %v5377 = vmul.f32 %v3879, 0.21300554
    %v5378 = vmul.f32 %v3850, 0.21300554
    %v5379 = vmul.f32 %v3728, 0.21300554
    %v5380 = vmul.f32 %v3880, 0.21300554
    %v5381 = vmul.f32 %v3851, 0.21300554
    %v5382 = vmul.f32 %v3731, 0.21300554
    %v5383 = vmul.f32 %v3881, 0.21300554
    %vm5474 = vcmask 1043456
    %v5475 = vrot.slane %v5294, 4
    %v5476 = vrot.slane %v5295, 4
    %v5477 = vsel %vm5474, %v5475, %v5476
    %v5478 = vrot.slane %v5296, 4
    %v5479 = vsel %vm5474, %v5476, %v5478
    %v5480 = vrot.slane %v5297, 4
    %v5481 = vrot.slane %v5298, 4
    %v5482 = vsel %vm5474, %v5480, %v5481
    %v5483 = vrot.slane %v5299, 4
    %v5484 = vsel %vm5474, %v5481, %v5483
    %v5485 = vrot.slane %v5300, 4
    %v5486 = vrot.slane %v5301, 4
    %v5487 = vsel %vm5474, %v5485, %v5486
    %v5488 = vrot.slane %v5302, 4
    %v5489 = vsel %vm5474, %v5486, %v5488
    %v5490 = vrot.slane %v5303, 4
    %v5491 = vrot.slane %v5304, 4
    %v5492 = vsel %vm5474, %v5490, %v5491
    %v5493 = vrot.slane %v5305, 4
    %v5494 = vsel %vm5474, %v5491, %v5493
    %v5495 = vrot.slane %v5306, 4
    %v5496 = vrot.slane %v5307, 4
    %v5497 = vsel %vm5474, %v5495, %v5496
    %v5498 = vrot.slane %v5308, 4
    %v5499 = vsel %vm5474, %v5496, %v5498
    %v5500 = vrot.slane %v5309, 4
    %v5501 = vrot.slane %v5310, 4
    %v5502 = vsel %vm5474, %v5500, %v5501
    %v5503 = vrot.slane %v5311, 4
    %v5504 = vsel %vm5474, %v5501, %v5503
    %v5505 = vrot.slane %v5312, 4
    %v5506 = vrot.slane %v5313, 4
    %v5507 = vsel %vm5474, %v5505, %v5506
    %v5508 = vrot.slane %v5314, 4
    %v5509 = vsel %vm5474, %v5506, %v5508
    %v5510 = vrot.slane %v5315, 4
    %v5511 = vrot.slane %v5316, 4
    %v5512 = vsel %vm5474, %v5510, %v5511
    %v5513 = vrot.slane %v5317, 4
    %v5514 = vsel %vm5474, %v5511, %v5513
    %v5515 = vrot.slane %v5318, 4
    %v5516 = vrot.slane %v5319, 4
    %v5517 = vsel %vm5474, %v5515, %v5516
    %v5518 = vrot.slane %v5320, 4
    %v5519 = vsel %vm5474, %v5516, %v5518
    %v5520 = vrot.slane %v5321, 4
    %v5521 = vrot.slane %v5322, 4
    %v5522 = vsel %vm5474, %v5520, %v5521
    %v5523 = vrot.slane %v5323, 4
    %v5524 = vsel %vm5474, %v5521, %v5523
    %v5525 = vrot.slane %v5324, 4
    %v5526 = vrot.slane %v5325, 4
    %v5527 = vsel %vm5474, %v5525, %v5526
    %v5528 = vrot.slane %v5326, 4
    %v5529 = vsel %vm5474, %v5526, %v5528
    %v5530 = vrot.slane %v5327, 4
    %v5531 = vrot.slane %v5328, 4
    %v5532 = vsel %vm5474, %v5530, %v5531
    %v5533 = vrot.slane %v5329, 4
    %v5534 = vsel %vm5474, %v5531, %v5533
    %v5535 = vrot.slane %v5330, 4
    %v5536 = vrot.slane %v5331, 4
    %v5537 = vsel %vm5474, %v5535, %v5536
    %v5538 = vrot.slane %v5332, 4
    %v5539 = vsel %vm5474, %v5536, %v5538
    %v5540 = vrot.slane %v5333, 4
    %v5541 = vrot.slane %v5334, 4
    %v5542 = vsel %vm5474, %v5540, %v5541
    %v5543 = vrot.slane %v5335, 4
    %v5544 = vsel %vm5474, %v5541, %v5543
    %v5545 = vrot.slane %v5336, 4
    %v5546 = vrot.slane %v5337, 4
    %v5547 = vsel %vm5474, %v5545, %v5546
    %v5548 = vrot.slane %v5338, 4
    %v5549 = vsel %vm5474, %v5546, %v5548
    %v5550 = vrot.slane %v5339, 4
    %v5551 = vrot.slane %v5340, 4
    %v5552 = vsel %vm5474, %v5550, %v5551
    %v5553 = vrot.slane %v5341, 4
    %v5554 = vsel %vm5474, %v5551, %v5553
    %v5555 = vrot.slane %v5342, 4
    %v5556 = vrot.slane %v5343, 4
    %v5557 = vsel %vm5474, %v5555, %v5556
    %v5558 = vrot.slane %v5344, 4
    %v5559 = vsel %vm5474, %v5556, %v5558
    %v5560 = vrot.slane %v5345, 4
    %v5561 = vrot.slane %v5346, 4
    %v5562 = vsel %vm5474, %v5560, %v5561
    %v5563 = vrot.slane %v5347, 4
    %v5564 = vsel %vm5474, %v5561, %v5563
    %v5565 = vrot.slane %v5348, 4
    %v5566 = vrot.slane %v5349, 4
    %v5567 = vsel %vm5474, %v5565, %v5566
    %v5568 = vrot.slane %v5350, 4
    %v5569 = vsel %vm5474, %v5566, %v5568
    %v5570 = vrot.slane %v5351, 4
    %v5571 = vrot.slane %v5352, 4
    %v5572 = vsel %vm5474, %v5570, %v5571
    %v5573 = vrot.slane %v5353, 4
    %v5574 = vsel %vm5474, %v5571, %v5573
    %v5575 = vrot.slane %v5354, 4
    %v5576 = vrot.slane %v5355, 4
    %v5577 = vsel %vm5474, %v5575, %v5576
    %v5578 = vrot.slane %v5356, 4
    %v5579 = vsel %vm5474, %v5576, %v5578
    %v5580 = vrot.slane %v5357, 4
    %v5581 = vrot.slane %v5358, 4
    %v5582 = vsel %vm5474, %v5580, %v5581
    %v5583 = vrot.slane %v5359, 4
    %v5584 = vsel %vm5474, %v5581, %v5583
    %v5585 = vrot.slane %v5360, 4
    %v5586 = vrot.slane %v5361, 4
    %v5587 = vsel %vm5474, %v5585, %v5586
    %v5588 = vrot.slane %v5362, 4
    %v5589 = vsel %vm5474, %v5586, %v5588
    %v5590 = vrot.slane %v5363, 4
    %v5591 = vrot.slane %v5364, 4
    %v5592 = vsel %vm5474, %v5590, %v5591
    %v5593 = vrot.slane %v5365, 4
    %v5594 = vsel %vm5474, %v5591, %v5593
    %v5595 = vrot.slane %v5366, 4
    %v5596 = vrot.slane %v5367, 4
    %v5597 = vsel %vm5474, %v5595, %v5596
    %v5598 = vrot.slane %v5368, 4
    %v5599 = vsel %vm5474, %v5596, %v5598
    %v5600 = vrot.slane %v5369, 4
    %v5601 = vrot.slane %v5370, 4
    %v5602 = vsel %vm5474, %v5600, %v5601
    %v5603 = vrot.slane %v5371, 4
    %v5604 = vsel %vm5474, %v5601, %v5603
    %v5605 = vrot.slane %v5372, 4
    %v5606 = vrot.slane %v5373, 4
    %v5607 = vsel %vm5474, %v5605, %v5606
    %v5608 = vrot.slane %v5374, 4
    %v5609 = vsel %vm5474, %v5606, %v5608
    %v5610 = vrot.slane %v5375, 4
    %v5611 = vrot.slane %v5376, 4
    %v5612 = vsel %vm5474, %v5610, %v5611
    %v5613 = vrot.slane %v5377, 4
    %v5614 = vsel %vm5474, %v5611, %v5613
    %v5615 = vrot.slane %v5378, 4
    %v5616 = vrot.slane %v5379, 4
    %v5617 = vsel %vm5474, %v5615, %v5616
    %v5618 = vrot.slane %v5380, 4
    %v5619 = vsel %vm5474, %v5616, %v5618
    %v5620 = vrot.slane %v5381, 4
    %v5621 = vrot.slane %v5382, 4
    %v5622 = vsel %vm5474, %v5620, %v5621
    %v5623 = vrot.slane %v5383, 4
    %v5624 = vsel %vm5474, %v5621, %v5623
    %v5685 = vadd.f32 %v5234, %v5477
    %v5686 = vadd.f32 %v5235, %v5479
    %v5687 = vadd.f32 %v5236, %v5482
    %v5688 = vadd.f32 %v5237, %v5484
    %v5689 = vadd.f32 %v5238, %v5487
    %v5690 = vadd.f32 %v5239, %v5489
    %v5691 = vadd.f32 %v5240, %v5492
    %v5692 = vadd.f32 %v5241, %v5494
    %v5693 = vadd.f32 %v5242, %v5497
    %v5694 = vadd.f32 %v5243, %v5499
    %v5695 = vadd.f32 %v5244, %v5502
    %v5696 = vadd.f32 %v5245, %v5504
    %v5697 = vadd.f32 %v5246, %v5507
    %v5698 = vadd.f32 %v5247, %v5509
    %v5699 = vadd.f32 %v5248, %v5512
    %v5700 = vadd.f32 %v5249, %v5514
    %v5701 = vadd.f32 %v5250, %v5517
    %v5702 = vadd.f32 %v5251, %v5519
    %v5703 = vadd.f32 %v5252, %v5522
    %v5704 = vadd.f32 %v5253, %v5524
    %v5705 = vadd.f32 %v5254, %v5527
    %v5706 = vadd.f32 %v5255, %v5529
    %v5707 = vadd.f32 %v5256, %v5532
    %v5708 = vadd.f32 %v5257, %v5534
    %v5709 = vadd.f32 %v5258, %v5537
    %v5710 = vadd.f32 %v5259, %v5539
    %v5711 = vadd.f32 %v5260, %v5542
    %v5712 = vadd.f32 %v5261, %v5544
    %v5713 = vadd.f32 %v5262, %v5547
    %v5714 = vadd.f32 %v5263, %v5549
    %v5715 = vadd.f32 %v5264, %v5552
    %v5716 = vadd.f32 %v5265, %v5554
    %v5717 = vadd.f32 %v5266, %v5557
    %v5718 = vadd.f32 %v5267, %v5559
    %v5719 = vadd.f32 %v5268, %v5562
    %v5720 = vadd.f32 %v5269, %v5564
    %v5721 = vadd.f32 %v5270, %v5567
    %v5722 = vadd.f32 %v5271, %v5569
    %v5723 = vadd.f32 %v5272, %v5572
    %v5724 = vadd.f32 %v5273, %v5574
    %v5725 = vadd.f32 %v5274, %v5577
    %v5726 = vadd.f32 %v5275, %v5579
    %v5727 = vadd.f32 %v5276, %v5582
    %v5728 = vadd.f32 %v5277, %v5584
    %v5729 = vadd.f32 %v5278, %v5587
    %v5730 = vadd.f32 %v5279, %v5589
    %v5731 = vadd.f32 %v5280, %v5592
    %v5732 = vadd.f32 %v5281, %v5594
    %v5733 = vadd.f32 %v5282, %v5597
    %v5734 = vadd.f32 %v5283, %v5599
    %v5735 = vadd.f32 %v5284, %v5602
    %v5736 = vadd.f32 %v5285, %v5604
    %v5737 = vadd.f32 %v5286, %v5607
    %v5738 = vadd.f32 %v5287, %v5609
    %v5739 = vadd.f32 %v5288, %v5612
    %v5740 = vadd.f32 %v5289, %v5614
    %v5741 = vadd.f32 %v5290, %v5617
    %v5742 = vadd.f32 %v5291, %v5619
    %v5743 = vadd.f32 %v5292, %v5622
    %v5744 = vadd.f32 %v5293, %v5624
    %v5745 = vmul.f32 %v3822, 0.26601171
    %v5746 = vmul.f32 %v3644, 0.26601171
    %v5747 = vmul.f32 %v3852, 0.26601171
    %v5748 = vmul.f32 %v3823, 0.26601171
    %v5749 = vmul.f32 %v3647, 0.26601171
    %v5750 = vmul.f32 %v3853, 0.26601171
    %v5751 = vmul.f32 %v3824, 0.26601171
    %v5752 = vmul.f32 %v3650, 0.26601171
    %v5753 = vmul.f32 %v3854, 0.26601171
    %v5754 = vmul.f32 %v3825, 0.26601171
    %v5755 = vmul.f32 %v3653, 0.26601171
    %v5756 = vmul.f32 %v3855, 0.26601171
    %v5757 = vmul.f32 %v3826, 0.26601171
    %v5758 = vmul.f32 %v3656, 0.26601171
    %v5759 = vmul.f32 %v3856, 0.26601171
    %v5760 = vmul.f32 %v3827, 0.26601171
    %v5761 = vmul.f32 %v3659, 0.26601171
    %v5762 = vmul.f32 %v3857, 0.26601171
    %v5763 = vmul.f32 %v3828, 0.26601171
    %v5764 = vmul.f32 %v3662, 0.26601171
    %v5765 = vmul.f32 %v3858, 0.26601171
    %v5766 = vmul.f32 %v3829, 0.26601171
    %v5767 = vmul.f32 %v3665, 0.26601171
    %v5768 = vmul.f32 %v3859, 0.26601171
    %v5769 = vmul.f32 %v3830, 0.26601171
    %v5770 = vmul.f32 %v3668, 0.26601171
    %v5771 = vmul.f32 %v3860, 0.26601171
    %v5772 = vmul.f32 %v3831, 0.26601171
    %v5773 = vmul.f32 %v3671, 0.26601171
    %v5774 = vmul.f32 %v3861, 0.26601171
    %v5775 = vmul.f32 %v3832, 0.26601171
    %v5776 = vmul.f32 %v3674, 0.26601171
    %v5777 = vmul.f32 %v3862, 0.26601171
    %v5778 = vmul.f32 %v3833, 0.26601171
    %v5779 = vmul.f32 %v3677, 0.26601171
    %v5780 = vmul.f32 %v3863, 0.26601171
    %v5781 = vmul.f32 %v3834, 0.26601171
    %v5782 = vmul.f32 %v3680, 0.26601171
    %v5783 = vmul.f32 %v3864, 0.26601171
    %v5784 = vmul.f32 %v3835, 0.26601171
    %v5785 = vmul.f32 %v3683, 0.26601171
    %v5786 = vmul.f32 %v3865, 0.26601171
    %v5787 = vmul.f32 %v3836, 0.26601171
    %v5788 = vmul.f32 %v3686, 0.26601171
    %v5789 = vmul.f32 %v3866, 0.26601171
    %v5790 = vmul.f32 %v3837, 0.26601171
    %v5791 = vmul.f32 %v3689, 0.26601171
    %v5792 = vmul.f32 %v3867, 0.26601171
    %v5793 = vmul.f32 %v3838, 0.26601171
    %v5794 = vmul.f32 %v3692, 0.26601171
    %v5795 = vmul.f32 %v3868, 0.26601171
    %v5796 = vmul.f32 %v3839, 0.26601171
    %v5797 = vmul.f32 %v3695, 0.26601171
    %v5798 = vmul.f32 %v3869, 0.26601171
    %v5799 = vmul.f32 %v3840, 0.26601171
    %v5800 = vmul.f32 %v3698, 0.26601171
    %v5801 = vmul.f32 %v3870, 0.26601171
    %v5802 = vmul.f32 %v3841, 0.26601171
    %v5803 = vmul.f32 %v3701, 0.26601171
    %v5804 = vmul.f32 %v3871, 0.26601171
    %v5805 = vmul.f32 %v3842, 0.26601171
    %v5806 = vmul.f32 %v3704, 0.26601171
    %v5807 = vmul.f32 %v3872, 0.26601171
    %v5808 = vmul.f32 %v3843, 0.26601171
    %v5809 = vmul.f32 %v3707, 0.26601171
    %v5810 = vmul.f32 %v3873, 0.26601171
    %v5811 = vmul.f32 %v3844, 0.26601171
    %v5812 = vmul.f32 %v3710, 0.26601171
    %v5813 = vmul.f32 %v3874, 0.26601171
    %v5814 = vmul.f32 %v3845, 0.26601171
    %v5815 = vmul.f32 %v3713, 0.26601171
    %v5816 = vmul.f32 %v3875, 0.26601171
    %v5817 = vmul.f32 %v3846, 0.26601171
    %v5818 = vmul.f32 %v3716, 0.26601171
    %v5819 = vmul.f32 %v3876, 0.26601171
    %v5820 = vmul.f32 %v3847, 0.26601171
    %v5821 = vmul.f32 %v3719, 0.26601171
    %v5822 = vmul.f32 %v3877, 0.26601171
    %v5823 = vmul.f32 %v3848, 0.26601171
    %v5824 = vmul.f32 %v3722, 0.26601171
    %v5825 = vmul.f32 %v3878, 0.26601171
    %v5826 = vmul.f32 %v3849, 0.26601171
    %v5827 = vmul.f32 %v3725, 0.26601171
    %v5828 = vmul.f32 %v3879, 0.26601171
    %v5829 = vmul.f32 %v3850, 0.26601171
    %v5830 = vmul.f32 %v3728, 0.26601171
    %v5831 = vmul.f32 %v3880, 0.26601171
    %v5832 = vmul.f32 %v3851, 0.26601171
    %v5833 = vmul.f32 %v3731, 0.26601171
    %v5834 = vmul.f32 %v3881, 0.26601171
    %vm5925 = vcmask 1042432
    %v5926 = vrot.slane %v5745, 5
    %v5927 = vrot.slane %v5746, 5
    %v5928 = vsel %vm5925, %v5926, %v5927
    %v5929 = vrot.slane %v5747, 5
    %v5930 = vsel %vm5925, %v5927, %v5929
    %v5931 = vrot.slane %v5748, 5
    %v5932 = vrot.slane %v5749, 5
    %v5933 = vsel %vm5925, %v5931, %v5932
    %v5934 = vrot.slane %v5750, 5
    %v5935 = vsel %vm5925, %v5932, %v5934
    %v5936 = vrot.slane %v5751, 5
    %v5937 = vrot.slane %v5752, 5
    %v5938 = vsel %vm5925, %v5936, %v5937
    %v5939 = vrot.slane %v5753, 5
    %v5940 = vsel %vm5925, %v5937, %v5939
    %v5941 = vrot.slane %v5754, 5
    %v5942 = vrot.slane %v5755, 5
    %v5943 = vsel %vm5925, %v5941, %v5942
    %v5944 = vrot.slane %v5756, 5
    %v5945 = vsel %vm5925, %v5942, %v5944
    %v5946 = vrot.slane %v5757, 5
    %v5947 = vrot.slane %v5758, 5
    %v5948 = vsel %vm5925, %v5946, %v5947
    %v5949 = vrot.slane %v5759, 5
    %v5950 = vsel %vm5925, %v5947, %v5949
    %v5951 = vrot.slane %v5760, 5
    %v5952 = vrot.slane %v5761, 5
    %v5953 = vsel %vm5925, %v5951, %v5952
    %v5954 = vrot.slane %v5762, 5
    %v5955 = vsel %vm5925, %v5952, %v5954
    %v5956 = vrot.slane %v5763, 5
    %v5957 = vrot.slane %v5764, 5
    %v5958 = vsel %vm5925, %v5956, %v5957
    %v5959 = vrot.slane %v5765, 5
    %v5960 = vsel %vm5925, %v5957, %v5959
    %v5961 = vrot.slane %v5766, 5
    %v5962 = vrot.slane %v5767, 5
    %v5963 = vsel %vm5925, %v5961, %v5962
    %v5964 = vrot.slane %v5768, 5
    %v5965 = vsel %vm5925, %v5962, %v5964
    %v5966 = vrot.slane %v5769, 5
    %v5967 = vrot.slane %v5770, 5
    %v5968 = vsel %vm5925, %v5966, %v5967
    %v5969 = vrot.slane %v5771, 5
    %v5970 = vsel %vm5925, %v5967, %v5969
    %v5971 = vrot.slane %v5772, 5
    %v5972 = vrot.slane %v5773, 5
    %v5973 = vsel %vm5925, %v5971, %v5972
    %v5974 = vrot.slane %v5774, 5
    %v5975 = vsel %vm5925, %v5972, %v5974
    %v5976 = vrot.slane %v5775, 5
    %v5977 = vrot.slane %v5776, 5
    %v5978 = vsel %vm5925, %v5976, %v5977
    %v5979 = vrot.slane %v5777, 5
    %v5980 = vsel %vm5925, %v5977, %v5979
    %v5981 = vrot.slane %v5778, 5
    %v5982 = vrot.slane %v5779, 5
    %v5983 = vsel %vm5925, %v5981, %v5982
    %v5984 = vrot.slane %v5780, 5
    %v5985 = vsel %vm5925, %v5982, %v5984
    %v5986 = vrot.slane %v5781, 5
    %v5987 = vrot.slane %v5782, 5
    %v5988 = vsel %vm5925, %v5986, %v5987
    %v5989 = vrot.slane %v5783, 5
    %v5990 = vsel %vm5925, %v5987, %v5989
    %v5991 = vrot.slane %v5784, 5
    %v5992 = vrot.slane %v5785, 5
    %v5993 = vsel %vm5925, %v5991, %v5992
    %v5994 = vrot.slane %v5786, 5
    %v5995 = vsel %vm5925, %v5992, %v5994
    %v5996 = vrot.slane %v5787, 5
    %v5997 = vrot.slane %v5788, 5
    %v5998 = vsel %vm5925, %v5996, %v5997
    %v5999 = vrot.slane %v5789, 5
    %v6000 = vsel %vm5925, %v5997, %v5999
    %v6001 = vrot.slane %v5790, 5
    %v6002 = vrot.slane %v5791, 5
    %v6003 = vsel %vm5925, %v6001, %v6002
    %v6004 = vrot.slane %v5792, 5
    %v6005 = vsel %vm5925, %v6002, %v6004
    %v6006 = vrot.slane %v5793, 5
    %v6007 = vrot.slane %v5794, 5
    %v6008 = vsel %vm5925, %v6006, %v6007
    %v6009 = vrot.slane %v5795, 5
    %v6010 = vsel %vm5925, %v6007, %v6009
    %v6011 = vrot.slane %v5796, 5
    %v6012 = vrot.slane %v5797, 5
    %v6013 = vsel %vm5925, %v6011, %v6012
    %v6014 = vrot.slane %v5798, 5
    %v6015 = vsel %vm5925, %v6012, %v6014
    %v6016 = vrot.slane %v5799, 5
    %v6017 = vrot.slane %v5800, 5
    %v6018 = vsel %vm5925, %v6016, %v6017
    %v6019 = vrot.slane %v5801, 5
    %v6020 = vsel %vm5925, %v6017, %v6019
    %v6021 = vrot.slane %v5802, 5
    %v6022 = vrot.slane %v5803, 5
    %v6023 = vsel %vm5925, %v6021, %v6022
    %v6024 = vrot.slane %v5804, 5
    %v6025 = vsel %vm5925, %v6022, %v6024
    %v6026 = vrot.slane %v5805, 5
    %v6027 = vrot.slane %v5806, 5
    %v6028 = vsel %vm5925, %v6026, %v6027
    %v6029 = vrot.slane %v5807, 5
    %v6030 = vsel %vm5925, %v6027, %v6029
    %v6031 = vrot.slane %v5808, 5
    %v6032 = vrot.slane %v5809, 5
    %v6033 = vsel %vm5925, %v6031, %v6032
    %v6034 = vrot.slane %v5810, 5
    %v6035 = vsel %vm5925, %v6032, %v6034
    %v6036 = vrot.slane %v5811, 5
    %v6037 = vrot.slane %v5812, 5
    %v6038 = vsel %vm5925, %v6036, %v6037
    %v6039 = vrot.slane %v5813, 5
    %v6040 = vsel %vm5925, %v6037, %v6039
    %v6041 = vrot.slane %v5814, 5
    %v6042 = vrot.slane %v5815, 5
    %v6043 = vsel %vm5925, %v6041, %v6042
    %v6044 = vrot.slane %v5816, 5
    %v6045 = vsel %vm5925, %v6042, %v6044
    %v6046 = vrot.slane %v5817, 5
    %v6047 = vrot.slane %v5818, 5
    %v6048 = vsel %vm5925, %v6046, %v6047
    %v6049 = vrot.slane %v5819, 5
    %v6050 = vsel %vm5925, %v6047, %v6049
    %v6051 = vrot.slane %v5820, 5
    %v6052 = vrot.slane %v5821, 5
    %v6053 = vsel %vm5925, %v6051, %v6052
    %v6054 = vrot.slane %v5822, 5
    %v6055 = vsel %vm5925, %v6052, %v6054
    %v6056 = vrot.slane %v5823, 5
    %v6057 = vrot.slane %v5824, 5
    %v6058 = vsel %vm5925, %v6056, %v6057
    %v6059 = vrot.slane %v5825, 5
    %v6060 = vsel %vm5925, %v6057, %v6059
    %v6061 = vrot.slane %v5826, 5
    %v6062 = vrot.slane %v5827, 5
    %v6063 = vsel %vm5925, %v6061, %v6062
    %v6064 = vrot.slane %v5828, 5
    %v6065 = vsel %vm5925, %v6062, %v6064
    %v6066 = vrot.slane %v5829, 5
    %v6067 = vrot.slane %v5830, 5
    %v6068 = vsel %vm5925, %v6066, %v6067
    %v6069 = vrot.slane %v5831, 5
    %v6070 = vsel %vm5925, %v6067, %v6069
    %v6071 = vrot.slane %v5832, 5
    %v6072 = vrot.slane %v5833, 5
    %v6073 = vsel %vm5925, %v6071, %v6072
    %v6074 = vrot.slane %v5834, 5
    %v6075 = vsel %vm5925, %v6072, %v6074
    %v6136 = vadd.f32 %v5685, %v5928
    %v6137 = vadd.f32 %v5686, %v5930
    %v6138 = vadd.f32 %v5687, %v5933
    %v6139 = vadd.f32 %v5688, %v5935
    %v6140 = vadd.f32 %v5689, %v5938
    %v6141 = vadd.f32 %v5690, %v5940
    %v6142 = vadd.f32 %v5691, %v5943
    %v6143 = vadd.f32 %v5692, %v5945
    %v6144 = vadd.f32 %v5693, %v5948
    %v6145 = vadd.f32 %v5694, %v5950
    %v6146 = vadd.f32 %v5695, %v5953
    %v6147 = vadd.f32 %v5696, %v5955
    %v6148 = vadd.f32 %v5697, %v5958
    %v6149 = vadd.f32 %v5698, %v5960
    %v6150 = vadd.f32 %v5699, %v5963
    %v6151 = vadd.f32 %v5700, %v5965
    %v6152 = vadd.f32 %v5701, %v5968
    %v6153 = vadd.f32 %v5702, %v5970
    %v6154 = vadd.f32 %v5703, %v5973
    %v6155 = vadd.f32 %v5704, %v5975
    %v6156 = vadd.f32 %v5705, %v5978
    %v6157 = vadd.f32 %v5706, %v5980
    %v6158 = vadd.f32 %v5707, %v5983
    %v6159 = vadd.f32 %v5708, %v5985
    %v6160 = vadd.f32 %v5709, %v5988
    %v6161 = vadd.f32 %v5710, %v5990
    %v6162 = vadd.f32 %v5711, %v5993
    %v6163 = vadd.f32 %v5712, %v5995
    %v6164 = vadd.f32 %v5713, %v5998
    %v6165 = vadd.f32 %v5714, %v6000
    %v6166 = vadd.f32 %v5715, %v6003
    %v6167 = vadd.f32 %v5716, %v6005
    %v6168 = vadd.f32 %v5717, %v6008
    %v6169 = vadd.f32 %v5718, %v6010
    %v6170 = vadd.f32 %v5719, %v6013
    %v6171 = vadd.f32 %v5720, %v6015
    %v6172 = vadd.f32 %v5721, %v6018
    %v6173 = vadd.f32 %v5722, %v6020
    %v6174 = vadd.f32 %v5723, %v6023
    %v6175 = vadd.f32 %v5724, %v6025
    %v6176 = vadd.f32 %v5725, %v6028
    %v6177 = vadd.f32 %v5726, %v6030
    %v6178 = vadd.f32 %v5727, %v6033
    %v6179 = vadd.f32 %v5728, %v6035
    %v6180 = vadd.f32 %v5729, %v6038
    %v6181 = vadd.f32 %v5730, %v6040
    %v6182 = vadd.f32 %v5731, %v6043
    %v6183 = vadd.f32 %v5732, %v6045
    %v6184 = vadd.f32 %v5733, %v6048
    %v6185 = vadd.f32 %v5734, %v6050
    %v6186 = vadd.f32 %v5735, %v6053
    %v6187 = vadd.f32 %v5736, %v6055
    %v6188 = vadd.f32 %v5737, %v6058
    %v6189 = vadd.f32 %v5738, %v6060
    %v6190 = vadd.f32 %v5739, %v6063
    %v6191 = vadd.f32 %v5740, %v6065
    %v6192 = vadd.f32 %v5741, %v6068
    %v6193 = vadd.f32 %v5742, %v6070
    %v6194 = vadd.f32 %v5743, %v6073
    %v6195 = vadd.f32 %v5744, %v6075
    %vm6196 = vcmask 1041408
    %v6197 = vrot.slane %v5294, 6
    %v6198 = vrot.slane %v5295, 6
    %v6199 = vsel %vm6196, %v6197, %v6198
    %v6200 = vrot.slane %v5296, 6
    %v6201 = vsel %vm6196, %v6198, %v6200
    %v6202 = vrot.slane %v5297, 6
    %v6203 = vrot.slane %v5298, 6
    %v6204 = vsel %vm6196, %v6202, %v6203
    %v6205 = vrot.slane %v5299, 6
    %v6206 = vsel %vm6196, %v6203, %v6205
    %v6207 = vrot.slane %v5300, 6
    %v6208 = vrot.slane %v5301, 6
    %v6209 = vsel %vm6196, %v6207, %v6208
    %v6210 = vrot.slane %v5302, 6
    %v6211 = vsel %vm6196, %v6208, %v6210
    %v6212 = vrot.slane %v5303, 6
    %v6213 = vrot.slane %v5304, 6
    %v6214 = vsel %vm6196, %v6212, %v6213
    %v6215 = vrot.slane %v5305, 6
    %v6216 = vsel %vm6196, %v6213, %v6215
    %v6217 = vrot.slane %v5306, 6
    %v6218 = vrot.slane %v5307, 6
    %v6219 = vsel %vm6196, %v6217, %v6218
    %v6220 = vrot.slane %v5308, 6
    %v6221 = vsel %vm6196, %v6218, %v6220
    %v6222 = vrot.slane %v5309, 6
    %v6223 = vrot.slane %v5310, 6
    %v6224 = vsel %vm6196, %v6222, %v6223
    %v6225 = vrot.slane %v5311, 6
    %v6226 = vsel %vm6196, %v6223, %v6225
    %v6227 = vrot.slane %v5312, 6
    %v6228 = vrot.slane %v5313, 6
    %v6229 = vsel %vm6196, %v6227, %v6228
    %v6230 = vrot.slane %v5314, 6
    %v6231 = vsel %vm6196, %v6228, %v6230
    %v6232 = vrot.slane %v5315, 6
    %v6233 = vrot.slane %v5316, 6
    %v6234 = vsel %vm6196, %v6232, %v6233
    %v6235 = vrot.slane %v5317, 6
    %v6236 = vsel %vm6196, %v6233, %v6235
    %v6237 = vrot.slane %v5318, 6
    %v6238 = vrot.slane %v5319, 6
    %v6239 = vsel %vm6196, %v6237, %v6238
    %v6240 = vrot.slane %v5320, 6
    %v6241 = vsel %vm6196, %v6238, %v6240
    %v6242 = vrot.slane %v5321, 6
    %v6243 = vrot.slane %v5322, 6
    %v6244 = vsel %vm6196, %v6242, %v6243
    %v6245 = vrot.slane %v5323, 6
    %v6246 = vsel %vm6196, %v6243, %v6245
    %v6247 = vrot.slane %v5324, 6
    %v6248 = vrot.slane %v5325, 6
    %v6249 = vsel %vm6196, %v6247, %v6248
    %v6250 = vrot.slane %v5326, 6
    %v6251 = vsel %vm6196, %v6248, %v6250
    %v6252 = vrot.slane %v5327, 6
    %v6253 = vrot.slane %v5328, 6
    %v6254 = vsel %vm6196, %v6252, %v6253
    %v6255 = vrot.slane %v5329, 6
    %v6256 = vsel %vm6196, %v6253, %v6255
    %v6257 = vrot.slane %v5330, 6
    %v6258 = vrot.slane %v5331, 6
    %v6259 = vsel %vm6196, %v6257, %v6258
    %v6260 = vrot.slane %v5332, 6
    %v6261 = vsel %vm6196, %v6258, %v6260
    %v6262 = vrot.slane %v5333, 6
    %v6263 = vrot.slane %v5334, 6
    %v6264 = vsel %vm6196, %v6262, %v6263
    %v6265 = vrot.slane %v5335, 6
    %v6266 = vsel %vm6196, %v6263, %v6265
    %v6267 = vrot.slane %v5336, 6
    %v6268 = vrot.slane %v5337, 6
    %v6269 = vsel %vm6196, %v6267, %v6268
    %v6270 = vrot.slane %v5338, 6
    %v6271 = vsel %vm6196, %v6268, %v6270
    %v6272 = vrot.slane %v5339, 6
    %v6273 = vrot.slane %v5340, 6
    %v6274 = vsel %vm6196, %v6272, %v6273
    %v6275 = vrot.slane %v5341, 6
    %v6276 = vsel %vm6196, %v6273, %v6275
    %v6277 = vrot.slane %v5342, 6
    %v6278 = vrot.slane %v5343, 6
    %v6279 = vsel %vm6196, %v6277, %v6278
    %v6280 = vrot.slane %v5344, 6
    %v6281 = vsel %vm6196, %v6278, %v6280
    %v6282 = vrot.slane %v5345, 6
    %v6283 = vrot.slane %v5346, 6
    %v6284 = vsel %vm6196, %v6282, %v6283
    %v6285 = vrot.slane %v5347, 6
    %v6286 = vsel %vm6196, %v6283, %v6285
    %v6287 = vrot.slane %v5348, 6
    %v6288 = vrot.slane %v5349, 6
    %v6289 = vsel %vm6196, %v6287, %v6288
    %v6290 = vrot.slane %v5350, 6
    %v6291 = vsel %vm6196, %v6288, %v6290
    %v6292 = vrot.slane %v5351, 6
    %v6293 = vrot.slane %v5352, 6
    %v6294 = vsel %vm6196, %v6292, %v6293
    %v6295 = vrot.slane %v5353, 6
    %v6296 = vsel %vm6196, %v6293, %v6295
    %v6297 = vrot.slane %v5354, 6
    %v6298 = vrot.slane %v5355, 6
    %v6299 = vsel %vm6196, %v6297, %v6298
    %v6300 = vrot.slane %v5356, 6
    %v6301 = vsel %vm6196, %v6298, %v6300
    %v6302 = vrot.slane %v5357, 6
    %v6303 = vrot.slane %v5358, 6
    %v6304 = vsel %vm6196, %v6302, %v6303
    %v6305 = vrot.slane %v5359, 6
    %v6306 = vsel %vm6196, %v6303, %v6305
    %v6307 = vrot.slane %v5360, 6
    %v6308 = vrot.slane %v5361, 6
    %v6309 = vsel %vm6196, %v6307, %v6308
    %v6310 = vrot.slane %v5362, 6
    %v6311 = vsel %vm6196, %v6308, %v6310
    %v6312 = vrot.slane %v5363, 6
    %v6313 = vrot.slane %v5364, 6
    %v6314 = vsel %vm6196, %v6312, %v6313
    %v6315 = vrot.slane %v5365, 6
    %v6316 = vsel %vm6196, %v6313, %v6315
    %v6317 = vrot.slane %v5366, 6
    %v6318 = vrot.slane %v5367, 6
    %v6319 = vsel %vm6196, %v6317, %v6318
    %v6320 = vrot.slane %v5368, 6
    %v6321 = vsel %vm6196, %v6318, %v6320
    %v6322 = vrot.slane %v5369, 6
    %v6323 = vrot.slane %v5370, 6
    %v6324 = vsel %vm6196, %v6322, %v6323
    %v6325 = vrot.slane %v5371, 6
    %v6326 = vsel %vm6196, %v6323, %v6325
    %v6327 = vrot.slane %v5372, 6
    %v6328 = vrot.slane %v5373, 6
    %v6329 = vsel %vm6196, %v6327, %v6328
    %v6330 = vrot.slane %v5374, 6
    %v6331 = vsel %vm6196, %v6328, %v6330
    %v6332 = vrot.slane %v5375, 6
    %v6333 = vrot.slane %v5376, 6
    %v6334 = vsel %vm6196, %v6332, %v6333
    %v6335 = vrot.slane %v5377, 6
    %v6336 = vsel %vm6196, %v6333, %v6335
    %v6337 = vrot.slane %v5378, 6
    %v6338 = vrot.slane %v5379, 6
    %v6339 = vsel %vm6196, %v6337, %v6338
    %v6340 = vrot.slane %v5380, 6
    %v6341 = vsel %vm6196, %v6338, %v6340
    %v6342 = vrot.slane %v5381, 6
    %v6343 = vrot.slane %v5382, 6
    %v6344 = vsel %vm6196, %v6342, %v6343
    %v6345 = vrot.slane %v5383, 6
    %v6346 = vsel %vm6196, %v6343, %v6345
    %v6407 = vadd.f32 %v6136, %v6199
    %v6408 = vadd.f32 %v6137, %v6201
    %v6409 = vadd.f32 %v6138, %v6204
    %v6410 = vadd.f32 %v6139, %v6206
    %v6411 = vadd.f32 %v6140, %v6209
    %v6412 = vadd.f32 %v6141, %v6211
    %v6413 = vadd.f32 %v6142, %v6214
    %v6414 = vadd.f32 %v6143, %v6216
    %v6415 = vadd.f32 %v6144, %v6219
    %v6416 = vadd.f32 %v6145, %v6221
    %v6417 = vadd.f32 %v6146, %v6224
    %v6418 = vadd.f32 %v6147, %v6226
    %v6419 = vadd.f32 %v6148, %v6229
    %v6420 = vadd.f32 %v6149, %v6231
    %v6421 = vadd.f32 %v6150, %v6234
    %v6422 = vadd.f32 %v6151, %v6236
    %v6423 = vadd.f32 %v6152, %v6239
    %v6424 = vadd.f32 %v6153, %v6241
    %v6425 = vadd.f32 %v6154, %v6244
    %v6426 = vadd.f32 %v6155, %v6246
    %v6427 = vadd.f32 %v6156, %v6249
    %v6428 = vadd.f32 %v6157, %v6251
    %v6429 = vadd.f32 %v6158, %v6254
    %v6430 = vadd.f32 %v6159, %v6256
    %v6431 = vadd.f32 %v6160, %v6259
    %v6432 = vadd.f32 %v6161, %v6261
    %v6433 = vadd.f32 %v6162, %v6264
    %v6434 = vadd.f32 %v6163, %v6266
    %v6435 = vadd.f32 %v6164, %v6269
    %v6436 = vadd.f32 %v6165, %v6271
    %v6437 = vadd.f32 %v6166, %v6274
    %v6438 = vadd.f32 %v6167, %v6276
    %v6439 = vadd.f32 %v6168, %v6279
    %v6440 = vadd.f32 %v6169, %v6281
    %v6441 = vadd.f32 %v6170, %v6284
    %v6442 = vadd.f32 %v6171, %v6286
    %v6443 = vadd.f32 %v6172, %v6289
    %v6444 = vadd.f32 %v6173, %v6291
    %v6445 = vadd.f32 %v6174, %v6294
    %v6446 = vadd.f32 %v6175, %v6296
    %v6447 = vadd.f32 %v6176, %v6299
    %v6448 = vadd.f32 %v6177, %v6301
    %v6449 = vadd.f32 %v6178, %v6304
    %v6450 = vadd.f32 %v6179, %v6306
    %v6451 = vadd.f32 %v6180, %v6309
    %v6452 = vadd.f32 %v6181, %v6311
    %v6453 = vadd.f32 %v6182, %v6314
    %v6454 = vadd.f32 %v6183, %v6316
    %v6455 = vadd.f32 %v6184, %v6319
    %v6456 = vadd.f32 %v6185, %v6321
    %v6457 = vadd.f32 %v6186, %v6324
    %v6458 = vadd.f32 %v6187, %v6326
    %v6459 = vadd.f32 %v6188, %v6329
    %v6460 = vadd.f32 %v6189, %v6331
    %v6461 = vadd.f32 %v6190, %v6334
    %v6462 = vadd.f32 %v6191, %v6336
    %v6463 = vadd.f32 %v6192, %v6339
    %v6464 = vadd.f32 %v6193, %v6341
    %v6465 = vadd.f32 %v6194, %v6344
    %v6466 = vadd.f32 %v6195, %v6346
    %vm6467 = vcmask 1040384
    %v6468 = vrot.slane %v4844, 7
    %v6469 = vrot.slane %v4845, 7
    %v6470 = vsel %vm6467, %v6468, %v6469
    %v6471 = vrot.slane %v4846, 7
    %v6472 = vsel %vm6467, %v6469, %v6471
    %v6473 = vrot.slane %v4847, 7
    %v6474 = vrot.slane %v4848, 7
    %v6475 = vsel %vm6467, %v6473, %v6474
    %v6476 = vrot.slane %v4849, 7
    %v6477 = vsel %vm6467, %v6474, %v6476
    %v6478 = vrot.slane %v4850, 7
    %v6479 = vrot.slane %v4851, 7
    %v6480 = vsel %vm6467, %v6478, %v6479
    %v6481 = vrot.slane %v4852, 7
    %v6482 = vsel %vm6467, %v6479, %v6481
    %v6483 = vrot.slane %v4853, 7
    %v6484 = vrot.slane %v4854, 7
    %v6485 = vsel %vm6467, %v6483, %v6484
    %v6486 = vrot.slane %v4855, 7
    %v6487 = vsel %vm6467, %v6484, %v6486
    %v6488 = vrot.slane %v4856, 7
    %v6489 = vrot.slane %v4857, 7
    %v6490 = vsel %vm6467, %v6488, %v6489
    %v6491 = vrot.slane %v4858, 7
    %v6492 = vsel %vm6467, %v6489, %v6491
    %v6493 = vrot.slane %v4859, 7
    %v6494 = vrot.slane %v4860, 7
    %v6495 = vsel %vm6467, %v6493, %v6494
    %v6496 = vrot.slane %v4861, 7
    %v6497 = vsel %vm6467, %v6494, %v6496
    %v6498 = vrot.slane %v4862, 7
    %v6499 = vrot.slane %v4863, 7
    %v6500 = vsel %vm6467, %v6498, %v6499
    %v6501 = vrot.slane %v4864, 7
    %v6502 = vsel %vm6467, %v6499, %v6501
    %v6503 = vrot.slane %v4865, 7
    %v6504 = vrot.slane %v4866, 7
    %v6505 = vsel %vm6467, %v6503, %v6504
    %v6506 = vrot.slane %v4867, 7
    %v6507 = vsel %vm6467, %v6504, %v6506
    %v6508 = vrot.slane %v4868, 7
    %v6509 = vrot.slane %v4869, 7
    %v6510 = vsel %vm6467, %v6508, %v6509
    %v6511 = vrot.slane %v4870, 7
    %v6512 = vsel %vm6467, %v6509, %v6511
    %v6513 = vrot.slane %v4871, 7
    %v6514 = vrot.slane %v4872, 7
    %v6515 = vsel %vm6467, %v6513, %v6514
    %v6516 = vrot.slane %v4873, 7
    %v6517 = vsel %vm6467, %v6514, %v6516
    %v6518 = vrot.slane %v4874, 7
    %v6519 = vrot.slane %v4875, 7
    %v6520 = vsel %vm6467, %v6518, %v6519
    %v6521 = vrot.slane %v4876, 7
    %v6522 = vsel %vm6467, %v6519, %v6521
    %v6523 = vrot.slane %v4877, 7
    %v6524 = vrot.slane %v4878, 7
    %v6525 = vsel %vm6467, %v6523, %v6524
    %v6526 = vrot.slane %v4879, 7
    %v6527 = vsel %vm6467, %v6524, %v6526
    %v6528 = vrot.slane %v4880, 7
    %v6529 = vrot.slane %v4881, 7
    %v6530 = vsel %vm6467, %v6528, %v6529
    %v6531 = vrot.slane %v4882, 7
    %v6532 = vsel %vm6467, %v6529, %v6531
    %v6533 = vrot.slane %v4883, 7
    %v6534 = vrot.slane %v4884, 7
    %v6535 = vsel %vm6467, %v6533, %v6534
    %v6536 = vrot.slane %v4885, 7
    %v6537 = vsel %vm6467, %v6534, %v6536
    %v6538 = vrot.slane %v4886, 7
    %v6539 = vrot.slane %v4887, 7
    %v6540 = vsel %vm6467, %v6538, %v6539
    %v6541 = vrot.slane %v4888, 7
    %v6542 = vsel %vm6467, %v6539, %v6541
    %v6543 = vrot.slane %v4889, 7
    %v6544 = vrot.slane %v4890, 7
    %v6545 = vsel %vm6467, %v6543, %v6544
    %v6546 = vrot.slane %v4891, 7
    %v6547 = vsel %vm6467, %v6544, %v6546
    %v6548 = vrot.slane %v4892, 7
    %v6549 = vrot.slane %v4893, 7
    %v6550 = vsel %vm6467, %v6548, %v6549
    %v6551 = vrot.slane %v4894, 7
    %v6552 = vsel %vm6467, %v6549, %v6551
    %v6553 = vrot.slane %v4895, 7
    %v6554 = vrot.slane %v4896, 7
    %v6555 = vsel %vm6467, %v6553, %v6554
    %v6556 = vrot.slane %v4897, 7
    %v6557 = vsel %vm6467, %v6554, %v6556
    %v6558 = vrot.slane %v4898, 7
    %v6559 = vrot.slane %v4899, 7
    %v6560 = vsel %vm6467, %v6558, %v6559
    %v6561 = vrot.slane %v4900, 7
    %v6562 = vsel %vm6467, %v6559, %v6561
    %v6563 = vrot.slane %v4901, 7
    %v6564 = vrot.slane %v4902, 7
    %v6565 = vsel %vm6467, %v6563, %v6564
    %v6566 = vrot.slane %v4903, 7
    %v6567 = vsel %vm6467, %v6564, %v6566
    %v6568 = vrot.slane %v4904, 7
    %v6569 = vrot.slane %v4905, 7
    %v6570 = vsel %vm6467, %v6568, %v6569
    %v6571 = vrot.slane %v4906, 7
    %v6572 = vsel %vm6467, %v6569, %v6571
    %v6573 = vrot.slane %v4907, 7
    %v6574 = vrot.slane %v4908, 7
    %v6575 = vsel %vm6467, %v6573, %v6574
    %v6576 = vrot.slane %v4909, 7
    %v6577 = vsel %vm6467, %v6574, %v6576
    %v6578 = vrot.slane %v4910, 7
    %v6579 = vrot.slane %v4911, 7
    %v6580 = vsel %vm6467, %v6578, %v6579
    %v6581 = vrot.slane %v4912, 7
    %v6582 = vsel %vm6467, %v6579, %v6581
    %v6583 = vrot.slane %v4913, 7
    %v6584 = vrot.slane %v4914, 7
    %v6585 = vsel %vm6467, %v6583, %v6584
    %v6586 = vrot.slane %v4915, 7
    %v6587 = vsel %vm6467, %v6584, %v6586
    %v6588 = vrot.slane %v4916, 7
    %v6589 = vrot.slane %v4917, 7
    %v6590 = vsel %vm6467, %v6588, %v6589
    %v6591 = vrot.slane %v4918, 7
    %v6592 = vsel %vm6467, %v6589, %v6591
    %v6593 = vrot.slane %v4919, 7
    %v6594 = vrot.slane %v4920, 7
    %v6595 = vsel %vm6467, %v6593, %v6594
    %v6596 = vrot.slane %v4921, 7
    %v6597 = vsel %vm6467, %v6594, %v6596
    %v6598 = vrot.slane %v4922, 7
    %v6599 = vrot.slane %v4923, 7
    %v6600 = vsel %vm6467, %v6598, %v6599
    %v6601 = vrot.slane %v4924, 7
    %v6602 = vsel %vm6467, %v6599, %v6601
    %v6603 = vrot.slane %v4925, 7
    %v6604 = vrot.slane %v4926, 7
    %v6605 = vsel %vm6467, %v6603, %v6604
    %v6606 = vrot.slane %v4927, 7
    %v6607 = vsel %vm6467, %v6604, %v6606
    %v6608 = vrot.slane %v4928, 7
    %v6609 = vrot.slane %v4929, 7
    %v6610 = vsel %vm6467, %v6608, %v6609
    %v6611 = vrot.slane %v4930, 7
    %v6612 = vsel %vm6467, %v6609, %v6611
    %v6613 = vrot.slane %v4931, 7
    %v6614 = vrot.slane %v4932, 7
    %v6615 = vsel %vm6467, %v6613, %v6614
    %v6616 = vrot.slane %v4933, 7
    %v6617 = vsel %vm6467, %v6614, %v6616
    %v6678 = vadd.f32 %v6407, %v6470
    %v6679 = vadd.f32 %v6408, %v6472
    %v6680 = vadd.f32 %v6409, %v6475
    %v6681 = vadd.f32 %v6410, %v6477
    %v6682 = vadd.f32 %v6411, %v6480
    %v6683 = vadd.f32 %v6412, %v6482
    %v6684 = vadd.f32 %v6413, %v6485
    %v6685 = vadd.f32 %v6414, %v6487
    %v6686 = vadd.f32 %v6415, %v6490
    %v6687 = vadd.f32 %v6416, %v6492
    %v6688 = vadd.f32 %v6417, %v6495
    %v6689 = vadd.f32 %v6418, %v6497
    %v6690 = vadd.f32 %v6419, %v6500
    %v6691 = vadd.f32 %v6420, %v6502
    %v6692 = vadd.f32 %v6421, %v6505
    %v6693 = vadd.f32 %v6422, %v6507
    %v6694 = vadd.f32 %v6423, %v6510
    %v6695 = vadd.f32 %v6424, %v6512
    %v6696 = vadd.f32 %v6425, %v6515
    %v6697 = vadd.f32 %v6426, %v6517
    %v6698 = vadd.f32 %v6427, %v6520
    %v6699 = vadd.f32 %v6428, %v6522
    %v6700 = vadd.f32 %v6429, %v6525
    %v6701 = vadd.f32 %v6430, %v6527
    %v6702 = vadd.f32 %v6431, %v6530
    %v6703 = vadd.f32 %v6432, %v6532
    %v6704 = vadd.f32 %v6433, %v6535
    %v6705 = vadd.f32 %v6434, %v6537
    %v6706 = vadd.f32 %v6435, %v6540
    %v6707 = vadd.f32 %v6436, %v6542
    %v6708 = vadd.f32 %v6437, %v6545
    %v6709 = vadd.f32 %v6438, %v6547
    %v6710 = vadd.f32 %v6439, %v6550
    %v6711 = vadd.f32 %v6440, %v6552
    %v6712 = vadd.f32 %v6441, %v6555
    %v6713 = vadd.f32 %v6442, %v6557
    %v6714 = vadd.f32 %v6443, %v6560
    %v6715 = vadd.f32 %v6444, %v6562
    %v6716 = vadd.f32 %v6445, %v6565
    %v6717 = vadd.f32 %v6446, %v6567
    %v6718 = vadd.f32 %v6447, %v6570
    %v6719 = vadd.f32 %v6448, %v6572
    %v6720 = vadd.f32 %v6449, %v6575
    %v6721 = vadd.f32 %v6450, %v6577
    %v6722 = vadd.f32 %v6451, %v6580
    %v6723 = vadd.f32 %v6452, %v6582
    %v6724 = vadd.f32 %v6453, %v6585
    %v6725 = vadd.f32 %v6454, %v6587
    %v6726 = vadd.f32 %v6455, %v6590
    %v6727 = vadd.f32 %v6456, %v6592
    %v6728 = vadd.f32 %v6457, %v6595
    %v6729 = vadd.f32 %v6458, %v6597
    %v6730 = vadd.f32 %v6459, %v6600
    %v6731 = vadd.f32 %v6460, %v6602
    %v6732 = vadd.f32 %v6461, %v6605
    %v6733 = vadd.f32 %v6462, %v6607
    %v6734 = vadd.f32 %v6463, %v6610
    %v6735 = vadd.f32 %v6464, %v6612
    %v6736 = vadd.f32 %v6465, %v6615
    %v6737 = vadd.f32 %v6466, %v6617
    %v6738 = vadd.f32 %v6678, %v4394
    %v6739 = vadd.f32 %v6679, %v4395
    %v6740 = vadd.f32 %v6680, %v4397
    %v6741 = vadd.f32 %v6681, %v4398
    %v6742 = vadd.f32 %v6682, %v4400
    %v6743 = vadd.f32 %v6683, %v4401
    %v6744 = vadd.f32 %v6684, %v4403
    %v6745 = vadd.f32 %v6685, %v4404
    %v6746 = vadd.f32 %v6686, %v4406
    %v6747 = vadd.f32 %v6687, %v4407
    %v6748 = vadd.f32 %v6688, %v4409
    %v6749 = vadd.f32 %v6689, %v4410
    %v6750 = vadd.f32 %v6690, %v4412
    %v6751 = vadd.f32 %v6691, %v4413
    %v6752 = vadd.f32 %v6692, %v4415
    %v6753 = vadd.f32 %v6693, %v4416
    %v6754 = vadd.f32 %v6694, %v4418
    %v6755 = vadd.f32 %v6695, %v4419
    %v6756 = vadd.f32 %v6696, %v4421
    %v6757 = vadd.f32 %v6697, %v4422
    %v6758 = vadd.f32 %v6698, %v4424
    %v6759 = vadd.f32 %v6699, %v4425
    %v6760 = vadd.f32 %v6700, %v4427
    %v6761 = vadd.f32 %v6701, %v4428
    %v6762 = vadd.f32 %v6702, %v4430
    %v6763 = vadd.f32 %v6703, %v4431
    %v6764 = vadd.f32 %v6704, %v4433
    %v6765 = vadd.f32 %v6705, %v4434
    %v6766 = vadd.f32 %v6706, %v4436
    %v6767 = vadd.f32 %v6707, %v4437
    %v6768 = vadd.f32 %v6708, %v4439
    %v6769 = vadd.f32 %v6709, %v4440
    %v6770 = vadd.f32 %v6710, %v4442
    %v6771 = vadd.f32 %v6711, %v4443
    %v6772 = vadd.f32 %v6712, %v4445
    %v6773 = vadd.f32 %v6713, %v4446
    %v6774 = vadd.f32 %v6714, %v4448
    %v6775 = vadd.f32 %v6715, %v4449
    %v6776 = vadd.f32 %v6716, %v4451
    %v6777 = vadd.f32 %v6717, %v4452
    %v6778 = vadd.f32 %v6718, %v4454
    %v6779 = vadd.f32 %v6719, %v4455
    %v6780 = vadd.f32 %v6720, %v4457
    %v6781 = vadd.f32 %v6721, %v4458
    %v6782 = vadd.f32 %v6722, %v4460
    %v6783 = vadd.f32 %v6723, %v4461
    %v6784 = vadd.f32 %v6724, %v4463
    %v6785 = vadd.f32 %v6725, %v4464
    %v6786 = vadd.f32 %v6726, %v4466
    %v6787 = vadd.f32 %v6727, %v4467
    %v6788 = vadd.f32 %v6728, %v4469
    %v6789 = vadd.f32 %v6729, %v4470
    %v6790 = vadd.f32 %v6730, %v4472
    %v6791 = vadd.f32 %v6731, %v4473
    %v6792 = vadd.f32 %v6732, %v4475
    %v6793 = vadd.f32 %v6733, %v4476
    %v6794 = vadd.f32 %v6734, %v4478
    %v6795 = vadd.f32 %v6735, %v4479
    %v6796 = vadd.f32 %v6736, %v4481
    %v6797 = vadd.f32 %v6737, %v4482
    %v6799 = vrot.slane 0.0, 1
    %v6800 = vsel %vm4122, %v4126, %v6799
    %v6801 = vsel %vm4122, %v4131, %v6799
    %v6802 = vsel %vm4122, %v4136, %v6799
    %v6803 = vsel %vm4122, %v4141, %v6799
    %v6804 = vsel %vm4122, %v4146, %v6799
    %v6805 = vsel %vm4122, %v4151, %v6799
    %v6806 = vsel %vm4122, %v4156, %v6799
    %v6807 = vsel %vm4122, %v4161, %v6799
    %v6808 = vsel %vm4122, %v4166, %v6799
    %v6809 = vsel %vm4122, %v4171, %v6799
    %v6810 = vsel %vm4122, %v4176, %v6799
    %v6811 = vsel %vm4122, %v4181, %v6799
    %v6812 = vsel %vm4122, %v4186, %v6799
    %v6813 = vsel %vm4122, %v4191, %v6799
    %v6814 = vsel %vm4122, %v4196, %v6799
    %v6815 = vsel %vm4122, %v4201, %v6799
    %v6816 = vsel %vm4122, %v4206, %v6799
    %v6817 = vsel %vm4122, %v4211, %v6799
    %v6818 = vsel %vm4122, %v4216, %v6799
    %v6819 = vsel %vm4122, %v4221, %v6799
    %v6820 = vsel %vm4122, %v4226, %v6799
    %v6821 = vsel %vm4122, %v4231, %v6799
    %v6822 = vsel %vm4122, %v4236, %v6799
    %v6823 = vsel %vm4122, %v4241, %v6799
    %v6824 = vsel %vm4122, %v4246, %v6799
    %v6825 = vsel %vm4122, %v4251, %v6799
    %v6826 = vsel %vm4122, %v4256, %v6799
    %v6827 = vsel %vm4122, %v4261, %v6799
    %v6828 = vsel %vm4122, %v4266, %v6799
    %v6829 = vsel %vm4122, %v4271, %v6799
    %v6860 = vadd.f32 %v6738, %v4127
    %v6861 = vadd.f32 %v6739, %v6800
    %v6862 = vadd.f32 %v6740, %v4132
    %v6863 = vadd.f32 %v6741, %v6801
    %v6864 = vadd.f32 %v6742, %v4137
    %v6865 = vadd.f32 %v6743, %v6802
    %v6866 = vadd.f32 %v6744, %v4142
    %v6867 = vadd.f32 %v6745, %v6803
    %v6868 = vadd.f32 %v6746, %v4147
    %v6869 = vadd.f32 %v6747, %v6804
    %v6870 = vadd.f32 %v6748, %v4152
    %v6871 = vadd.f32 %v6749, %v6805
    %v6872 = vadd.f32 %v6750, %v4157
    %v6873 = vadd.f32 %v6751, %v6806
    %v6874 = vadd.f32 %v6752, %v4162
    %v6875 = vadd.f32 %v6753, %v6807
    %v6876 = vadd.f32 %v6754, %v4167
    %v6877 = vadd.f32 %v6755, %v6808
    %v6878 = vadd.f32 %v6756, %v4172
    %v6879 = vadd.f32 %v6757, %v6809
    %v6880 = vadd.f32 %v6758, %v4177
    %v6881 = vadd.f32 %v6759, %v6810
    %v6882 = vadd.f32 %v6760, %v4182
    %v6883 = vadd.f32 %v6761, %v6811
    %v6884 = vadd.f32 %v6762, %v4187
    %v6885 = vadd.f32 %v6763, %v6812
    %v6886 = vadd.f32 %v6764, %v4192
    %v6887 = vadd.f32 %v6765, %v6813
    %v6888 = vadd.f32 %v6766, %v4197
    %v6889 = vadd.f32 %v6767, %v6814
    %v6890 = vadd.f32 %v6768, %v4202
    %v6891 = vadd.f32 %v6769, %v6815
    %v6892 = vadd.f32 %v6770, %v4207
    %v6893 = vadd.f32 %v6771, %v6816
    %v6894 = vadd.f32 %v6772, %v4212
    %v6895 = vadd.f32 %v6773, %v6817
    %v6896 = vadd.f32 %v6774, %v4217
    %v6897 = vadd.f32 %v6775, %v6818
    %v6898 = vadd.f32 %v6776, %v4222
    %v6899 = vadd.f32 %v6777, %v6819
    %v6900 = vadd.f32 %v6778, %v4227
    %v6901 = vadd.f32 %v6779, %v6820
    %v6902 = vadd.f32 %v6780, %v4232
    %v6903 = vadd.f32 %v6781, %v6821
    %v6904 = vadd.f32 %v6782, %v4237
    %v6905 = vadd.f32 %v6783, %v6822
    %v6906 = vadd.f32 %v6784, %v4242
    %v6907 = vadd.f32 %v6785, %v6823
    %v6908 = vadd.f32 %v6786, %v4247
    %v6909 = vadd.f32 %v6787, %v6824
    %v6910 = vadd.f32 %v6788, %v4252
    %v6911 = vadd.f32 %v6789, %v6825
    %v6912 = vadd.f32 %v6790, %v4257
    %v6913 = vadd.f32 %v6791, %v6826
    %v6914 = vadd.f32 %v6792, %v4262
    %v6915 = vadd.f32 %v6793, %v6827
    %v6916 = vadd.f32 %v6794, %v4267
    %v6917 = vadd.f32 %v6795, %v6828
    %v6918 = vadd.f32 %v6796, %v4272
    %v6919 = vadd.f32 %v6797, %v6829
    %v6920 = vmul.f32 %v3852, 0.0010283801
    %v6921 = vmul.f32 %v3853, 0.0010283801
    %v6922 = vmul.f32 %v3854, 0.0010283801
    %v6923 = vmul.f32 %v3855, 0.0010283801
    %v6924 = vmul.f32 %v3856, 0.0010283801
    %v6925 = vmul.f32 %v3857, 0.0010283801
    %v6926 = vmul.f32 %v3858, 0.0010283801
    %v6927 = vmul.f32 %v3859, 0.0010283801
    %v6928 = vmul.f32 %v3860, 0.0010283801
    %v6929 = vmul.f32 %v3861, 0.0010283801
    %v6930 = vmul.f32 %v3862, 0.0010283801
    %v6931 = vmul.f32 %v3863, 0.0010283801
    %v6932 = vmul.f32 %v3864, 0.0010283801
    %v6933 = vmul.f32 %v3865, 0.0010283801
    %v6934 = vmul.f32 %v3866, 0.0010283801
    %v6935 = vmul.f32 %v3867, 0.0010283801
    %v6936 = vmul.f32 %v3868, 0.0010283801
    %v6937 = vmul.f32 %v3869, 0.0010283801
    %v6938 = vmul.f32 %v3870, 0.0010283801
    %v6939 = vmul.f32 %v3871, 0.0010283801
    %v6940 = vmul.f32 %v3872, 0.0010283801
    %v6941 = vmul.f32 %v3873, 0.0010283801
    %v6942 = vmul.f32 %v3874, 0.0010283801
    %v6943 = vmul.f32 %v3875, 0.0010283801
    %v6944 = vmul.f32 %v3876, 0.0010283801
    %v6945 = vmul.f32 %v3877, 0.0010283801
    %v6946 = vmul.f32 %v3878, 0.0010283801
    %v6947 = vmul.f32 %v3879, 0.0010283801
    %v6948 = vmul.f32 %v3880, 0.0010283801
    %v6949 = vmul.f32 %v3881, 0.0010283801
    %v7010 = vrot.slane %v3883, 2
    %v7011 = vrot.slane %v6920, 2
    %v7012 = vsel %vm4573, %v7010, %v7011
    %v7013 = vrot.slane 0.0, 2
    %v7014 = vsel %vm4573, %v7011, %v7013
    %v7015 = vrot.slane %v3885, 2
    %v7016 = vrot.slane %v6921, 2
    %v7017 = vsel %vm4573, %v7015, %v7016
    %v7018 = vsel %vm4573, %v7016, %v7013
    %v7019 = vrot.slane %v3887, 2
    %v7020 = vrot.slane %v6922, 2
    %v7021 = vsel %vm4573, %v7019, %v7020
    %v7022 = vsel %vm4573, %v7020, %v7013
    %v7023 = vrot.slane %v3889, 2
    %v7024 = vrot.slane %v6923, 2
    %v7025 = vsel %vm4573, %v7023, %v7024
    %v7026 = vsel %vm4573, %v7024, %v7013
    %v7027 = vrot.slane %v3891, 2
    %v7028 = vrot.slane %v6924, 2
    %v7029 = vsel %vm4573, %v7027, %v7028
    %v7030 = vsel %vm4573, %v7028, %v7013
    %v7031 = vrot.slane %v3893, 2
    %v7032 = vrot.slane %v6925, 2
    %v7033 = vsel %vm4573, %v7031, %v7032
    %v7034 = vsel %vm4573, %v7032, %v7013
    %v7035 = vrot.slane %v3895, 2
    %v7036 = vrot.slane %v6926, 2
    %v7037 = vsel %vm4573, %v7035, %v7036
    %v7038 = vsel %vm4573, %v7036, %v7013
    %v7039 = vrot.slane %v3897, 2
    %v7040 = vrot.slane %v6927, 2
    %v7041 = vsel %vm4573, %v7039, %v7040
    %v7042 = vsel %vm4573, %v7040, %v7013
    %v7043 = vrot.slane %v3899, 2
    %v7044 = vrot.slane %v6928, 2
    %v7045 = vsel %vm4573, %v7043, %v7044
    %v7046 = vsel %vm4573, %v7044, %v7013
    %v7047 = vrot.slane %v3901, 2
    %v7048 = vrot.slane %v6929, 2
    %v7049 = vsel %vm4573, %v7047, %v7048
    %v7050 = vsel %vm4573, %v7048, %v7013
    %v7051 = vrot.slane %v3903, 2
    %v7052 = vrot.slane %v6930, 2
    %v7053 = vsel %vm4573, %v7051, %v7052
    %v7054 = vsel %vm4573, %v7052, %v7013
    %v7055 = vrot.slane %v3905, 2
    %v7056 = vrot.slane %v6931, 2
    %v7057 = vsel %vm4573, %v7055, %v7056
    %v7058 = vsel %vm4573, %v7056, %v7013
    %v7059 = vrot.slane %v3907, 2
    %v7060 = vrot.slane %v6932, 2
    %v7061 = vsel %vm4573, %v7059, %v7060
    %v7062 = vsel %vm4573, %v7060, %v7013
    %v7063 = vrot.slane %v3909, 2
    %v7064 = vrot.slane %v6933, 2
    %v7065 = vsel %vm4573, %v7063, %v7064
    %v7066 = vsel %vm4573, %v7064, %v7013
    %v7067 = vrot.slane %v3911, 2
    %v7068 = vrot.slane %v6934, 2
    %v7069 = vsel %vm4573, %v7067, %v7068
    %v7070 = vsel %vm4573, %v7068, %v7013
    %v7071 = vrot.slane %v3913, 2
    %v7072 = vrot.slane %v6935, 2
    %v7073 = vsel %vm4573, %v7071, %v7072
    %v7074 = vsel %vm4573, %v7072, %v7013
    %v7075 = vrot.slane %v3915, 2
    %v7076 = vrot.slane %v6936, 2
    %v7077 = vsel %vm4573, %v7075, %v7076
    %v7078 = vsel %vm4573, %v7076, %v7013
    %v7079 = vrot.slane %v3917, 2
    %v7080 = vrot.slane %v6937, 2
    %v7081 = vsel %vm4573, %v7079, %v7080
    %v7082 = vsel %vm4573, %v7080, %v7013
    %v7083 = vrot.slane %v3919, 2
    %v7084 = vrot.slane %v6938, 2
    %v7085 = vsel %vm4573, %v7083, %v7084
    %v7086 = vsel %vm4573, %v7084, %v7013
    %v7087 = vrot.slane %v3921, 2
    %v7088 = vrot.slane %v6939, 2
    %v7089 = vsel %vm4573, %v7087, %v7088
    %v7090 = vsel %vm4573, %v7088, %v7013
    %v7091 = vrot.slane %v3923, 2
    %v7092 = vrot.slane %v6940, 2
    %v7093 = vsel %vm4573, %v7091, %v7092
    %v7094 = vsel %vm4573, %v7092, %v7013
    %v7095 = vrot.slane %v3925, 2
    %v7096 = vrot.slane %v6941, 2
    %v7097 = vsel %vm4573, %v7095, %v7096
    %v7098 = vsel %vm4573, %v7096, %v7013
    %v7099 = vrot.slane %v3927, 2
    %v7100 = vrot.slane %v6942, 2
    %v7101 = vsel %vm4573, %v7099, %v7100
    %v7102 = vsel %vm4573, %v7100, %v7013
    %v7103 = vrot.slane %v3929, 2
    %v7104 = vrot.slane %v6943, 2
    %v7105 = vsel %vm4573, %v7103, %v7104
    %v7106 = vsel %vm4573, %v7104, %v7013
    %v7107 = vrot.slane %v3931, 2
    %v7108 = vrot.slane %v6944, 2
    %v7109 = vsel %vm4573, %v7107, %v7108
    %v7110 = vsel %vm4573, %v7108, %v7013
    %v7111 = vrot.slane %v3933, 2
    %v7112 = vrot.slane %v6945, 2
    %v7113 = vsel %vm4573, %v7111, %v7112
    %v7114 = vsel %vm4573, %v7112, %v7013
    %v7115 = vrot.slane %v3935, 2
    %v7116 = vrot.slane %v6946, 2
    %v7117 = vsel %vm4573, %v7115, %v7116
    %v7118 = vsel %vm4573, %v7116, %v7013
    %v7119 = vrot.slane %v3937, 2
    %v7120 = vrot.slane %v6947, 2
    %v7121 = vsel %vm4573, %v7119, %v7120
    %v7122 = vsel %vm4573, %v7120, %v7013
    %v7123 = vrot.slane %v3939, 2
    %v7124 = vrot.slane %v6948, 2
    %v7125 = vsel %vm4573, %v7123, %v7124
    %v7126 = vsel %vm4573, %v7124, %v7013
    %v7127 = vrot.slane %v3941, 2
    %v7128 = vrot.slane %v6949, 2
    %v7129 = vsel %vm4573, %v7127, %v7128
    %v7130 = vsel %vm4573, %v7128, %v7013
    %v7191 = vadd.f32 %v6860, %v7012
    %v7192 = vadd.f32 %v6861, %v7014
    %v7193 = vadd.f32 %v6862, %v7017
    %v7194 = vadd.f32 %v6863, %v7018
    %v7195 = vadd.f32 %v6864, %v7021
    %v7196 = vadd.f32 %v6865, %v7022
    %v7197 = vadd.f32 %v6866, %v7025
    %v7198 = vadd.f32 %v6867, %v7026
    %v7199 = vadd.f32 %v6868, %v7029
    %v7200 = vadd.f32 %v6869, %v7030
    %v7201 = vadd.f32 %v6870, %v7033
    %v7202 = vadd.f32 %v6871, %v7034
    %v7203 = vadd.f32 %v6872, %v7037
    %v7204 = vadd.f32 %v6873, %v7038
    %v7205 = vadd.f32 %v6874, %v7041
    %v7206 = vadd.f32 %v6875, %v7042
    %v7207 = vadd.f32 %v6876, %v7045
    %v7208 = vadd.f32 %v6877, %v7046
    %v7209 = vadd.f32 %v6878, %v7049
    %v7210 = vadd.f32 %v6879, %v7050
    %v7211 = vadd.f32 %v6880, %v7053
    %v7212 = vadd.f32 %v6881, %v7054
    %v7213 = vadd.f32 %v6882, %v7057
    %v7214 = vadd.f32 %v6883, %v7058
    %v7215 = vadd.f32 %v6884, %v7061
    %v7216 = vadd.f32 %v6885, %v7062
    %v7217 = vadd.f32 %v6886, %v7065
    %v7218 = vadd.f32 %v6887, %v7066
    %v7219 = vadd.f32 %v6888, %v7069
    %v7220 = vadd.f32 %v6889, %v7070
    %v7221 = vadd.f32 %v6890, %v7073
    %v7222 = vadd.f32 %v6891, %v7074
    %v7223 = vadd.f32 %v6892, %v7077
    %v7224 = vadd.f32 %v6893, %v7078
    %v7225 = vadd.f32 %v6894, %v7081
    %v7226 = vadd.f32 %v6895, %v7082
    %v7227 = vadd.f32 %v6896, %v7085
    %v7228 = vadd.f32 %v6897, %v7086
    %v7229 = vadd.f32 %v6898, %v7089
    %v7230 = vadd.f32 %v6899, %v7090
    %v7231 = vadd.f32 %v6900, %v7093
    %v7232 = vadd.f32 %v6901, %v7094
    %v7233 = vadd.f32 %v6902, %v7097
    %v7234 = vadd.f32 %v6903, %v7098
    %v7235 = vadd.f32 %v6904, %v7101
    %v7236 = vadd.f32 %v6905, %v7102
    %v7237 = vadd.f32 %v6906, %v7105
    %v7238 = vadd.f32 %v6907, %v7106
    %v7239 = vadd.f32 %v6908, %v7109
    %v7240 = vadd.f32 %v6909, %v7110
    %v7241 = vadd.f32 %v6910, %v7113
    %v7242 = vadd.f32 %v6911, %v7114
    %v7243 = vadd.f32 %v6912, %v7117
    %v7244 = vadd.f32 %v6913, %v7118
    %v7245 = vadd.f32 %v6914, %v7121
    %v7246 = vadd.f32 %v6915, %v7122
    %v7247 = vadd.f32 %v6916, %v7125
    %v7248 = vadd.f32 %v6917, %v7126
    %v7249 = vadd.f32 %v6918, %v7129
    %v7250 = vadd.f32 %v6919, %v7130
    %v7251 = vmul.f32 %v7191, %v7191
    %v7252 = vmul.f32 %v7192, %v7192
    %v7253 = vmul.f32 %v7193, %v7193
    %v7254 = vmul.f32 %v7194, %v7194
    %v7255 = vmul.f32 %v7195, %v7195
    %v7256 = vmul.f32 %v7196, %v7196
    %v7257 = vmul.f32 %v7197, %v7197
    %v7258 = vmul.f32 %v7198, %v7198
    %v7259 = vmul.f32 %v7199, %v7199
    %v7260 = vmul.f32 %v7200, %v7200
    %v7261 = vmul.f32 %v7201, %v7201
    %v7262 = vmul.f32 %v7202, %v7202
    %v7263 = vmul.f32 %v7203, %v7203
    %v7264 = vmul.f32 %v7204, %v7204
    %v7265 = vmul.f32 %v7205, %v7205
    %v7266 = vmul.f32 %v7206, %v7206
    %v7267 = vmul.f32 %v7207, %v7207
    %v7268 = vmul.f32 %v7208, %v7208
    %v7269 = vmul.f32 %v7209, %v7209
    %v7270 = vmul.f32 %v7210, %v7210
    %v7271 = vmul.f32 %v7211, %v7211
    %v7272 = vmul.f32 %v7212, %v7212
    %v7273 = vmul.f32 %v7213, %v7213
    %v7274 = vmul.f32 %v7214, %v7214
    %v7275 = vmul.f32 %v7191, %v7203
    %v7276 = vmul.f32 %v7192, %v7204
    %v7277 = vmul.f32 %v7193, %v7205
    %v7278 = vmul.f32 %v7194, %v7206
    %v7279 = vmul.f32 %v7195, %v7207
    %v7280 = vmul.f32 %v7196, %v7208
    %v7281 = vmul.f32 %v7197, %v7209
    %v7282 = vmul.f32 %v7198, %v7210
    %v7283 = vmul.f32 %v7199, %v7211
    %v7284 = vmul.f32 %v7200, %v7212
    %v7285 = vmul.f32 %v7201, %v7213
    %v7286 = vmul.f32 %v7202, %v7214
    %v7287 = vsub.f32 %v7215, %v7251
    %v7288 = vsub.f32 %v7216, %v7252
    %v7289 = vsub.f32 %v7217, %v7253
    %v7290 = vsub.f32 %v7218, %v7254
    %v7291 = vsub.f32 %v7219, %v7255
    %v7292 = vsub.f32 %v7220, %v7256
    %v7293 = vsub.f32 %v7221, %v7257
    %v7294 = vsub.f32 %v7222, %v7258
    %v7295 = vsub.f32 %v7223, %v7259
    %v7296 = vsub.f32 %v7224, %v7260
    %v7297 = vsub.f32 %v7225, %v7261
    %v7298 = vsub.f32 %v7226, %v7262
    %v7299 = vsub.f32 %v7227, %v7263
    %v7300 = vsub.f32 %v7228, %v7264
    %v7301 = vsub.f32 %v7229, %v7265
    %v7302 = vsub.f32 %v7230, %v7266
    %v7303 = vsub.f32 %v7231, %v7267
    %v7304 = vsub.f32 %v7232, %v7268
    %v7305 = vsub.f32 %v7233, %v7269
    %v7306 = vsub.f32 %v7234, %v7270
    %v7307 = vsub.f32 %v7235, %v7271
    %v7308 = vsub.f32 %v7236, %v7272
    %v7309 = vsub.f32 %v7237, %v7273
    %v7310 = vsub.f32 %v7238, %v7274
    %v7311 = vsub.f32 %v7239, %v7275
    %v7312 = vsub.f32 %v7240, %v7276
    %v7313 = vsub.f32 %v7241, %v7277
    %v7314 = vsub.f32 %v7242, %v7278
    %v7315 = vsub.f32 %v7243, %v7279
    %v7316 = vsub.f32 %v7244, %v7280
    %v7317 = vsub.f32 %v7245, %v7281
    %v7318 = vsub.f32 %v7246, %v7282
    %v7319 = vsub.f32 %v7247, %v7283
    %v7320 = vsub.f32 %v7248, %v7284
    %v7321 = vsub.f32 %v7249, %v7285
    %v7322 = vsub.f32 %v7250, %v7286
    %v7323 = vmul.f32 %v7311, 2.0
    %v7324 = vmul.f32 %v7312, 2.0
    %v7325 = vmul.f32 %v7313, 2.0
    %v7326 = vmul.f32 %v7314, 2.0
    %v7327 = vmul.f32 %v7315, 2.0
    %v7328 = vmul.f32 %v7316, 2.0
    %v7329 = vmul.f32 %v7317, 2.0
    %v7330 = vmul.f32 %v7318, 2.0
    %v7331 = vmul.f32 %v7319, 2.0
    %v7332 = vmul.f32 %v7320, 2.0
    %v7333 = vmul.f32 %v7321, 2.0
    %v7334 = vmul.f32 %v7322, 2.0
    %v7335 = vadd.f32 %v7323, 58.5225
    %v7336 = vadd.f32 %v7324, 58.5225
    %v7337 = vadd.f32 %v7325, 58.5225
    %v7338 = vadd.f32 %v7326, 58.5225
    %v7339 = vadd.f32 %v7327, 58.5225
    %v7340 = vadd.f32 %v7328, 58.5225
    %v7341 = vadd.f32 %v7329, 58.5225
    %v7342 = vadd.f32 %v7330, 58.5225
    %v7343 = vadd.f32 %v7331, 58.5225
    %v7344 = vadd.f32 %v7332, 58.5225
    %v7345 = vadd.f32 %v7333, 58.5225
    %v7346 = vadd.f32 %v7334, 58.5225
    %v7347 = vadd.f32 %v7287, %v7299
    %v7348 = vadd.f32 %v7288, %v7300
    %v7349 = vadd.f32 %v7289, %v7301
    %v7350 = vadd.f32 %v7290, %v7302
    %v7351 = vadd.f32 %v7291, %v7303
    %v7352 = vadd.f32 %v7292, %v7304
    %v7353 = vadd.f32 %v7293, %v7305
    %v7354 = vadd.f32 %v7294, %v7306
    %v7355 = vadd.f32 %v7295, %v7307
    %v7356 = vadd.f32 %v7296, %v7308
    %v7357 = vadd.f32 %v7297, %v7309
    %v7358 = vadd.f32 %v7298, %v7310
    %v7359 = vadd.f32 %v7347, 58.5225
    %v7360 = vadd.f32 %v7348, 58.5225
    %v7361 = vadd.f32 %v7349, 58.5225
    %v7362 = vadd.f32 %v7350, 58.5225
    %v7363 = vadd.f32 %v7351, 58.5225
    %v7364 = vadd.f32 %v7352, 58.5225
    %v7365 = vadd.f32 %v7353, 58.5225
    %v7366 = vadd.f32 %v7354, 58.5225
    %v7367 = vadd.f32 %v7355, 58.5225
    %v7368 = vadd.f32 %v7356, 58.5225
    %v7369 = vadd.f32 %v7357, 58.5225
    %v7370 = vadd.f32 %v7358, 58.5225
    %v7371 = vmul.f32 %v7275, 2.0
    %v7372 = vmul.f32 %v7276, 2.0
    %v7373 = vmul.f32 %v7277, 2.0
    %v7374 = vmul.f32 %v7278, 2.0
    %v7375 = vmul.f32 %v7279, 2.0
    %v7376 = vmul.f32 %v7280, 2.0
    %v7377 = vmul.f32 %v7281, 2.0
    %v7378 = vmul.f32 %v7282, 2.0
    %v7379 = vmul.f32 %v7283, 2.0
    %v7380 = vmul.f32 %v7284, 2.0
    %v7381 = vmul.f32 %v7285, 2.0
    %v7382 = vmul.f32 %v7286, 2.0
    %v7383 = vadd.f32 %v7371, 6.5025
    %v7384 = vadd.f32 %v7372, 6.5025
    %v7385 = vadd.f32 %v7373, 6.5025
    %v7386 = vadd.f32 %v7374, 6.5025
    %v7387 = vadd.f32 %v7375, 6.5025
    %v7388 = vadd.f32 %v7376, 6.5025
    %v7389 = vadd.f32 %v7377, 6.5025
    %v7390 = vadd.f32 %v7378, 6.5025
    %v7391 = vadd.f32 %v7379, 6.5025
    %v7392 = vadd.f32 %v7380, 6.5025
    %v7393 = vadd.f32 %v7381, 6.5025
    %v7394 = vadd.f32 %v7382, 6.5025
    %v7395 = vmul.f32 %v7383, %v7335
    %v7396 = vmul.f32 %v7384, %v7336
    %v7397 = vmul.f32 %v7385, %v7337
    %v7398 = vmul.f32 %v7386, %v7338
    %v7399 = vmul.f32 %v7387, %v7339
    %v7400 = vmul.f32 %v7388, %v7340
    %v7401 = vmul.f32 %v7389, %v7341
    %v7402 = vmul.f32 %v7390, %v7342
    %v7403 = vmul.f32 %v7391, %v7343
    %v7404 = vmul.f32 %v7392, %v7344
    %v7405 = vmul.f32 %v7393, %v7345
    %v7406 = vmul.f32 %v7394, %v7346
    %v7407 = vadd.f32 %v7251, %v7263
    %v7408 = vadd.f32 %v7252, %v7264
    %v7409 = vadd.f32 %v7253, %v7265
    %v7410 = vadd.f32 %v7254, %v7266
    %v7411 = vadd.f32 %v7255, %v7267
    %v7412 = vadd.f32 %v7256, %v7268
    %v7413 = vadd.f32 %v7257, %v7269
    %v7414 = vadd.f32 %v7258, %v7270
    %v7415 = vadd.f32 %v7259, %v7271
    %v7416 = vadd.f32 %v7260, %v7272
    %v7417 = vadd.f32 %v7261, %v7273
    %v7418 = vadd.f32 %v7262, %v7274
    %v7419 = vadd.f32 %v7407, 6.5025
    %v7420 = vadd.f32 %v7408, 6.5025
    %v7421 = vadd.f32 %v7409, 6.5025
    %v7422 = vadd.f32 %v7410, 6.5025
    %v7423 = vadd.f32 %v7411, 6.5025
    %v7424 = vadd.f32 %v7412, 6.5025
    %v7425 = vadd.f32 %v7413, 6.5025
    %v7426 = vadd.f32 %v7414, 6.5025
    %v7427 = vadd.f32 %v7415, 6.5025
    %v7428 = vadd.f32 %v7416, 6.5025
    %v7429 = vadd.f32 %v7417, 6.5025
    %v7430 = vadd.f32 %v7418, 6.5025
    %v7431 = vmul.f32 %v7419, %v7359
    %v7432 = vmul.f32 %v7420, %v7360
    %v7433 = vmul.f32 %v7421, %v7361
    %v7434 = vmul.f32 %v7422, %v7362
    %v7435 = vmul.f32 %v7423, %v7363
    %v7436 = vmul.f32 %v7424, %v7364
    %v7437 = vmul.f32 %v7425, %v7365
    %v7438 = vmul.f32 %v7426, %v7366
    %v7439 = vmul.f32 %v7427, %v7367
    %v7440 = vmul.f32 %v7428, %v7368
    %v7441 = vmul.f32 %v7429, %v7369
    %v7442 = vmul.f32 %v7430, %v7370
    %v7443 = vrcp.pop %v7431
    %v7444 = vrcp.pop %v7432
    %v7445 = vrcp.pop %v7433
    %v7446 = vrcp.pop %v7434
    %v7447 = vrcp.pop %v7435
    %v7448 = vrcp.pop %v7436
    %v7449 = vrcp.pop %v7437
    %v7450 = vrcp.pop %v7438
    %v7451 = vrcp.pop %v7439
    %v7452 = vrcp.pop %v7440
    %v7453 = vrcp.pop %v7441
    %v7454 = vrcp.pop %v7442
    %v7455 = vmul.f32 %v7431, %v7443
    %v7456 = vmul.f32 %v7432, %v7444
    %v7457 = vmul.f32 %v7433, %v7445
    %v7458 = vmul.f32 %v7434, %v7446
    %v7459 = vmul.f32 %v7435, %v7447
    %v7460 = vmul.f32 %v7436, %v7448
    %v7461 = vmul.f32 %v7437, %v7449
    %v7462 = vmul.f32 %v7438, %v7450
    %v7463 = vmul.f32 %v7439, %v7451
    %v7464 = vmul.f32 %v7440, %v7452
    %v7465 = vmul.f32 %v7441, %v7453
    %v7466 = vmul.f32 %v7442, %v7454
    %v7467 = vsub.f32 2.0, %v7455
    %v7468 = vsub.f32 2.0, %v7456
    %v7469 = vsub.f32 2.0, %v7457
    %v7470 = vsub.f32 2.0, %v7458
    %v7471 = vsub.f32 2.0, %v7459
    %v7472 = vsub.f32 2.0, %v7460
    %v7473 = vsub.f32 2.0, %v7461
    %v7474 = vsub.f32 2.0, %v7462
    %v7475 = vsub.f32 2.0, %v7463
    %v7476 = vsub.f32 2.0, %v7464
    %v7477 = vsub.f32 2.0, %v7465
    %v7478 = vsub.f32 2.0, %v7466
    %v7479 = vmul.f32 %v7443, %v7467
    %v7480 = vmul.f32 %v7444, %v7468
    %v7481 = vmul.f32 %v7445, %v7469
    %v7482 = vmul.f32 %v7446, %v7470
    %v7483 = vmul.f32 %v7447, %v7471
    %v7484 = vmul.f32 %v7448, %v7472
    %v7485 = vmul.f32 %v7449, %v7473
    %v7486 = vmul.f32 %v7450, %v7474
    %v7487 = vmul.f32 %v7451, %v7475
    %v7488 = vmul.f32 %v7452, %v7476
    %v7489 = vmul.f32 %v7453, %v7477
    %v7490 = vmul.f32 %v7454, %v7478
    %v7491 = vmul.f32 %v7395, %v7479
    %v7492 = vmul.f32 %v7396, %v7480
    %v7493 = vmul.f32 %v7397, %v7481
    %v7494 = vmul.f32 %v7398, %v7482
    %v7495 = vmul.f32 %v7399, %v7483
    %v7496 = vmul.f32 %v7400, %v7484
    %v7497 = vmul.f32 %v7401, %v7485
    %v7498 = vmul.f32 %v7402, %v7486
    %v7499 = vmul.f32 %v7403, %v7487
    %v7500 = vmul.f32 %v7404, %v7488
    %v7501 = vmul.f32 %v7405, %v7489
    %v7502 = vmul.f32 %v7406, %v7490
    %vm7503 = vcmask 130048
    %v7504 = vsel %vm7503, %v7491, 0.0
    %7505 = vadd.xlane.f32.xlu0 %v7504
    %v7506 = vpop.xlane.xlu0 %7505
    %v7507 = vsel %vm7503, %v7492, 0.0
    %7508 = vadd.xlane.f32.xlu0 %v7507
    %v7509 = vpop.xlane.xlu0 %7508
    %v7510 = vsel %vm7503, %v7493, 0.0
    %7511 = vadd.xlane.f32.xlu0 %v7510
    %v7512 = vpop.xlane.xlu0 %7511
    %v7513 = vsel %vm7503, %v7494, 0.0
    %7514 = vadd.xlane.f32.xlu0 %v7513
    %v7515 = vpop.xlane.xlu0 %7514
    %v7516 = vsel %vm7503, %v7495, 0.0
    %7517 = vadd.xlane.f32.xlu0 %v7516
    %v7518 = vpop.xlane.xlu0 %7517
    %v7519 = vsel %vm7503, %v7496, 0.0
    %7520 = vadd.xlane.f32.xlu0 %v7519
    %v7521 = vpop.xlane.xlu0 %7520
    %v7522 = vsel %vm7503, %v7497, 0.0
    %7523 = vadd.xlane.f32.xlu0 %v7522
    %v7524 = vpop.xlane.xlu0 %7523
    %v7525 = vsel %vm7503, %v7498, 0.0
    %7526 = vadd.xlane.f32.xlu0 %v7525
    %v7527 = vpop.xlane.xlu0 %7526
    %v7528 = vsel %vm7503, %v7499, 0.0
    %7529 = vadd.xlane.f32.xlu0 %v7528
    %v7530 = vpop.xlane.xlu0 %7529
    %v7531 = vsel %vm7503, %v7500, 0.0
    %7532 = vadd.xlane.f32.xlu0 %v7531
    %v7533 = vpop.xlane.xlu0 %7532
    %v7534 = vsel %vm7503, %v7501, 0.0
    %7535 = vadd.xlane.f32.xlu0 %v7534
    %v7536 = vpop.xlane.xlu0 %7535
    %v7537 = vsel %vm7503, %v7502, 0.0
    %7538 = vadd.xlane.f32.xlu0 %v7537
    %v7539 = vpop.xlane.xlu0 %7538
    %v7540 = vadd.f32 %v7506, %v7509
    %v7541 = vrot.slane %v7540, 4
    %v7542 = vadd.f32 %v7540, %v7541
    %v7543 = vrot.slane %v7542, 2
    %v7544 = vadd.f32 %v7542, %v7543
    %v7545 = vrot.slane %v7544, 1
    %v7546 = vadd.f32 %v7544, %v7545
    %v7547 = vadd.f32 %v7512, %v7515
    %v7548 = vrot.slane %v7547, 4
    %v7549 = vadd.f32 %v7547, %v7548
    %v7550 = vrot.slane %v7549, 2
    %v7551 = vadd.f32 %v7549, %v7550
    %v7552 = vrot.slane %v7551, 1
    %v7553 = vadd.f32 %v7551, %v7552
    %v7554 = vadd.f32 %v7518, %v7521
    %v7555 = vrot.slane %v7554, 4
    %v7556 = vadd.f32 %v7554, %v7555
    %v7557 = vrot.slane %v7556, 2
    %v7558 = vadd.f32 %v7556, %v7557
    %v7559 = vrot.slane %v7558, 1
    %v7560 = vadd.f32 %v7558, %v7559
    %v7561 = vadd.f32 %v7524, %v7527
    %v7562 = vrot.slane %v7561, 4
    %v7563 = vadd.f32 %v7561, %v7562
    %v7564 = vrot.slane %v7563, 2
    %v7565 = vadd.f32 %v7563, %v7564
    %v7566 = vrot.slane %v7565, 1
    %v7567 = vadd.f32 %v7565, %v7566
    %v7568 = vadd.f32 %v7530, %v7533
    %v7569 = vrot.slane %v7568, 4
    %v7570 = vadd.f32 %v7568, %v7569
    %v7571 = vrot.slane %v7570, 2
    %v7572 = vadd.f32 %v7570, %v7571
    %v7573 = vrot.slane %v7572, 1
    %v7574 = vadd.f32 %v7572, %v7573
    %v7575 = vadd.f32 %v7536, %v7539
    %v7576 = vrot.slane %v7575, 4
    %v7577 = vadd.f32 %v7575, %v7576
    %v7578 = vrot.slane %v7577, 2
    %v7579 = vadd.f32 %v7577, %v7578
    %v7580 = vrot.slane %v7579, 1
    %v7581 = vadd.f32 %v7579, %v7580
    %v7582 = vmul.f32 %v7546, 0.00390625
    %v7583 = vmul.f32 %v7553, 0.00390625
    %v7584 = vmul.f32 %v7560, 0.00390625
    %v7585 = vmul.f32 %v7567, 0.00390625
    %v7586 = vmul.f32 %v7574, 0.00390625
    %v7587 = vmul.f32 %v7581, 0.00390625
    %vm7588 = vcmask 0
    %7589 = vst.msk [vmem:[%s2] sm:$0x1] %vm7588, %v7582
    %7590 = vst.msk [vmem:[%s2 + $0x1] sm:$0x1] %vm7588, %v7583
    %7591 = vst.msk [vmem:[%s2 + $0x2] sm:$0x1] %vm7588, %v7584
    %7592 = vst.msk [vmem:[%s2 + $0x3] sm:$0x1] %vm7588, %v7585
    %7593 = vst.msk [vmem:[%s2 + $0x4] sm:$0x1] %vm7588, %v7586
    %7594 = vst.msk [vmem:[%s2 + $0x5] sm:$0x1] %vm7588, %v7587
    // Predicated region
    $region18: #{tpu_custom_call.1} parent=1 // pred_check
      _
    $region19: #{tpu_custom_call.1} parent=1 // pred_check_branch
      %7596 = sbr.rel (0) target = $region21
    $region20: #{tpu_custom_call.1} parent=1 // pred_region
      _
    $region21: #{tpu_custom_call.1} parent=1 // pred_fallthru
      _
    // Predicated region
    $region22: #{tpu_custom_call.1} parent=1 // pred_check
      _
    $region23: #{tpu_custom_call.1} parent=1 // pred_check_branch
      %7598 = sbr.rel (0) target = $region25
    $region24: #{tpu_custom_call.1} parent=1 // pred_region
      _
    $region25: #{tpu_custom_call.1} parent=1 // pred_fallthru
      _
    %7599 = vsyncpa [#allocation3], 1
    %7600 = vsyncpa [#allocation5], 1

</llo_original>
